<compile_context>
chip_gen: v6e
topology: v6e:2x2x1
jax: 0.10.0
libtpu: 0.0.40
codegen_flags: <defaults>
</compile_context>

<pallas_src>
import jax
import jax.numpy as jnp
from jax import lax
from jax.experimental import pallas as pl
from jax.experimental.pallas import tpu as pltpu

BN_EPS = 1e-5


def _unet_enc_kernel(cols1_ref,     # (1, H*W, 9*Cin) bf16  wrapper-im2col conv1 input
                     w1_ref,        # (9*Cin, C) bf16
                     bn1s_ref,      # (1, C) f32 folded BN1 scale
                     bn1b_ref,      # (1, C) f32 folded BN1 bias
                     w2_ref,        # (9*C, C) bf16   conv2 weights, im2col layout
                     bn2s_ref,      # (1, C) f32
                     bn2b_ref,      # (1, C) f32
                     w3_ref,        # (4*C, C) bf16   1x1 weights, [ll|hl|lh|hh] rows
                     b3_ref,        # (1, C) f32
                     we1_ref,       # (C, Cr) bf16    excitation1
                     be1_ref,       # (1, Cr) f32
                     we2_ref,       # (Cr, C) bf16    excitation2
                     be2_ref,       # (1, C) f32
                     out_ref,       # (1, Ho, Wo*C) f32, lane-dense
                     h1pad_ref,     # scratch (H+2, W+2, C) bf16
                     h2_ref):       # scratch (H, W, C) f32
    f32, bf16 = jnp.float32, jnp.bfloat16
    C = bn1s_ref.shape[1]
    Ho = out_ref.shape[1]
    Wo = out_ref.shape[2] // C
    H, W = 2 * Ho, 2 * Wo

    # ---- conv1 (3x3, pad=1, no bias): one MXU matmul, bf16 in / f32 acc
    acc1 = jnp.dot(cols1_ref[0], w1_ref[...], preferred_element_type=f32)
    # BN1 + ReLU epilogue kept in f32 (v5e has no bf16 VPU)
    h1 = jnp.maximum(acc1 * bn1s_ref[...] + bn1b_ref[...], 0.0)        # (H*W, C)

    # ---- stage h1 into a zero-padded bf16 scratch for conv2.
    # Border zeroing is done every step (megacore-safe: each core owns its own
    # scratch and may never see program_id == 0).  Left/right zero columns are
    # folded into a single interior store (no per-row masked column stores).
    h1b = h1.astype(bf16).reshape(H, W, C)
    zrow = jnp.zeros((1, W + 2, C), bf16)
    zcol = jnp.zeros((H, 1, C), bf16)
    h1pad_ref[0:1, :, :] = zrow
    h1pad_ref[H + 1:H + 2, :, :] = zrow
    h1pad_ref[1:H + 1, :, :] = jnp.concatenate([zcol, h1b, zcol], axis=1)

    # ---- conv2 (3x3, pad=1, no bias): in-kernel im2col -> ONE K=9*C matmul
    taps = [h1pad_ref[ky:ky + H, kx:kx + W, :].reshape(H * W, C)
            for ky in range(3) for kx in range(3)]
    cols2 = jnp.concatenate(taps, axis=-1)                             # (H*W, 9*C) bf16
    acc2 = jnp.dot(cols2, w2_ref[...], preferred_element_type=f32)
    h2_ref[...] = jnp.maximum(acc2 * bn2s_ref[...] + bn2b_ref[...],
                              0.0).reshape(H, W, C)

    # ---- Haar 2x2 orthonormal DWT (phase split + butterfly on the VPU, f32)
    x1 = h2_ref[pl.ds(0, Ho, 2), pl.ds(0, Wo, 2), :]   # even row, even col
    x2 = h2_ref[pl.ds(1, Ho, 2), pl.ds(0, Wo, 2), :]   # odd  row, even col
    x3 = h2_ref[pl.ds(0, Ho, 2), pl.ds(1, Wo, 2), :]   # even row, odd  col
    x4 = h2_ref[pl.ds(1, Ho, 2), pl.ds(1, Wo, 2), :]   # odd  row, odd  col
    ll = ((x1 + x2 + x3 + x4) * 0.5).reshape(Ho * Wo, C).astype(bf16)
    hl = ((-x1 - x2 + x3 + x4) * 0.5).reshape(Ho * Wo, C).astype(bf16)
    lh = ((-x1 + x2 - x3 + x4) * 0.5).reshape(Ho * Wo, C).astype(bf16)
    hh = ((x1 - x2 - x3 + x4) * 0.5).reshape(Ho * Wo, C).astype(bf16)

    # ---- 1x1 conv (4C -> C): ONE K=4*C matmul on the lane-concat of subbands
    cols3 = jnp.concatenate([ll, hl, lh, hh], axis=-1)                 # (Ho*Wo, 4C) bf16
    y = jnp.dot(cols3, w3_ref[...], preferred_element_type=f32)
    y = jnp.maximum(y + b3_ref[...], 0.0)                              # (Ho*Wo, C)

    # ---- squeeze-excitation: global avg pool + two 1x1 convs + sigmoid gate
    pooled = jnp.mean(y, axis=0, keepdims=True)                        # (1, C) f32
    s = jnp.maximum(jnp.dot(pooled.astype(bf16), we1_ref[...],
                            preferred_element_type=f32) + be1_ref[...], 0.0)
    s = jax.nn.sigmoid(jnp.dot(s.astype(bf16), we2_ref[...],
                               preferred_element_type=f32) + be2_ref[...])
    yg = (y * s).reshape(Ho, Wo, C)

    # ---- lane-dense output: assemble the (Ho, Wo*C) slab via lane concat
    # TODO(synk): single relayout (reshape) instead of O(Wo) concat pieces once
    # the (Ho*Wo, C)->(Ho, Wo*C) shape-cast lowering is verified.
    out2d = jnp.concatenate([yg[:, j, :] for j in range(Wo)], axis=-1)  # (Ho, Wo*C)
    out_ref[...] = out2d.reshape(1, Ho, Wo * C)


def _ceil_to(x, m):
    return (x + m - 1) // m * m


def _padded_bytes(shape, dtype):
    """Bytes of a VMEM buffer with last dim padded to 128 lanes and the
    second-last to the native sublane tile (8 for 4B, 16 for 2B dtypes)."""
    itemsize = jnp.dtype(dtype).itemsize
    sub_tile = max(1, 32 // itemsize)
    dims = list(shape)
    if len(dims) == 1:
        dims = [1] + dims
    dims[-1] = _ceil_to(dims[-1], 128)
    dims[-2] = _ceil_to(dims[-2], sub_tile)
    n = itemsize
    for d in dims:
        n *= d
    return n


def unet_enc_forward(x_nchw, kp):
    """x_nchw: (N, Cin, H, W) float32.  Returns (N, C, H//2, W//2) float32."""
    N, Cin, H, W = x_nchw.shape
    C = kp['bn1_scale'].shape[1]
    Cr = kp['we1'].shape[1]
    Ho, Wo = H // 2, W // 2
    K1 = 9 * Cin

    # NHWC + wrapper-side im2col of the conv1 input (layout plumbing, no FLOPs)
    # TODO(synk): at production H/W move this im2col in-kernel (9x HBM read
    # amplification matters on v5e/v6e bandwidth); negligible at 16x16.
    x = jnp.transpose(x_nchw, (0, 2, 3, 1))
    x_pad = jnp.pad(x, ((0, 0), (1, 1), (1, 1), (0, 0)))
    taps = [x_pad[:, ky:ky + H, kx:kx + W, :]
            for ky in range(3) for kx in range(3)]
    cols1 = jnp.concatenate(taps, axis=-1).reshape(N, H * W, K1)
    cols1 = cols1.astype(jnp.bfloat16)

    in_specs = [
        pl.BlockSpec((1, H * W, K1), lambda n: (n, 0, 0)),
        pl.BlockSpec((K1, C), lambda n: (0, 0)),
        pl.BlockSpec((1, C), lambda n: (0, 0)),
        pl.BlockSpec((1, C), lambda n: (0, 0)),
        pl.BlockSpec((9 * C, C), lambda n: (0, 0)),
        pl.BlockSpec((1, C), lambda n: (0, 0)),
        pl.BlockSpec((1, C), lambda n: (0, 0)),
        pl.BlockSpec((4 * C, C), lambda n: (0, 0)),
        pl.BlockSpec((1, C), lambda n: (0, 0)),
        pl.BlockSpec((C, Cr), lambda n: (0, 0)),
        pl.BlockSpec((1, Cr), lambda n: (0, 0)),
        pl.BlockSpec((Cr, C), lambda n: (0, 0)),
        pl.BlockSpec((1, C), lambda n: (0, 0)),
    ]
    out_specs = pl.BlockSpec((1, Ho, Wo * C), lambda n: (n, 0, 0))

    # VMEM budget from actual (padded) buffer sizes instead of a flat 32 MiB:
    # double-buffered grid-varying blocks + weights + scratches, with headroom
    # for Mosaic internal scratch / spills.
    vmem_bytes = (
        2 * _padded_bytes((1, H * W, K1), jnp.bfloat16)      # cols1 block
        + 2 * _padded_bytes((1, Ho, Wo * C), jnp.float32)    # output block
        + 2 * sum(_padded_bytes(v.shape, v.dtype) for v in kp.values())
        + _padded_bytes((H + 2, W + 2, C), jnp.bfloat16)     # h1pad scratch
        + _padded_bytes((H, W, C), jnp.float32))             # h2 scratch
    vmem_limit = int(min(64 * 1024 * 1024,
                         max(8 * 1024 * 1024, 2 * vmem_bytes + 2 * 1024 * 1024)))

    out = pl.pallas_call(
        _unet_enc_kernel,
        out_shape=jax.ShapeDtypeStruct((N, Ho, Wo * C), jnp.float32),
        grid_spec=pltpu.PrefetchScalarGridSpec(
            num_scalar_prefetch=0,
            grid=(N,),
            in_specs=in_specs,
            out_specs=out_specs,
            scratch_shapes=[
                pltpu.VMEM((H + 2, W + 2, C), jnp.bfloat16),  # padded h1 (bf16)
                pltpu.VMEM((H, W, C), jnp.float32),           # h2 (pre-Haar)
            ],
        ),
        compiler_params=pltpu.CompilerParams(
            dimension_semantics=("parallel",),
            vmem_limit_bytes=vmem_limit),
    )(cols1, kp['w1col'], kp['bn1_scale'], kp['bn1_bias'],
      kp['w2col'], kp['bn2_scale'], kp['bn2_bias'],
      kp['w3'], kp['b3'],
      kp['we1'], kp['be1'], kp['we2'], kp['be2'])

    out = out.reshape(N, Ho, Wo, C)
    return jnp.transpose(out, (0, 3, 1, 2))                   # -> NCHW


def reference_forward(x, p):
    """Pure-JAX NCHW reference (eval-mode BN).  Matmul/conv operands are cast
    to bf16 with f32 accumulation — the same numerics the kernel uses."""
    bf = jnp.bfloat16

    def conv(x, w, padding, b=None):
        y = lax.conv_general_dilated(
            x.astype(bf), w.astype(bf), (1, 1), padding,
            dimension_numbers=('NCHW', 'OIHW', 'NCHW'),
            preferred_element_type=jnp.float32)
        if b is not None:
            y = y + b[None, :, None, None]
        return y

    def bn(x, g, b, m, v):
        scale = g / jnp.sqrt(v + BN_EPS)
        return (x - m[None, :, None, None]) * scale[None, :, None, None] \
            + b[None, :, None, None]

    h = jax.nn.relu(bn(conv(x, p['w1'], ((1, 1), (1, 1))),
                       p['g1'], p['b1'], p['m1'], p['v1']))
    h = jax.nn.relu(bn(conv(h, p['w2'], ((1, 1), (1, 1))),
                       p['g2'], p['b2'], p['m2'], p['v2']))
    x1 = h[:, :, 0::2, 0::2]; x2 = h[:, :, 1::2, 0::2]
    x3 = h[:, :, 0::2, 1::2]; x4 = h[:, :, 1::2, 1::2]
    haar = jnp.concatenate([x1 + x2 + x3 + x4,
                            -x1 - x2 + x3 + x4,
                            -x1 + x2 - x3 + x4,
                            x1 - x2 - x3 + x4], axis=1) * 0.5
    y = jax.nn.relu(conv(haar, p['w3'], ((0, 0), (0, 0)), p['b3']))
    sw = jnp.mean(y, axis=(2, 3), keepdims=True)              # global avg pool (H==W)
    sw = jax.nn.relu(conv(sw, p['we1'], ((0, 0), (0, 0)), p['be1']))
    sw = jax.nn.sigmoid(conv(sw, p['we2'], ((0, 0), (0, 0)), p['be2']))
    return y * sw


if __name__ == "__main__":
    # in_channels=4, out_channels=32, reduction_ratio=4, batch=2, spatial=16x16
    N, Cin, H, W = 2, 4, 16, 16
    C, r = 32, 4
    Cr = C // r

    key = jax.random.PRNGKey(0)
    ks = jax.random.split(key, 20)
    f32 = jnp.float32

    # deterministic synthetic parameters in PyTorch (OIHW / per-channel) layout
    tp = dict(
        w1=0.2 * jax.random.normal(ks[0], (C, Cin, 3, 3), f32),
        g1=1.0 + 0.1 * jax.random.normal(ks[1], (C,), f32),
        b1=0.1 * jax.random.normal(ks[2], (C,), f32),
        m1=0.1 * jax.random.normal(ks[3], (C,), f32),
        v1=1.0 + 0.1 * jnp.abs(jax.random.normal(ks[4], (C,), f32)),
        w2=0.1 * jax.random.normal(ks[5], (C, C, 3, 3), f32),
        g2=1.0 + 0.1 * jax.random.normal(ks[6], (C,), f32),
        b2=0.1 * jax.random.normal(ks[7], (C,), f32),
        m2=0.1 * jax.random.normal(ks[8], (C,), f32),
        v2=1.0 + 0.1 * jnp.abs(jax.random.normal(ks[9], (C,), f32)),
        w3=0.1 * jax.random.normal(ks[10], (C, 4 * C, 1, 1), f32),
        b3=0.1 * jax.random.normal(ks[11], (C,), f32),
        we1=0.2 * jax.random.normal(ks[12], (Cr, C, 1, 1), f32),
        be1=0.1 * jax.random.normal(ks[13], (Cr,), f32),
        we2=0.2 * jax.random.normal(ks[14], (C, Cr, 1, 1), f32),
        be2=0.1 * jax.random.normal(ks[15], (C,), f32),
    )

    # kernel-layout parameters: bf16 MXU weights, folded eval-mode BN in f32
    bn1_scale = tp['g1'] / jnp.sqrt(tp['v1'] + BN_EPS)
    bn2_scale = tp['g2'] / jnp.sqrt(tp['v2'] + BN_EPS)
    w1_hwio = jnp.transpose(tp['w1'], (2, 3, 1, 0))               # (3,3,Cin,C)
    w2_hwio = jnp.transpose(tp['w2'], (2, 3, 1, 0))               # (3,3,C,C)
    w3_mat = jnp.transpose(tp['w3'][:, :, 0, 0], (1, 0))          # (4C, C), rows=[ll|hl|lh|hh]
    kp = dict(
        w1col=w1_hwio.reshape(9 * Cin, C).astype(jnp.bfloat16),   # (9*Cin, C)
        bn1_scale=bn1_scale.reshape(1, C),
        bn1_bias=(tp['b1'] - tp['m1'] * bn1_scale).reshape(1, C),
        w2col=w2_hwio.reshape(9 * C, C).astype(jnp.bfloat16),     # (9*C, C) im2col layout
        bn2_scale=bn2_scale.reshape(1, C),
        bn2_bias=(tp['b2'] - tp['m2'] * bn2_scale).reshape(1, C),
        w3=w3_mat.astype(jnp.bfloat16),                           # (4C, C)
        b3=tp['b3'].reshape(1, C),
        we1=jnp.transpose(tp['we1'][:, :, 0, 0], (1, 0)).astype(jnp.bfloat16),  # (C,Cr)
        be1=tp['be1'].reshape(1, Cr),
        we2=jnp.transpose(tp['we2'][:, :, 0, 0], (1, 0)).astype(jnp.bfloat16),  # (Cr,C)
        be2=tp['be2'].reshape(1, C),
    )

    x = jax.random.normal(ks[16], (N, Cin, H, W), f32)

    out = unet_enc_forward(x, kp)
    out = jax.block_until_ready(out)

    assert out.shape == (N, C, H // 2, W // 2), out.shape
    ref = reference_forward(x, tp)
    if not bool(jnp.allclose(out, ref, rtol=5e-3, atol=5e-3)):
        raise AssertionError(
            f"kernel/reference mismatch: max abs err = {float(jnp.max(jnp.abs(out - ref)))}")
    print("KERNEL_OK")
</pallas_src>

<mosaic_0001>
module attributes {stable_mosaic.version = 11 : i64} {
  func.func @_unet_enc_kernel(%arg0: i32, %arg1: memref<1x256x36xbf16, #tpu.memory_space<vmem>>, %arg2: memref<36x32xbf16, #tpu.memory_space<vmem>>, %arg3: memref<1x32xf32, #tpu.memory_space<vmem>>, %arg4: memref<1x32xf32, #tpu.memory_space<vmem>>, %arg5: memref<288x32xbf16, #tpu.memory_space<vmem>>, %arg6: memref<1x32xf32, #tpu.memory_space<vmem>>, %arg7: memref<1x32xf32, #tpu.memory_space<vmem>>, %arg8: memref<128x32xbf16, #tpu.memory_space<vmem>>, %arg9: memref<1x32xf32, #tpu.memory_space<vmem>>, %arg10: memref<32x8xbf16, #tpu.memory_space<vmem>>, %arg11: memref<1x8xf32, #tpu.memory_space<vmem>>, %arg12: memref<8x32xbf16, #tpu.memory_space<vmem>>, %arg13: memref<1x32xf32, #tpu.memory_space<vmem>>, %arg14: memref<1x8x256xf32, #tpu.memory_space<vmem>>, %arg15: memref<18x18x32xbf16, #tpu.memory_space<vmem>>, %arg16: memref<16x16x32xf32, #tpu.memory_space<vmem>>) attributes {dimension_semantics = [#tpu.dimension_semantics<parallel>], iteration_bounds = array<i64: 2>, scalar_prefetch = 0 : i64, scratch_operands = 2 : i64, tpu.core_type = #tpu.core_type<tc>, window_params = [{transform_indices = @transform_0, window_bounds = array<i64: 1, 256, 36>}, {pipeline_mode = #tpu.pipeline_mode<synchronous>, transform_indices = @transform_1, window_bounds = array<i64: 36, 32>}, {pipeline_mode = #tpu.pipeline_mode<synchronous>, transform_indices = @transform_2, window_bounds = array<i64: 1, 32>}, {pipeline_mode = #tpu.pipeline_mode<synchronous>, transform_indices = @transform_3, window_bounds = array<i64: 1, 32>}, {pipeline_mode = #tpu.pipeline_mode<synchronous>, transform_indices = @transform_4, window_bounds = array<i64: 288, 32>}, {pipeline_mode = #tpu.pipeline_mode<synchronous>, transform_indices = @transform_5, window_bounds = array<i64: 1, 32>}, {pipeline_mode = #tpu.pipeline_mode<synchronous>, transform_indices = @transform_6, window_bounds = array<i64: 1, 32>}, {pipeline_mode = #tpu.pipeline_mode<synchronous>, transform_indices = @transform_7, window_bounds = array<i64: 128, 32>}, {pipeline_mode = #tpu.pipeline_mode<synchronous>, transform_indices = @transform_8, window_bounds = array<i64: 1, 32>}, {pipeline_mode = #tpu.pipeline_mode<synchronous>, transform_indices = @transform_9, window_bounds = array<i64: 32, 8>}, {pipeline_mode = #tpu.pipeline_mode<synchronous>, transform_indices = @transform_10, window_bounds = array<i64: 1, 8>}, {pipeline_mode = #tpu.pipeline_mode<synchronous>, transform_indices = @transform_11, window_bounds = array<i64: 8, 32>}, {pipeline_mode = #tpu.pipeline_mode<synchronous>, transform_indices = @transform_12, window_bounds = array<i64: 1, 32>}, {transform_indices = @transform_13, window_bounds = array<i64: 1, 8, 256>}]} {
    %c0 = arith.constant 0 : index
    %c0_0 = arith.constant 0 : index
    %c0_1 = arith.constant 0 : index
    %0 = vector.load %arg1[%c0, %c0_0, %c0_1] : memref<1x256x36xbf16, #tpu.memory_space<vmem>>, vector<1x256x36xbf16>
    %1 = vector.shape_cast %0 : vector<1x256x36xbf16> to vector<256x36xbf16>
    %c0_2 = arith.constant 0 : index
    %c0_3 = arith.constant 0 : index
    %2 = vector.load %arg2[%c0_2, %c0_3] : memref<36x32xbf16, #tpu.memory_space<vmem>>, vector<36x32xbf16>
    %cst = arith.constant dense<0.000000e+00> : vector<256x32xf32>
    %3 = tpu.matmul %1, %2, %cst {dimension_numbers = #tpu.dot_dimension_numbers<[1], [0], [0], [1], [0, 0, 1, 1], [], []>} : vector<256x36xbf16>, vector<36x32xbf16>, vector<256x32xf32> -> vector<256x32xf32>
    %c0_4 = arith.constant 0 : index
    %c0_5 = arith.constant 0 : index
    %4 = vector.load %arg3[%c0_4, %c0_5] : memref<1x32xf32, #tpu.memory_space<vmem>>, vector<1x32xf32>
    %5 = vector.broadcast %4 : vector<1x32xf32> to vector<256x32xf32>
    %6 = arith.mulf %3, %5 : vector<256x32xf32>
    %c0_6 = arith.constant 0 : index
    %c0_7 = arith.constant 0 : index
    %7 = vector.load %arg4[%c0_6, %c0_7] : memref<1x32xf32, #tpu.memory_space<vmem>>, vector<1x32xf32>
    %8 = vector.broadcast %7 : vector<1x32xf32> to vector<256x32xf32>
    %9 = arith.addf %6, %8 : vector<256x32xf32>
    %cst_8 = arith.constant 0.000000e+00 : f32
    %10 = vector.broadcast %cst_8 : f32 to vector<256x32xf32>
    %11 = arith.maximumf %9, %10 : vector<256x32xf32>
    %12 = arith.truncf %11 : vector<256x32xf32> to vector<256x32xbf16>
    %13 = vector.shape_cast %12 : vector<256x32xbf16> to vector<16x16x32xbf16>
    %cst_9 = arith.constant 0.000000e+00 : bf16
    %14 = vector.broadcast %cst_9 : bf16 to vector<1x18x32xbf16>
    %cst_10 = arith.constant 0.000000e+00 : bf16
    %15 = vector.broadcast %cst_10 : bf16 to vector<16x1x32xbf16>
    %c0_11 = arith.constant 0 : index
    %c0_12 = arith.constant 0 : index
    %c0_13 = arith.constant 0 : index
    %16 = vector.load %arg15[%c0_11, %c0_12, %c0_13] : memref<18x18x32xbf16, #tpu.memory_space<vmem>>, vector<1x18x32xbf16>
    tpu.vector_store %arg15[%c0_11, %c0_12, %c0_13], %14 {strides = array<i32>} : memref<18x18x32xbf16, #tpu.memory_space<vmem>>, vector<1x18x32xbf16>,
    %c17 = arith.constant 17 : index
    %c0_14 = arith.constant 0 : index
    %c0_15 = arith.constant 0 : index
    %17 = vector.load %arg15[%c17, %c0_14, %c0_15] : memref<18x18x32xbf16, #tpu.memory_space<vmem>>, vector<1x18x32xbf16>
    tpu.vector_store %arg15[%c17, %c0_14, %c0_15], %14 {strides = array<i32>} : memref<18x18x32xbf16, #tpu.memory_space<vmem>>, vector<1x18x32xbf16>,
    %18 = tpu.concatenate %15, %13, %15 in 1 : vector<16x1x32xbf16>, vector<16x16x32xbf16>, vector<16x1x32xbf16> -> vector<16x18x32xbf16>
    %c1 = arith.constant 1 : index
    %c0_16 = arith.constant 0 : index
    %c0_17 = arith.constant 0 : index
    %19 = vector.load %arg15[%c1, %c0_16, %c0_17] : memref<18x18x32xbf16, #tpu.memory_space<vmem>>, vector<16x18x32xbf16>
    tpu.vector_store %arg15[%c1, %c0_16, %c0_17], %18 {strides = array<i32>} : memref<18x18x32xbf16, #tpu.memory_space<vmem>>, vector<16x18x32xbf16>,
    %c0_18 = arith.constant 0 : index
    %c0_19 = arith.constant 0 : index
    %c0_20 = arith.constant 0 : index
    %20 = vector.load %arg15[%c0_18, %c0_19, %c0_20] : memref<18x18x32xbf16, #tpu.memory_space<vmem>>, vector<16x16x32xbf16>
    %21 = vector.shape_cast %20 : vector<16x16x32xbf16> to vector<256x32xbf16>
    %c0_21 = arith.constant 0 : index
    %c1_22 = arith.constant 1 : index
    %c0_23 = arith.constant 0 : index
    %22 = vector.load %arg15[%c0_21, %c1_22, %c0_23] : memref<18x18x32xbf16, #tpu.memory_space<vmem>>, vector<16x16x32xbf16>
    %23 = vector.shape_cast %22 : vector<16x16x32xbf16> to vector<256x32xbf16>
    %c0_24 = arith.constant 0 : index
    %c2 = arith.constant 2 : index
    %c0_25 = arith.constant 0 : index
    %24 = vector.load %arg15[%c0_24, %c2, %c0_25] : memref<18x18x32xbf16, #tpu.memory_space<vmem>>, vector<16x16x32xbf16>
    %25 = vector.shape_cast %24 : vector<16x16x32xbf16> to vector<256x32xbf16>
    %c1_26 = arith.constant 1 : index
    %c0_27 = arith.constant 0 : index
    %c0_28 = arith.constant 0 : index
    %26 = vector.load %arg15[%c1_26, %c0_27, %c0_28] : memref<18x18x32xbf16, #tpu.memory_space<vmem>>, vector<16x16x32xbf16>
    %27 = vector.shape_cast %26 : vector<16x16x32xbf16> to vector<256x32xbf16>
    %c1_29 = arith.constant 1 : index
    %c1_30 = arith.constant 1 : index
    %c0_31 = arith.constant 0 : index
    %28 = vector.load %arg15[%c1_29, %c1_30, %c0_31] : memref<18x18x32xbf16, #tpu.memory_space<vmem>>, vector<16x16x32xbf16>
    %29 = vector.shape_cast %28 : vector<16x16x32xbf16> to vector<256x32xbf16>
    %c1_32 = arith.constant 1 : index
    %c2_33 = arith.constant 2 : index
    %c0_34 = arith.constant 0 : index
    %30 = vector.load %arg15[%c1_32, %c2_33, %c0_34] : memref<18x18x32xbf16, #tpu.memory_space<vmem>>, vector<16x16x32xbf16>
    %31 = vector.shape_cast %30 : vector<16x16x32xbf16> to vector<256x32xbf16>
    %c2_35 = arith.constant 2 : index
    %c0_36 = arith.constant 0 : index
    %c0_37 = arith.constant 0 : index
    %32 = vector.load %arg15[%c2_35, %c0_36, %c0_37] : memref<18x18x32xbf16, #tpu.memory_space<vmem>>, vector<16x16x32xbf16>
    %33 = vector.shape_cast %32 : vector<16x16x32xbf16> to vector<256x32xbf16>
    %c2_38 = arith.constant 2 : index
    %c1_39 = arith.constant 1 : index
    %c0_40 = arith.constant 0 : index
    %34 = vector.load %arg15[%c2_38, %c1_39, %c0_40] : memref<18x18x32xbf16, #tpu.memory_space<vmem>>, vector<16x16x32xbf16>
    %35 = vector.shape_cast %34 : vector<16x16x32xbf16> to vector<256x32xbf16>
    %c2_41 = arith.constant 2 : index
    %c2_42 = arith.constant 2 : index
    %c0_43 = arith.constant 0 : index
    %36 = vector.load %arg15[%c2_41, %c2_42, %c0_43] : memref<18x18x32xbf16, #tpu.memory_space<vmem>>, vector<16x16x32xbf16>
    %37 = vector.shape_cast %36 : vector<16x16x32xbf16> to vector<256x32xbf16>
    %38 = tpu.concatenate %21, %23, %25, %27, %29, %31, %33, %35, %37 in 1 : vector<256x32xbf16>, vector<256x32xbf16>, vector<256x32xbf16>, vector<256x32xbf16>, vector<256x32xbf16>, vector<256x32xbf16>, vector<256x32xbf16>, vector<256x32xbf16>, vector<256x32xbf16> -> vector<256x288xbf16>
    %c0_44 = arith.constant 0 : index
    %c0_45 = arith.constant 0 : index
    %39 = vector.load %arg5[%c0_44, %c0_45] : memref<288x32xbf16, #tpu.memory_space<vmem>>, vector<288x32xbf16>
    %cst_46 = arith.constant dense<0.000000e+00> : vector<256x32xf32>
    %40 = tpu.matmul %38, %39, %cst_46 {dimension_numbers = #tpu.dot_dimension_numbers<[1], [0], [0], [1], [0, 0, 1, 1], [], []>} : vector<256x288xbf16>, vector<288x32xbf16>, vector<256x32xf32> -> vector<256x32xf32>
    %c0_47 = arith.constant 0 : index
    %c0_48 = arith.constant 0 : index
    %41 = vector.load %arg6[%c0_47, %c0_48] : memref<1x32xf32, #tpu.memory_space<vmem>>, vector<1x32xf32>
    %42 = vector.broadcast %41 : vector<1x32xf32> to vector<256x32xf32>
    %43 = arith.mulf %40, %42 : vector<256x32xf32>
    %c0_49 = arith.constant 0 : index
    %c0_50 = arith.constant 0 : index
    %44 = vector.load %arg7[%c0_49, %c0_50] : memref<1x32xf32, #tpu.memory_space<vmem>>, vector<1x32xf32>
    %45 = vector.broadcast %44 : vector<1x32xf32> to vector<256x32xf32>
    %46 = arith.addf %43, %45 : vector<256x32xf32>
    %cst_51 = arith.constant 0.000000e+00 : f32
    %47 = vector.broadcast %cst_51 : f32 to vector<256x32xf32>
    %48 = arith.maximumf %46, %47 : vector<256x32xf32>
    %49 = vector.shape_cast %48 : vector<256x32xf32> to vector<16x16x32xf32>
    %c0_52 = arith.constant 0 : index
    %c0_53 = arith.constant 0 : index
    %c0_54 = arith.constant 0 : index
    %50 = vector.load %arg16[%c0_52, %c0_53, %c0_54] : memref<16x16x32xf32, #tpu.memory_space<vmem>>, vector<16x16x32xf32>
    tpu.vector_store %arg16[%c0_52, %c0_53, %c0_54], %49 {strides = array<i32>} : memref<16x16x32xf32, #tpu.memory_space<vmem>>, vector<16x16x32xf32>,
    %c0_55 = arith.constant 0 : index
    %c0_56 = arith.constant 0 : index
    %c0_57 = arith.constant 0 : index
    %51 = tpu.strided_load %arg16[%c0_55, %c0_56, %c0_57] {strides = array<i32: 2, 2, 1>} : memref<16x16x32xf32, #tpu.memory_space<vmem>>, vector<8x8x32xf32>
    %c1_58 = arith.constant 1 : index
    %c0_59 = arith.constant 0 : index
    %c0_60 = arith.constant 0 : index
    %52 = tpu.strided_load %arg16[%c1_58, %c0_59, %c0_60] {strides = array<i32: 2, 2, 1>} : memref<16x16x32xf32, #tpu.memory_space<vmem>>, vector<8x8x32xf32>
    %c0_61 = arith.constant 0 : index
    %c1_62 = arith.constant 1 : index
    %c0_63 = arith.constant 0 : index
    %53 = tpu.strided_load %arg16[%c0_61, %c1_62, %c0_63] {strides = array<i32: 2, 2, 1>} : memref<16x16x32xf32, #tpu.memory_space<vmem>>, vector<8x8x32xf32>
    %c1_64 = arith.constant 1 : index
    %c1_65 = arith.constant 1 : index
    %c0_66 = arith.constant 0 : index
    %54 = tpu.strided_load %arg16[%c1_64, %c1_65, %c0_66] {strides = array<i32: 2, 2, 1>} : memref<16x16x32xf32, #tpu.memory_space<vmem>>, vector<8x8x32xf32>
    %55 = arith.addf %51, %52 : vector<8x8x32xf32>
    %56 = arith.addf %55, %53 : vector<8x8x32xf32>
    %57 = arith.addf %56, %54 : vector<8x8x32xf32>
    %cst_67 = arith.constant 5.000000e-01 : f32
    %58 = vector.broadcast %cst_67 : f32 to vector<8x8x32xf32>
    %59 = arith.mulf %57, %58 : vector<8x8x32xf32>
    %60 = vector.shape_cast %59 : vector<8x8x32xf32> to vector<64x32xf32>
    %61 = arith.truncf %60 : vector<64x32xf32> to vector<64x32xbf16>
    %cst_68 = arith.constant 0.000000e+00 : f32
    %62 = vector.broadcast %cst_68 : f32 to vector<8x8x32xf32>
    %63 = arith.subf %62, %51 : vector<8x8x32xf32>
    %64 = arith.subf %63, %52 : vector<8x8x32xf32>
    %65 = arith.addf %64, %53 : vector<8x8x32xf32>
    %66 = arith.addf %65, %54 : vector<8x8x32xf32>
    %cst_69 = arith.constant 5.000000e-01 : f32
    %67 = vector.broadcast %cst_69 : f32 to vector<8x8x32xf32>
    %68 = arith.mulf %66, %67 : vector<8x8x32xf32>
    %69 = vector.shape_cast %68 : vector<8x8x32xf32> to vector<64x32xf32>
    %70 = arith.truncf %69 : vector<64x32xf32> to vector<64x32xbf16>
    %cst_70 = arith.constant 0.000000e+00 : f32
    %71 = vector.broadcast %cst_70 : f32 to vector<8x8x32xf32>
    %72 = arith.subf %71, %51 : vector<8x8x32xf32>
    %73 = arith.addf %72, %52 : vector<8x8x32xf32>
    %74 = arith.subf %73, %53 : vector<8x8x32xf32>
    %75 = arith.addf %74, %54 : vector<8x8x32xf32>
    %cst_71 = arith.constant 5.000000e-01 : f32
    %76 = vector.broadcast %cst_71 : f32 to vector<8x8x32xf32>
    %77 = arith.mulf %75, %76 : vector<8x8x32xf32>
    %78 = vector.shape_cast %77 : vector<8x8x32xf32> to vector<64x32xf32>
    %79 = arith.truncf %78 : vector<64x32xf32> to vector<64x32xbf16>
    %80 = arith.subf %51, %52 : vector<8x8x32xf32>
    %81 = arith.subf %80, %53 : vector<8x8x32xf32>
    %82 = arith.addf %81, %54 : vector<8x8x32xf32>
    %cst_72 = arith.constant 5.000000e-01 : f32
    %83 = vector.broadcast %cst_72 : f32 to vector<8x8x32xf32>
    %84 = arith.mulf %82, %83 : vector<8x8x32xf32>
    %85 = vector.shape_cast %84 : vector<8x8x32xf32> to vector<64x32xf32>
    %86 = arith.truncf %85 : vector<64x32xf32> to vector<64x32xbf16>
    %87 = tpu.concatenate %61, %70, %79, %86 in 1 : vector<64x32xbf16>, vector<64x32xbf16>, vector<64x32xbf16>, vector<64x32xbf16> -> vector<64x128xbf16>
    %c0_73 = arith.constant 0 : index
    %c0_74 = arith.constant 0 : index
    %88 = vector.load %arg8[%c0_73, %c0_74] : memref<128x32xbf16, #tpu.memory_space<vmem>>, vector<128x32xbf16>
    %cst_75 = arith.constant dense<0.000000e+00> : vector<64x32xf32>
    %89 = tpu.matmul %87, %88, %cst_75 {dimension_numbers = #tpu.dot_dimension_numbers<[1], [0], [0], [1], [0, 0, 1, 1], [], []>} : vector<64x128xbf16>, vector<128x32xbf16>, vector<64x32xf32> -> vector<64x32xf32>
    %c0_76 = arith.constant 0 : index
    %c0_77 = arith.constant 0 : index
    %90 = vector.load %arg9[%c0_76, %c0_77] : memref<1x32xf32, #tpu.memory_space<vmem>>, vector<1x32xf32>
    %91 = vector.broadcast %90 : vector<1x32xf32> to vector<64x32xf32>
    %92 = arith.addf %89, %91 : vector<64x32xf32>
    %cst_78 = arith.constant 0.000000e+00 : f32
    %93 = vector.broadcast %cst_78 : f32 to vector<64x32xf32>
    %94 = arith.maximumf %92, %93 : vector<64x32xf32>
    %cst_79 = arith.constant dense<0.000000e+00> : vector<32xf32>
    %95 = vector.multi_reduction <add>, %94, %cst_79 [0] : vector<64x32xf32> to vector<32xf32>
    %96 = vector.shape_cast %95 : vector<32xf32> to vector<1x32xf32>
    %cst_80 = arith.constant 6.400000e+01 : f32
    %97 = vector.broadcast %cst_80 : f32 to vector<1x32xf32>
    %98 = arith.divf %96, %97 : vector<1x32xf32>
    %99 = arith.truncf %98 : vector<1x32xf32> to vector<1x32xbf16>
    %c0_81 = arith.constant 0 : index
    %c0_82 = arith.constant 0 : index
    %100 = vector.load %arg10[%c0_81, %c0_82] : memref<32x8xbf16, #tpu.memory_space<vmem>>, vector<32x8xbf16>
    %cst_83 = arith.constant dense<0.000000e+00> : vector<1x8xf32>
    %101 = tpu.matmul %99, %100, %cst_83 {dimension_numbers = #tpu.dot_dimension_numbers<[1], [0], [0], [1], [0, 0, 1, 1], [], []>} : vector<1x32xbf16>, vector<32x8xbf16>, vector<1x8xf32> -> vector<1x8xf32>
    %c0_84 = arith.constant 0 : index
    %c0_85 = arith.constant 0 : index
    %102 = vector.load %arg11[%c0_84, %c0_85] : memref<1x8xf32, #tpu.memory_space<vmem>>, vector<1x8xf32>
    %103 = arith.addf %101, %102 : vector<1x8xf32>
    %cst_86 = arith.constant 0.000000e+00 : f32
    %104 = vector.broadcast %cst_86 : f32 to vector<1x8xf32>
    %105 = arith.maximumf %103, %104 : vector<1x8xf32>
    %106 = arith.truncf %105 : vector<1x8xf32> to vector<1x8xbf16>
    %c0_87 = arith.constant 0 : index
    %c0_88 = arith.constant 0 : index
    %107 = vector.load %arg12[%c0_87, %c0_88] : memref<8x32xbf16, #tpu.memory_space<vmem>>, vector<8x32xbf16>
    %cst_89 = arith.constant dense<0.000000e+00> : vector<1x32xf32>
    %108 = tpu.matmul %106, %107, %cst_89 {dimension_numbers = #tpu.dot_dimension_numbers<[1], [0], [0], [1], [0, 0, 1, 1], [], []>} : vector<1x8xbf16>, vector<8x32xbf16>, vector<1x32xf32> -> vector<1x32xf32>
    %c0_90 = arith.constant 0 : index
    %c0_91 = arith.constant 0 : index
    %109 = vector.load %arg13[%c0_90, %c0_91] : memref<1x32xf32, #tpu.memory_space<vmem>>, vector<1x32xf32>
    %110 = arith.addf %108, %109 : vector<1x32xf32>
    %111 = arith.negf %110 : vector<1x32xf32>
    %112 = math.exp %111 : vector<1x32xf32>
    %cst_92 = arith.constant 1.000000e+00 : f32
    %113 = vector.broadcast %cst_92 : f32 to vector<1x32xf32>
    %114 = arith.addf %113, %112 : vector<1x32xf32>
    %115 = arith.divf %113, %114 : vector<1x32xf32>
    %116 = vector.broadcast %115 : vector<1x32xf32> to vector<64x32xf32>
    %117 = arith.mulf %94, %116 : vector<64x32xf32>
    %118 = vector.shape_cast %117 : vector<64x32xf32> to vector<8x8x32xf32>
    %119 = vector.extract_strided_slice %118 {offsets = [0, 0, 0], sizes = [8, 1, 32], strides = [1, 1, 1]} : vector<8x8x32xf32> to vector<8x1x32xf32>
    %120 = vector.shape_cast %119 : vector<8x1x32xf32> to vector<8x32xf32>
    %121 = vector.extract_strided_slice %118 {offsets = [0, 1, 0], sizes = [8, 1, 32], strides = [1, 1, 1]} : vector<8x8x32xf32> to vector<8x1x32xf32>
    %122 = vector.shape_cast %121 : vector<8x1x32xf32> to vector<8x32xf32>
    %123 = vector.extract_strided_slice %118 {offsets = [0, 2, 0], sizes = [8, 1, 32], strides = [1, 1, 1]} : vector<8x8x32xf32> to vector<8x1x32xf32>
    %124 = vector.shape_cast %123 : vector<8x1x32xf32> to vector<8x32xf32>
    %125 = vector.extract_strided_slice %118 {offsets = [0, 3, 0], sizes = [8, 1, 32], strides = [1, 1, 1]} : vector<8x8x32xf32> to vector<8x1x32xf32>
    %126 = vector.shape_cast %125 : vector<8x1x32xf32> to vector<8x32xf32>
    %127 = vector.extract_strided_slice %118 {offsets = [0, 4, 0], sizes = [8, 1, 32], strides = [1, 1, 1]} : vector<8x8x32xf32> to vector<8x1x32xf32>
    %128 = vector.shape_cast %127 : vector<8x1x32xf32> to vector<8x32xf32>
    %129 = vector.extract_strided_slice %118 {offsets = [0, 5, 0], sizes = [8, 1, 32], strides = [1, 1, 1]} : vector<8x8x32xf32> to vector<8x1x32xf32>
    %130 = vector.shape_cast %129 : vector<8x1x32xf32> to vector<8x32xf32>
    %131 = vector.extract_strided_slice %118 {offsets = [0, 6, 0], sizes = [8, 1, 32], strides = [1, 1, 1]} : vector<8x8x32xf32> to vector<8x1x32xf32>
    %132 = vector.shape_cast %131 : vector<8x1x32xf32> to vector<8x32xf32>
    %133 = vector.extract_strided_slice %118 {offsets = [0, 7, 0], sizes = [8, 1, 32], strides = [1, 1, 1]} : vector<8x8x32xf32> to vector<8x1x32xf32>
    %134 = vector.shape_cast %133 : vector<8x1x32xf32> to vector<8x32xf32>
    %135 = tpu.concatenate %120, %122, %124, %126, %128, %130, %132, %134 in 1 : vector<8x32xf32>, vector<8x32xf32>, vector<8x32xf32>, vector<8x32xf32>, vector<8x32xf32>, vector<8x32xf32>, vector<8x32xf32>, vector<8x32xf32> -> vector<8x256xf32>
    %136 = vector.shape_cast %135 : vector<8x256xf32> to vector<1x8x256xf32>
    %c0_93 = arith.constant 0 : index
    %c0_94 = arith.constant 0 : index
    %c0_95 = arith.constant 0 : index
    %137 = vector.load %arg14[%c0_93, %c0_94, %c0_95] : memref<1x8x256xf32, #tpu.memory_space<vmem>>, vector<1x8x256xf32>
    tpu.vector_store %arg14[%c0_93, %c0_94, %c0_95], %136 {strides = array<i32>} : memref<1x8x256xf32, #tpu.memory_space<vmem>>, vector<1x8x256xf32>,
    return
  }
  func.func @transform_0(%arg0: i32) -> (i32, i32, i32) {
    %c0_i32 = arith.constant 0 : i32
    %c0_i32_0 = arith.constant 0 : i32
    %c0_i32_1 = arith.constant 0 : i32
    return %arg0, %c0_i32, %c0_i32_0 : i32, i32, i32
  }
  func.func @transform_1(%arg0: i32) -> (i32, i32) {
    %c0_i32 = arith.constant 0 : i32
    %c0_i32_0 = arith.constant 0 : i32
    %c0_i32_1 = arith.constant 0 : i32
    return %c0_i32, %c0_i32_0 : i32, i32
  }
  func.func @transform_2(%arg0: i32) -> (i32, i32) {
    %c0_i32 = arith.constant 0 : i32
    %c0_i32_0 = arith.constant 0 : i32
    %c0_i32_1 = arith.constant 0 : i32
    return %c0_i32, %c0_i32_0 : i32, i32
  }
  func.func @transform_3(%arg0: i32) -> (i32, i32) {
    %c0_i32 = arith.constant 0 : i32
    %c0_i32_0 = arith.constant 0 : i32
    %c0_i32_1 = arith.constant 0 : i32
    return %c0_i32, %c0_i32_0 : i32, i32
  }
  func.func @transform_4(%arg0: i32) -> (i32, i32) {
    %c0_i32 = arith.constant 0 : i32
    %c0_i32_0 = arith.constant 0 : i32
    %c0_i32_1 = arith.constant 0 : i32
    return %c0_i32, %c0_i32_0 : i32, i32
  }
  func.func @transform_5(%arg0: i32) -> (i32, i32) {
    %c0_i32 = arith.constant 0 : i32
    %c0_i32_0 = arith.constant 0 : i32
    %c0_i32_1 = arith.constant 0 : i32
    return %c0_i32, %c0_i32_0 : i32, i32
  }
  func.func @transform_6(%arg0: i32) -> (i32, i32) {
    %c0_i32 = arith.constant 0 : i32
    %c0_i32_0 = arith.constant 0 : i32
    %c0_i32_1 = arith.constant 0 : i32
    return %c0_i32, %c0_i32_0 : i32, i32
  }
  func.func @transform_7(%arg0: i32) -> (i32, i32) {
    %c0_i32 = arith.constant 0 : i32
    %c0_i32_0 = arith.constant 0 : i32
    %c0_i32_1 = arith.constant 0 : i32
    return %c0_i32, %c0_i32_0 : i32, i32
  }
  func.func @transform_8(%arg0: i32) -> (i32, i32) {
    %c0_i32 = arith.constant 0 : i32
    %c0_i32_0 = arith.constant 0 : i32
    %c0_i32_1 = arith.constant 0 : i32
    return %c0_i32, %c0_i32_0 : i32, i32
  }
  func.func @transform_9(%arg0: i32) -> (i32, i32) {
    %c0_i32 = arith.constant 0 : i32
    %c0_i32_0 = arith.constant 0 : i32
    %c0_i32_1 = arith.constant 0 : i32
    return %c0_i32, %c0_i32_0 : i32, i32
  }
  func.func @transform_10(%arg0: i32) -> (i32, i32) {
    %c0_i32 = arith.constant 0 : i32
    %c0_i32_0 = arith.constant 0 : i32
    %c0_i32_1 = arith.constant 0 : i32
    return %c0_i32, %c0_i32_0 : i32, i32
  }
  func.func @transform_11(%arg0: i32) -> (i32, i32) {
    %c0_i32 = arith.constant 0 : i32
    %c0_i32_0 = arith.constant 0 : i32
    %c0_i32_1 = arith.constant 0 : i32
    return %c0_i32, %c0_i32_0 : i32, i32
  }
  func.func @transform_12(%arg0: i32) -> (i32, i32) {
    %c0_i32 = arith.constant 0 : i32
    %c0_i32_0 = arith.constant 0 : i32
    %c0_i32_1 = arith.constant 0 : i32
    return %c0_i32, %c0_i32_0 : i32, i32
  }
  func.func @transform_13(%arg0: i32) -> (i32, i32, i32) {
    %c0_i32 = arith.constant 0 : i32
    %c0_i32_0 = arith.constant 0 : i32
    %c0_i32_1 = arith.constant 0 : i32
    return %arg0, %c0_i32, %c0_i32_0 : i32, i32, i32
  }
}

</mosaic_0001>

<llo_original>
// kernel: tpu_custom_call.1
$region0: #{tpu_custom_call.1}
  #allocation0 [shape = 'u32[]', space=smem, size = 0x4, offset = 0x4, fixed_abs, tag = 'smem constant byte address 0x4 - core index']
  #allocation1 [shape = 'u32[144,128]{1,0:T(1,128)}', space=vmem, size = 0x12000, scoped, tag = 'internal scratch']
  #allocation2 [shape = 'bf16[18,18,32]{2,1,0:T(8,128)(2,1)}', space=vmem, size = 0x1b000, scoped, tag = 'scratch operand']
  #allocation3 [shape = 'f32[16,16,32]{2,1,0:T(8,128)}', space=vmem, size = 0x20000, scoped, tag = 'scratch operand']
  %s0 = inlined_call_operand.vmem [shape: bf16[2,256,36], index: 0, kind: input, shape index: {}]
  %s1 = inlined_call_operand.vmem [shape: bf16[36,32], index: 1, kind: input, shape index: {}]
  %s2 = inlined_call_operand.vmem [shape: f32[1,32], index: 2, kind: input, shape index: {}]
  %s3 = inlined_call_operand.vmem [shape: f32[1,32], index: 3, kind: input, shape index: {}]
  %s4 = inlined_call_operand.vmem [shape: bf16[288,32], index: 4, kind: input, shape index: {}]
  %s5 = inlined_call_operand.vmem [shape: f32[1,32], index: 5, kind: input, shape index: {}]
  %s6 = inlined_call_operand.vmem [shape: f32[1,32], index: 6, kind: input, shape index: {}]
  %s7 = inlined_call_operand.vmem [shape: bf16[128,32], index: 7, kind: input, shape index: {}]
  %s8 = inlined_call_operand.vmem [shape: f32[1,32], index: 8, kind: input, shape index: {}]
  %s9 = inlined_call_operand.vmem [shape: bf16[32,8], index: 9, kind: input, shape index: {}]
  %s10 = inlined_call_operand.vmem [shape: f32[1,8], index: 10, kind: input, shape index: {}]
  %s11 = inlined_call_operand.vmem [shape: bf16[8,32], index: 11, kind: input, shape index: {}]
  %s12 = inlined_call_operand.vmem [shape: f32[1,32], index: 12, kind: input, shape index: {}]
  %s13 = inlined_call_operand.hbm [shape: f32[2,8,256], index: 13, kind: output, shape index: {}]
  %s14 = sld [smem:[#allocation0]]
  $region85: #{tpu_custom_call.1} parent=0
    _
  %s16 = ssub.s32 1, %s14
  %s17 = scalar_select 0, %s16, %s14
  $region1: #{tpu_custom_call.1} parent=0
    #allocation4 [shape = 'u8[16384]{0}', space=vmem, size = 0x4000, scoped, tag = 'output window, operand 0']
    #allocation5 [shape = 's32[2]{0}', space=sflag, size = 0x8, scoped, tag = 'scoped memory for tpu_custom_call.1']
    %18 = vsyncpa [#allocation5], 0
    %s19 = scalar_lea.sflag [#allocation5], 1
    %20 = vsyncpa %s19, 0
    loop: start=0, step=1, limit=4
    $region2: #{tpu_custom_call.1} parent=1 // loop_pre_header
      _
    $region3: #{tpu_custom_call.1} parent=1 // loop_header
      %s22 = sphi 0, %s26
      %p23 = scmp.ge.s32.totalorder %s22, 4
      %s32 = sphi 0, %s34
      %s35 = sphi 0, %s32
      %s36 = sphi 0, %s35
      %s52 = sphi 0, %s36
      %s56 = sphi 0, %s56
      %s58 = sphi 0, %s56
      %s59 = sphi 0, %s58
      %s73 = sphi 0, %s59
      %s77 = sphi 0, %s77
      %s79 = sphi 0, %s77
      %s80 = sphi 0, %s79
      %s94 = sphi 0, %s80
      %s98 = sphi 0, %s98
      %s100 = sphi 0, %s98
      %s101 = sphi 0, %s100
      %s115 = sphi 0, %s101
      %s119 = sphi 0, %s119
      %s121 = sphi 0, %s119
      %s122 = sphi 0, %s121
      %s136 = sphi 0, %s122
      %s140 = sphi 0, %s140
      %s142 = sphi 0, %s140
      %s143 = sphi 0, %s142
      %s157 = sphi 0, %s143
      %s161 = sphi 0, %s161
      %s163 = sphi 0, %s161
      %s164 = sphi 0, %s163
      %s178 = sphi 0, %s164
      %s182 = sphi 0, %s182
      %s184 = sphi 0, %s182
      %s185 = sphi 0, %s184
      %s199 = sphi 0, %s185
      %s203 = sphi 0, %s203
      %s205 = sphi 0, %s203
      %s206 = sphi 0, %s205
      %s220 = sphi 0, %s206
      %s224 = sphi 0, %s224
      %s226 = sphi 0, %s224
      %s227 = sphi 0, %s226
      %s241 = sphi 0, %s227
      %s245 = sphi 0, %s245
      %s247 = sphi 0, %s245
      %s248 = sphi 0, %s247
      %s262 = sphi 0, %s248
      %s266 = sphi 0, %s266
      %s268 = sphi 0, %s266
      %s269 = sphi 0, %s268
      %s283 = sphi 0, %s269
      %s287 = sphi 0, %s287
      %s289 = sphi 0, %s287
      %s290 = sphi 0, %s289
      %s304 = sphi 0, %s290
      %s310 = sphi 0, %s312
      %s313 = sphi 0, %s310
      %s314 = sphi 0, %s313
      %s330 = sphi 0, %s314
    $region4: #{tpu_custom_call.1} parent=1 // loop_header_branch
      %25 = sbr.rel (%p23) target = $region8
    $region5: #{tpu_custom_call.1} parent=1 // loop_body
      %s27 = ssub.s32 %s22, 1
      %s28 = ssub.s32 %s22, 2
      %s29 = sadd.s32 %s22, 1
      %s30 = ssub.s32 %s22, %s29
      %p31 = scmp.eq.s32.totalorder %s30, 0
      %s33 = sadd.s32 %s32, 1
      %s34 = scalar_select %p31, %s32, %s33
      %p37 = pneg %p31
      %p38 = scmp.eq.s32.totalorder %s22, 1
      %p39 = por %p37, %p38
      %p40 = scmp.ne.s32.totalorder %s32, %s35
      %p41 = scmp.eq.s32.totalorder %s22, 0
      %p42 = por %p40, %p41
      %p43 = scmp.ne.s32.totalorder %s32, %s35
      %p44 = scmp.eq.s32.totalorder %s27, 1
      %p45 = por %p43, %p44
      %p46 = scmp.ne.s32.totalorder %s35, %s36
      %p47 = scmp.eq.s32.totalorder %s27, 0
      %p48 = por %p46, %p47
      %p49 = scmp.ne.s32.totalorder %s35, %s36
      %p50 = scmp.eq.s32.totalorder %s28, 1
      %p51 = por %p49, %p50
      %p53 = scmp.ne.s32.totalorder %s36, %s52
      %p54 = scmp.eq.s32.totalorder %s28, 0
      %p55 = por %p53, %p54
      %s57 = sadd.s32 %s56, 1
      %p60 = scmp.eq.s32.totalorder %s22, 1
      %p61 = scmp.ne.s32.totalorder %s56, %s58
      %p62 = scmp.eq.s32.totalorder %s22, 0
      %p63 = por %p61, %p62
      %p64 = scmp.ne.s32.totalorder %s56, %s58
      %p65 = scmp.eq.s32.totalorder %s27, 1
      %p66 = por %p64, %p65
      %p67 = scmp.ne.s32.totalorder %s58, %s59
      %p68 = scmp.eq.s32.totalorder %s27, 0
      %p69 = por %p67, %p68
      %p70 = scmp.ne.s32.totalorder %s58, %s59
      %p71 = scmp.eq.s32.totalorder %s28, 1
      %p72 = por %p70, %p71
      %p74 = scmp.ne.s32.totalorder %s59, %s73
      %p75 = scmp.eq.s32.totalorder %s28, 0
      %p76 = por %p74, %p75
      %s78 = sadd.s32 %s77, 1
      %p81 = scmp.eq.s32.totalorder %s22, 1
      %p82 = scmp.ne.s32.totalorder %s77, %s79
      %p83 = scmp.eq.s32.totalorder %s22, 0
      %p84 = por %p82, %p83
      %p85 = scmp.ne.s32.totalorder %s77, %s79
      %p86 = scmp.eq.s32.totalorder %s27, 1
      %p87 = por %p85, %p86
      %p88 = scmp.ne.s32.totalorder %s79, %s80
      %p89 = scmp.eq.s32.totalorder %s27, 0
      %p90 = por %p88, %p89
      %p91 = scmp.ne.s32.totalorder %s79, %s80
      %p92 = scmp.eq.s32.totalorder %s28, 1
      %p93 = por %p91, %p92
      %p95 = scmp.ne.s32.totalorder %s80, %s94
      %p96 = scmp.eq.s32.totalorder %s28, 0
      %p97 = por %p95, %p96
      %s99 = sadd.s32 %s98, 1
      %p102 = scmp.eq.s32.totalorder %s22, 1
      %p103 = scmp.ne.s32.totalorder %s98, %s100
      %p104 = scmp.eq.s32.totalorder %s22, 0
      %p105 = por %p103, %p104
      %p106 = scmp.ne.s32.totalorder %s98, %s100
      %p107 = scmp.eq.s32.totalorder %s27, 1
      %p108 = por %p106, %p107
      %p109 = scmp.ne.s32.totalorder %s100, %s101
      %p110 = scmp.eq.s32.totalorder %s27, 0
      %p111 = por %p109, %p110
      %p112 = scmp.ne.s32.totalorder %s100, %s101
      %p113 = scmp.eq.s32.totalorder %s28, 1
      %p114 = por %p112, %p113
      %p116 = scmp.ne.s32.totalorder %s101, %s115
      %p117 = scmp.eq.s32.totalorder %s28, 0
      %p118 = por %p116, %p117
      %s120 = sadd.s32 %s119, 1
      %p123 = scmp.eq.s32.totalorder %s22, 1
      %p124 = scmp.ne.s32.totalorder %s119, %s121
      %p125 = scmp.eq.s32.totalorder %s22, 0
      %p126 = por %p124, %p125
      %p127 = scmp.ne.s32.totalorder %s119, %s121
      %p128 = scmp.eq.s32.totalorder %s27, 1
      %p129 = por %p127, %p128
      %p130 = scmp.ne.s32.totalorder %s121, %s122
      %p131 = scmp.eq.s32.totalorder %s27, 0
      %p132 = por %p130, %p131
      %p133 = scmp.ne.s32.totalorder %s121, %s122
      %p134 = scmp.eq.s32.totalorder %s28, 1
      %p135 = por %p133, %p134
      %p137 = scmp.ne.s32.totalorder %s122, %s136
      %p138 = scmp.eq.s32.totalorder %s28, 0
      %p139 = por %p137, %p138
      %s141 = sadd.s32 %s140, 1
      %p144 = scmp.eq.s32.totalorder %s22, 1
      %p145 = scmp.ne.s32.totalorder %s140, %s142
      %p146 = scmp.eq.s32.totalorder %s22, 0
      %p147 = por %p145, %p146
      %p148 = scmp.ne.s32.totalorder %s140, %s142
      %p149 = scmp.eq.s32.totalorder %s27, 1
      %p150 = por %p148, %p149
      %p151 = scmp.ne.s32.totalorder %s142, %s143
      %p152 = scmp.eq.s32.totalorder %s27, 0
      %p153 = por %p151, %p152
      %p154 = scmp.ne.s32.totalorder %s142, %s143
      %p155 = scmp.eq.s32.totalorder %s28, 1
      %p156 = por %p154, %p155
      %p158 = scmp.ne.s32.totalorder %s143, %s157
      %p159 = scmp.eq.s32.totalorder %s28, 0
      %p160 = por %p158, %p159
      %s162 = sadd.s32 %s161, 1
      %p165 = scmp.eq.s32.totalorder %s22, 1
      %p166 = scmp.ne.s32.totalorder %s161, %s163
      %p167 = scmp.eq.s32.totalorder %s22, 0
      %p168 = por %p166, %p167
      %p169 = scmp.ne.s32.totalorder %s161, %s163
      %p170 = scmp.eq.s32.totalorder %s27, 1
      %p171 = por %p169, %p170
      %p172 = scmp.ne.s32.totalorder %s163, %s164
      %p173 = scmp.eq.s32.totalorder %s27, 0
      %p174 = por %p172, %p173
      %p175 = scmp.ne.s32.totalorder %s163, %s164
      %p176 = scmp.eq.s32.totalorder %s28, 1
      %p177 = por %p175, %p176
      %p179 = scmp.ne.s32.totalorder %s164, %s178
      %p180 = scmp.eq.s32.totalorder %s28, 0
      %p181 = por %p179, %p180
      %s183 = sadd.s32 %s182, 1
      %p186 = scmp.eq.s32.totalorder %s22, 1
      %p187 = scmp.ne.s32.totalorder %s182, %s184
      %p188 = scmp.eq.s32.totalorder %s22, 0
      %p189 = por %p187, %p188
      %p190 = scmp.ne.s32.totalorder %s182, %s184
      %p191 = scmp.eq.s32.totalorder %s27, 1
      %p192 = por %p190, %p191
      %p193 = scmp.ne.s32.totalorder %s184, %s185
      %p194 = scmp.eq.s32.totalorder %s27, 0
      %p195 = por %p193, %p194
      %p196 = scmp.ne.s32.totalorder %s184, %s185
      %p197 = scmp.eq.s32.totalorder %s28, 1
      %p198 = por %p196, %p197
      %p200 = scmp.ne.s32.totalorder %s185, %s199
      %p201 = scmp.eq.s32.totalorder %s28, 0
      %p202 = por %p200, %p201
      %s204 = sadd.s32 %s203, 1
      %p207 = scmp.eq.s32.totalorder %s22, 1
      %p208 = scmp.ne.s32.totalorder %s203, %s205
      %p209 = scmp.eq.s32.totalorder %s22, 0
      %p210 = por %p208, %p209
      %p211 = scmp.ne.s32.totalorder %s203, %s205
      %p212 = scmp.eq.s32.totalorder %s27, 1
      %p213 = por %p211, %p212
      %p214 = scmp.ne.s32.totalorder %s205, %s206
      %p215 = scmp.eq.s32.totalorder %s27, 0
      %p216 = por %p214, %p215
      %p217 = scmp.ne.s32.totalorder %s205, %s206
      %p218 = scmp.eq.s32.totalorder %s28, 1
      %p219 = por %p217, %p218
      %p221 = scmp.ne.s32.totalorder %s206, %s220
      %p222 = scmp.eq.s32.totalorder %s28, 0
      %p223 = por %p221, %p222
      %s225 = sadd.s32 %s224, 1
      %p228 = scmp.eq.s32.totalorder %s22, 1
      %p229 = scmp.ne.s32.totalorder %s224, %s226
      %p230 = scmp.eq.s32.totalorder %s22, 0
      %p231 = por %p229, %p230
      %p232 = scmp.ne.s32.totalorder %s224, %s226
      %p233 = scmp.eq.s32.totalorder %s27, 1
      %p234 = por %p232, %p233
      %p235 = scmp.ne.s32.totalorder %s226, %s227
      %p236 = scmp.eq.s32.totalorder %s27, 0
      %p237 = por %p235, %p236
      %p238 = scmp.ne.s32.totalorder %s226, %s227
      %p239 = scmp.eq.s32.totalorder %s28, 1
      %p240 = por %p238, %p239
      %p242 = scmp.ne.s32.totalorder %s227, %s241
      %p243 = scmp.eq.s32.totalorder %s28, 0
      %p244 = por %p242, %p243
      %s246 = sadd.s32 %s245, 1
      %p249 = scmp.eq.s32.totalorder %s22, 1
      %p250 = scmp.ne.s32.totalorder %s245, %s247
      %p251 = scmp.eq.s32.totalorder %s22, 0
      %p252 = por %p250, %p251
      %p253 = scmp.ne.s32.totalorder %s245, %s247
      %p254 = scmp.eq.s32.totalorder %s27, 1
      %p255 = por %p253, %p254
      %p256 = scmp.ne.s32.totalorder %s247, %s248
      %p257 = scmp.eq.s32.totalorder %s27, 0
      %p258 = por %p256, %p257
      %p259 = scmp.ne.s32.totalorder %s247, %s248
      %p260 = scmp.eq.s32.totalorder %s28, 1
      %p261 = por %p259, %p260
      %p263 = scmp.ne.s32.totalorder %s248, %s262
      %p264 = scmp.eq.s32.totalorder %s28, 0
      %p265 = por %p263, %p264
      %s267 = sadd.s32 %s266, 1
      %p270 = scmp.eq.s32.totalorder %s22, 1
      %p271 = scmp.ne.s32.totalorder %s266, %s268
      %p272 = scmp.eq.s32.totalorder %s22, 0
      %p273 = por %p271, %p272
      %p274 = scmp.ne.s32.totalorder %s266, %s268
      %p275 = scmp.eq.s32.totalorder %s27, 1
      %p276 = por %p274, %p275
      %p277 = scmp.ne.s32.totalorder %s268, %s269
      %p278 = scmp.eq.s32.totalorder %s27, 0
      %p279 = por %p277, %p278
      %p280 = scmp.ne.s32.totalorder %s268, %s269
      %p281 = scmp.eq.s32.totalorder %s28, 1
      %p282 = por %p280, %p281
      %p284 = scmp.ne.s32.totalorder %s269, %s283
      %p285 = scmp.eq.s32.totalorder %s28, 0
      %p286 = por %p284, %p285
      %s288 = sadd.s32 %s287, 1
      %p291 = scmp.eq.s32.totalorder %s22, 1
      %p292 = scmp.ne.s32.totalorder %s287, %s289
      %p293 = scmp.eq.s32.totalorder %s22, 0
      %p294 = por %p292, %p293
      %p295 = scmp.ne.s32.totalorder %s287, %s289
      %p296 = scmp.eq.s32.totalorder %s27, 1
      %p297 = por %p295, %p296
      %p298 = scmp.ne.s32.totalorder %s289, %s290
      %p299 = scmp.eq.s32.totalorder %s27, 0
      %p300 = por %p298, %p299
      %p301 = scmp.ne.s32.totalorder %s289, %s290
      %p302 = scmp.eq.s32.totalorder %s28, 1
      %p303 = por %p301, %p302
      %p305 = scmp.ne.s32.totalorder %s290, %s304
      %p306 = scmp.eq.s32.totalorder %s28, 0
      %p307 = por %p305, %p306
      %s308 = ssub.s32 %s22, %s29
      %p309 = scmp.eq.s32.totalorder %s308, 0
      %s311 = sadd.s32 %s310, 1
      %s312 = scalar_select %p309, %s310, %s311
      %p315 = pneg %p309
      %p316 = scmp.eq.s32.totalorder %s22, 1
      %p317 = por %p315, %p316
      %p318 = scmp.ne.s32.totalorder %s310, %s313
      %p319 = scmp.eq.s32.totalorder %s22, 0
      %p320 = por %p318, %p319
      %p321 = scmp.ne.s32.totalorder %s310, %s313
      %p322 = scmp.eq.s32.totalorder %s27, 1
      %p323 = por %p321, %p322
      %p324 = scmp.ne.s32.totalorder %s313, %s314
      %p325 = scmp.eq.s32.totalorder %s27, 0
      %p326 = por %p324, %p325
      %p327 = scmp.ne.s32.totalorder %s313, %s314
      %p328 = scmp.eq.s32.totalorder %s28, 1
      %p329 = por %p327, %p328
      %p331 = scmp.ne.s32.totalorder %s314, %s330
      %p332 = scmp.eq.s32.totalorder %s28, 0
      %p333 = por %p331, %p332
      %p334 = scmp.le.s32.totalorder 1, %s22
      %p335 = scmp.lt.s32.totalorder %s22, 3
      %p336 = pnand %p334, %p335
      %p337 = pneg %p336
      // Predicated region
      $region9: #{tpu_custom_call.1} parent=5 // pred_check
        _
      $region10: #{tpu_custom_call.1} parent=5 // pred_check_branch
        %339 = sbr.rel (%p336) target = $region12
      $region11: #{tpu_custom_call.1} parent=5 // pred_region
        %s340 = ssub.s32 %s22, 1
        // Predicated region
        $region13: #{tpu_custom_call.1} parent=11 // pred_check
          %p341 = pneg %p69
        $region14: #{tpu_custom_call.1} parent=11 // pred_check_branch
          %343 = sbr.rel (%p341) target = $region16
        $region15: #{tpu_custom_call.1} parent=11 // pred_region
          _
        $region16: #{tpu_custom_call.1} parent=11 // pred_fallthru
          _
        // Predicated region
        $region17: #{tpu_custom_call.1} parent=11 // pred_check
          %p344 = pneg %p90
        $region18: #{tpu_custom_call.1} parent=11 // pred_check_branch
          %346 = sbr.rel (%p344) target = $region20
        $region19: #{tpu_custom_call.1} parent=11 // pred_region
          _
        $region20: #{tpu_custom_call.1} parent=11 // pred_fallthru
          _
        // Predicated region
        $region21: #{tpu_custom_call.1} parent=11 // pred_check
          %p347 = pneg %p111
        $region22: #{tpu_custom_call.1} parent=11 // pred_check_branch
          %349 = sbr.rel (%p347) target = $region24
        $region23: #{tpu_custom_call.1} parent=11 // pred_region
          _
        $region24: #{tpu_custom_call.1} parent=11 // pred_fallthru
          _
        // Predicated region
        $region25: #{tpu_custom_call.1} parent=11 // pred_check
          %p350 = pneg %p132
        $region26: #{tpu_custom_call.1} parent=11 // pred_check_branch
          %352 = sbr.rel (%p350) target = $region28
        $region27: #{tpu_custom_call.1} parent=11 // pred_region
          _
        $region28: #{tpu_custom_call.1} parent=11 // pred_fallthru
          _
        // Predicated region
        $region29: #{tpu_custom_call.1} parent=11 // pred_check
          %p353 = pneg %p153
        $region30: #{tpu_custom_call.1} parent=11 // pred_check_branch
          %355 = sbr.rel (%p353) target = $region32
        $region31: #{tpu_custom_call.1} parent=11 // pred_region
          _
        $region32: #{tpu_custom_call.1} parent=11 // pred_fallthru
          _
        // Predicated region
        $region33: #{tpu_custom_call.1} parent=11 // pred_check
          %p356 = pneg %p174
        $region34: #{tpu_custom_call.1} parent=11 // pred_check_branch
          %358 = sbr.rel (%p356) target = $region36
        $region35: #{tpu_custom_call.1} parent=11 // pred_region
          _
        $region36: #{tpu_custom_call.1} parent=11 // pred_fallthru
          _
        // Predicated region
        $region37: #{tpu_custom_call.1} parent=11 // pred_check
          %p359 = pneg %p195
        $region38: #{tpu_custom_call.1} parent=11 // pred_check_branch
          %361 = sbr.rel (%p359) target = $region40
        $region39: #{tpu_custom_call.1} parent=11 // pred_region
          _
        $region40: #{tpu_custom_call.1} parent=11 // pred_fallthru
          _
        // Predicated region
        $region41: #{tpu_custom_call.1} parent=11 // pred_check
          %p362 = pneg %p216
        $region42: #{tpu_custom_call.1} parent=11 // pred_check_branch
          %364 = sbr.rel (%p362) target = $region44
        $region43: #{tpu_custom_call.1} parent=11 // pred_region
          _
        $region44: #{tpu_custom_call.1} parent=11 // pred_fallthru
          _
        // Predicated region
        $region45: #{tpu_custom_call.1} parent=11 // pred_check
          %p365 = pneg %p237
        $region46: #{tpu_custom_call.1} parent=11 // pred_check_branch
          %367 = sbr.rel (%p365) target = $region48
        $region47: #{tpu_custom_call.1} parent=11 // pred_region
          _
        $region48: #{tpu_custom_call.1} parent=11 // pred_fallthru
          _
        // Predicated region
        $region49: #{tpu_custom_call.1} parent=11 // pred_check
          %p368 = pneg %p258
        $region50: #{tpu_custom_call.1} parent=11 // pred_check_branch
          %370 = sbr.rel (%p368) target = $region52
        $region51: #{tpu_custom_call.1} parent=11 // pred_region
          _
        $region52: #{tpu_custom_call.1} parent=11 // pred_fallthru
          _
        // Predicated region
        $region53: #{tpu_custom_call.1} parent=11 // pred_check
          %p371 = pneg %p279
        $region54: #{tpu_custom_call.1} parent=11 // pred_check_branch
          %373 = sbr.rel (%p371) target = $region56
        $region55: #{tpu_custom_call.1} parent=11 // pred_region
          _
        $region56: #{tpu_custom_call.1} parent=11 // pred_fallthru
          _
        // Predicated region
        $region57: #{tpu_custom_call.1} parent=11 // pred_check
          %p374 = pneg %p300
        $region58: #{tpu_custom_call.1} parent=11 // pred_check_branch
          %376 = sbr.rel (%p374) target = $region60
        $region59: #{tpu_custom_call.1} parent=11 // pred_region
          _
        $region60: #{tpu_custom_call.1} parent=11 // pred_fallthru
          _
      $region12: #{tpu_custom_call.1} parent=5 // pred_fallthru
        _
      %p377 = scmp.lt.s32.totalorder %s22, 2
      // Predicated region
      $region61: #{tpu_custom_call.1} parent=5 // pred_check
        %p378 = pneg %p377
      $region62: #{tpu_custom_call.1} parent=5 // pred_check_branch
        %380 = sbr.rel (%p378) target = $region64
      $region63: #{tpu_custom_call.1} parent=5 // pred_region
        // Predicated region
        $region65: #{tpu_custom_call.1} parent=63 // pred_check
          %p381 = pneg %p42
        $region66: #{tpu_custom_call.1} parent=63 // pred_check_branch
          %383 = sbr.rel (%p381) target = $region68
        $region67: #{tpu_custom_call.1} parent=63 // pred_region
          %p384 = scmp.lt.s32.totalorder %s22, 1
          %s385 = scalar_select %p384, %s22, 1
          %s386 = smul.addr %s385, 32
          %s387 = smul.addr %s386, 4
          %s388 = scalar_lea.vmem %s0, %s387
        $region68: #{tpu_custom_call.1} parent=63 // pred_fallthru
          _
      $region64: #{tpu_custom_call.1} parent=5 // pred_fallthru
        _
      %p389 = scmp.le.s32.totalorder 1, %s22
      %p390 = scmp.lt.s32.totalorder %s22, 3
      %p391 = pnand %p389, %p390
      %p392 = pneg %p391
      // Predicated region
      $region69: #{tpu_custom_call.1} parent=5 // pred_check
        _
      $region70: #{tpu_custom_call.1} parent=5 // pred_check_branch
        %394 = sbr.rel (%p391) target = $region72
      $region71: #{tpu_custom_call.1} parent=5 // pred_region
        %s395 = ssub.s32 %s22, 1
        %p396 = scmp.lt.s32.totalorder %s27, 1
        %s397 = scalar_select %p396, %s27, 1
        %s398 = smul.addr %s397, 32
        %s399 = smul.addr %s398, 4
        %s400 = scalar_lea.vmem %s0, %s399
        %p401 = pneg %p48
        %p402 = pneg %p45
        %p403 = pneg %p69
        %p404 = pneg %p66
        %p405 = pneg %p90
        %p406 = pneg %p87
        %p407 = pneg %p111
        %p408 = pneg %p108
        %p409 = pneg %p132
        %p410 = pneg %p129
        %p411 = pneg %p153
        %p412 = pneg %p150
        %p413 = pneg %p174
        %p414 = pneg %p171
        %p415 = pneg %p195
        %p416 = pneg %p192
        %p417 = pneg %p216
        %p418 = pneg %p213
        %p419 = pneg %p237
        %p420 = pneg %p234
        %p421 = pneg %p258
        %p422 = pneg %p255
        %p423 = pneg %p279
        %p424 = pneg %p276
        %p425 = pneg %p300
        %p426 = pneg %p297
        %p427 = pneg %p326
        %p428 = pneg %p323
        %s429 = sand.u32 %s313, 1
        %s430 = scalar_lea.sflag [#allocation5], %s429
        %s431 = sand.u32 %s313, 1
        %s432 = smul.addr %s431, 16
        %s433 = scalar_lea.vmem [#allocation4], %s432
        %p434 = scmp.lt.s32.totalorder %s27, 1
        %s435 = scalar_select %p434, %s27, 1
        %s436 = smul.addr %s435, 32
        %s437 = smul.addr %s436, 4
        %s438 = scalar_lea.vmem %s0, %s437
        %v440 = vld [vmem:[%s438] sm:$0xf]
        %v441 = vld [vmem:[%s438 + $0x4] sm:$0xf]
        %v442 = vld [vmem:[%s438 + $0x8] sm:$0xf]
        %v443 = vld [vmem:[%s438 + $0xc] sm:$0xf]
        %v444 = vld [vmem:[%s438 + $0x10] sm:$0xf]
        %v445 = vld [vmem:[%s438 + $0x14] sm:$0xf]
        %v446 = vld [vmem:[%s438 + $0x18] sm:$0xf]
        %v447 = vld [vmem:[%s438 + $0x1c] sm:$0xf]
        %v448 = vld [vmem:[%s438 + $0x20] sm:$0xf]
        %v449 = vld [vmem:[%s438 + $0x24] sm:$0xf]
        %v450 = vld [vmem:[%s438 + $0x28] sm:$0xf]
        %v451 = vld [vmem:[%s438 + $0x2c] sm:$0xf]
        %v452 = vld [vmem:[%s438 + $0x30] sm:$0xf]
        %v453 = vld [vmem:[%s438 + $0x34] sm:$0xf]
        %v454 = vld [vmem:[%s438 + $0x38] sm:$0xf]
        %v455 = vld [vmem:[%s438 + $0x3c] sm:$0xf]
        %v456 = vld [vmem:[%s438 + $0x40] sm:$0xf]
        %v457 = vld [vmem:[%s438 + $0x44] sm:$0xf]
        %v458 = vld [vmem:[%s438 + $0x48] sm:$0xf]
        %v459 = vld [vmem:[%s438 + $0x4c] sm:$0xf]
        %v460 = vld [vmem:[%s438 + $0x50] sm:$0xf]
        %v461 = vld [vmem:[%s438 + $0x54] sm:$0xf]
        %v462 = vld [vmem:[%s438 + $0x58] sm:$0xf]
        %v463 = vld [vmem:[%s438 + $0x5c] sm:$0xf]
        %v464 = vld [vmem:[%s438 + $0x60] sm:$0xf]
        %v465 = vld [vmem:[%s438 + $0x64] sm:$0xf]
        %v466 = vld [vmem:[%s438 + $0x68] sm:$0xf]
        %v467 = vld [vmem:[%s438 + $0x6c] sm:$0xf]
        %v468 = vld [vmem:[%s438 + $0x70] sm:$0xf]
        %v469 = vld [vmem:[%s438 + $0x74] sm:$0xf]
        %v470 = vld [vmem:[%s438 + $0x78] sm:$0xf]
        %v471 = vld [vmem:[%s438 + $0x7c] sm:$0xf]
        %v472 = vld [vmem:[%s1] sm:$0xf]
        %v473 = vld [vmem:[%s1 + $0x4] sm:$0xf]
        %v474 = vld [vmem:[%s1 + $0x8] sm:$0xf]
        %v475 = vld [vmem:[%s1 + $0xc] sm:$0xf]
        %v476 = vld [vmem:[%s1 + $0x10] sm:$0x3]
        %v509 = vunpack.c.l.b16 %v440
        %v510 = vunpack.c.l.b16 %v441
        %v511 = vunpack.c.l.b16 %v442
        %v512 = vunpack.c.l.b16 %v443
        %v513 = vunpack.c.l.b16 %v444
        %v514 = vunpack.c.l.b16 %v445
        %v515 = vunpack.c.l.b16 %v446
        %v516 = vunpack.c.l.b16 %v447
        %v517 = vunpack.c.l.b16 %v448
        %v518 = vunpack.c.l.b16 %v449
        %v519 = vunpack.c.l.b16 %v450
        %v520 = vunpack.c.l.b16 %v451
        %v521 = vunpack.c.l.b16 %v452
        %v522 = vunpack.c.l.b16 %v453
        %v523 = vunpack.c.l.b16 %v454
        %v524 = vunpack.c.l.b16 %v455
        %v525 = vunpack.c.l.b16 %v456
        %v526 = vunpack.c.l.b16 %v457
        %v527 = vunpack.c.l.b16 %v458
        %v528 = vunpack.c.l.b16 %v459
        %v529 = vunpack.c.l.b16 %v460
        %v530 = vunpack.c.l.b16 %v461
        %v531 = vunpack.c.l.b16 %v462
        %v532 = vunpack.c.l.b16 %v463
        %v533 = vunpack.c.l.b16 %v464
        %v534 = vunpack.c.l.b16 %v465
        %v535 = vunpack.c.l.b16 %v466
        %v536 = vunpack.c.l.b16 %v467
        %v537 = vunpack.c.l.b16 %v468
        %v538 = vunpack.c.l.b16 %v469
        %v539 = vunpack.c.l.b16 %v470
        %v540 = vunpack.c.l.b16 %v471
        %v541 = vpack.c.b16 %v510, %v509
        %v542 = vpack.c.b16 %v512, %v511
        %v543 = vpack.c.b16 %v514, %v513
        %v544 = vpack.c.b16 %v516, %v515
        %v545 = vpack.c.b16 %v518, %v517
        %v546 = vpack.c.b16 %v520, %v519
        %v547 = vpack.c.b16 %v522, %v521
        %v548 = vpack.c.b16 %v524, %v523
        %v549 = vpack.c.b16 %v526, %v525
        %v550 = vpack.c.b16 %v528, %v527
        %v551 = vpack.c.b16 %v530, %v529
        %v552 = vpack.c.b16 %v532, %v531
        %v553 = vpack.c.b16 %v534, %v533
        %v554 = vpack.c.b16 %v536, %v535
        %v555 = vpack.c.b16 %v538, %v537
        %v556 = vpack.c.b16 %v540, %v539
        %v562 = vunpack.c.l.b16 %v472
        %v563 = vunpack.c.l.b16 %v473
        %v564 = vunpack.c.l.b16 %v474
        %v565 = vunpack.c.l.b16 %v475
        %v566 = vunpack.c.l.b16 %v476
        %v567 = vpack.c.b16 %v563, %v562
        %v568 = vpack.c.b16 %v565, %v564
        %v569 = vpack.c.b16 %v566, %v566
        %vm572 = vcmask 293888
        %v574 = vsel %vm572, %v541, 0
        %v577 = vsel %vm572, %v542, 0
        %v580 = vsel %vm572, %v543, 0
        %v583 = vsel %vm572, %v544, 0
        %v586 = vsel %vm572, %v545, 0
        %v589 = vsel %vm572, %v546, 0
        %v592 = vsel %vm572, %v547, 0
        %v595 = vsel %vm572, %v548, 0
        %v598 = vsel %vm572, %v549, 0
        %v601 = vsel %vm572, %v550, 0
        %v604 = vsel %vm572, %v551, 0
        %v607 = vsel %vm572, %v552, 0
        %v610 = vsel %vm572, %v553, 0
        %v613 = vsel %vm572, %v554, 0
        %v616 = vsel %vm572, %v555, 0
        %v619 = vsel %vm572, %v556, 0
        %vm621 = vcmask 1041408
        %v623 = vsel %vm621, %v569, 0
        %625 = vmatprep.subr.bf16.mxu0 0
        %626 = vmatpush1.bf16.msra.mxu0 0
        %627 = vmatprep.subr.bf16.mxu0 0
        %628 = vmatpush1.bf16.msra.mxu0 0
        %629 = vmatprep.subr.bf16.mxu0 0
        %630 = vmatpush1.bf16.msra.mxu0 0
        %631 = vmatprep.subr.bf16.mxu0 0
        %632 = vmatpush1.bf16.msra.mxu0 0
        %633 = vmatprep.subr.bf16.mxu0 0
        %634 = vmatpush1.bf16.msra.mxu0 0
        %635 = vmatprep.subr.bf16.mxu0 0
        %636 = vmatpush1.bf16.msra.mxu0 %v623
        %637 = vmatprep.subr.bf16.mxu0 0
        %638 = vmatpush1.bf16.msra.mxu0 %v568
        %639 = vmatprep.subr.bf16.mxu0 0
        %640 = vmatpush1.bf16.msra.mxu0 %v567
        %641 = vmatprep.subr.bf16.mxu0 0
        %642 = vmatpush2.bf16.msra.mxu0 0
        %643 = vmatprep.subr.bf16.mxu0 0
        %644 = vmatpush2.bf16.msra.mxu0 0
        %645 = vmatprep.subr.bf16.mxu0 0
        %646 = vmatpush2.bf16.msra.mxu0 0
        %647 = vmatprep.subr.bf16.mxu0 0
        %648 = vmatpush2.bf16.msra.mxu0 0
        %649 = vmatprep.subr.bf16.mxu0 0
        %650 = vmatpush2.bf16.msra.mxu0 0
        %651 = vmatprep.subr.bf16.mxu0 0
        %652 = vmatpush2.bf16.msra.mxu0 0
        %653 = vmatprep.subr.bf16.mxu0 0
        %654 = vmatpush2.bf16.msra.mxu0 0
        %655 = vmatprep.subr.bf16.mxu0 0
        %656 = vmatpush2.bf16.msra.mxu0 0
        %657 = vmatprep.mubr.bf16.mxu0 0
        %658 = vmatmul.mubr.bf16.gmra.mxu0 %v574
        %v659 = vpop.f32.mrf.mxu0
        %v660 = vadd.f32 0.0, %v659
        %v661 = vpop.f32.mrf.mxu0
        %v662 = vpop.f32.mrf.mxu0
        %v663 = vadd.f32 0.0, %v662
        %v664 = vpop.f32.mrf.mxu0
        %665 = vmatprep.mubr.bf16.mxu0 0
        %666 = vmatmul.mubr.bf16.gmra.mxu0 %v577
        %v667 = vpop.f32.mrf.mxu0
        %v668 = vadd.f32 0.0, %v667
        %v669 = vpop.f32.mrf.mxu0
        %v670 = vpop.f32.mrf.mxu0
        %v671 = vadd.f32 0.0, %v670
        %v672 = vpop.f32.mrf.mxu0
        %673 = vmatprep.mubr.bf16.mxu0 0
        %674 = vmatmul.mubr.bf16.gmra.mxu0 %v580
        %v675 = vpop.f32.mrf.mxu0
        %v676 = vadd.f32 0.0, %v675
        %v677 = vpop.f32.mrf.mxu0
        %v678 = vpop.f32.mrf.mxu0
        %v679 = vadd.f32 0.0, %v678
        %v680 = vpop.f32.mrf.mxu0
        %681 = vmatprep.mubr.bf16.mxu0 0
        %682 = vmatmul.mubr.bf16.gmra.mxu0 %v583
        %v683 = vpop.f32.mrf.mxu0
        %v684 = vadd.f32 0.0, %v683
        %v685 = vpop.f32.mrf.mxu0
        %v686 = vpop.f32.mrf.mxu0
        %v687 = vadd.f32 0.0, %v686
        %v688 = vpop.f32.mrf.mxu0
        %689 = vmatprep.mubr.bf16.mxu0 0
        %690 = vmatmul.mubr.bf16.gmra.mxu0 %v586
        %v691 = vpop.f32.mrf.mxu0
        %v692 = vadd.f32 0.0, %v691
        %v693 = vpop.f32.mrf.mxu0
        %v694 = vpop.f32.mrf.mxu0
        %v695 = vadd.f32 0.0, %v694
        %v696 = vpop.f32.mrf.mxu0
        %697 = vmatprep.mubr.bf16.mxu0 0
        %698 = vmatmul.mubr.bf16.gmra.mxu0 %v589
        %v699 = vpop.f32.mrf.mxu0
        %v700 = vadd.f32 0.0, %v699
        %v701 = vpop.f32.mrf.mxu0
        %v702 = vpop.f32.mrf.mxu0
        %v703 = vadd.f32 0.0, %v702
        %v704 = vpop.f32.mrf.mxu0
        %705 = vmatprep.mubr.bf16.mxu0 0
        %706 = vmatmul.mubr.bf16.gmra.mxu0 %v592
        %v707 = vpop.f32.mrf.mxu0
        %v708 = vadd.f32 0.0, %v707
        %v709 = vpop.f32.mrf.mxu0
        %v710 = vpop.f32.mrf.mxu0
        %v711 = vadd.f32 0.0, %v710
        %v712 = vpop.f32.mrf.mxu0
        %713 = vmatprep.mubr.bf16.mxu0 0
        %714 = vmatmul.mubr.bf16.gmra.mxu0 %v595
        %v715 = vpop.f32.mrf.mxu0
        %v716 = vadd.f32 0.0, %v715
        %v717 = vpop.f32.mrf.mxu0
        %v718 = vpop.f32.mrf.mxu0
        %v719 = vadd.f32 0.0, %v718
        %v720 = vpop.f32.mrf.mxu0
        %721 = vmatprep.mubr.bf16.mxu0 0
        %722 = vmatmul.mubr.bf16.gmra.mxu0 %v598
        %v723 = vpop.f32.mrf.mxu0
        %v724 = vadd.f32 0.0, %v723
        %v725 = vpop.f32.mrf.mxu0
        %v726 = vpop.f32.mrf.mxu0
        %v727 = vadd.f32 0.0, %v726
        %v728 = vpop.f32.mrf.mxu0
        %729 = vmatprep.mubr.bf16.mxu0 0
        %730 = vmatmul.mubr.bf16.gmra.mxu0 %v601
        %v731 = vpop.f32.mrf.mxu0
        %v732 = vadd.f32 0.0, %v731
        %v733 = vpop.f32.mrf.mxu0
        %v734 = vpop.f32.mrf.mxu0
        %v735 = vadd.f32 0.0, %v734
        %v736 = vpop.f32.mrf.mxu0
        %737 = vmatprep.mubr.bf16.mxu0 0
        %738 = vmatmul.mubr.bf16.gmra.mxu0 %v604
        %v739 = vpop.f32.mrf.mxu0
        %v740 = vadd.f32 0.0, %v739
        %v741 = vpop.f32.mrf.mxu0
        %v742 = vpop.f32.mrf.mxu0
        %v743 = vadd.f32 0.0, %v742
        %v744 = vpop.f32.mrf.mxu0
        %745 = vmatprep.mubr.bf16.mxu0 0
        %746 = vmatmul.mubr.bf16.gmra.mxu0 %v607
        %v747 = vpop.f32.mrf.mxu0
        %v748 = vadd.f32 0.0, %v747
        %v749 = vpop.f32.mrf.mxu0
        %v750 = vpop.f32.mrf.mxu0
        %v751 = vadd.f32 0.0, %v750
        %v752 = vpop.f32.mrf.mxu0
        %753 = vmatprep.mubr.bf16.mxu0 0
        %754 = vmatmul.mubr.bf16.gmra.mxu0 %v610
        %v755 = vpop.f32.mrf.mxu0
        %v756 = vadd.f32 0.0, %v755
        %v757 = vpop.f32.mrf.mxu0
        %v758 = vpop.f32.mrf.mxu0
        %v759 = vadd.f32 0.0, %v758
        %v760 = vpop.f32.mrf.mxu0
        %761 = vmatprep.mubr.bf16.mxu0 0
        %762 = vmatmul.mubr.bf16.gmra.mxu0 %v613
        %v763 = vpop.f32.mrf.mxu0
        %v764 = vadd.f32 0.0, %v763
        %v765 = vpop.f32.mrf.mxu0
        %v766 = vpop.f32.mrf.mxu0
        %v767 = vadd.f32 0.0, %v766
        %v768 = vpop.f32.mrf.mxu0
        %769 = vmatprep.mubr.bf16.mxu0 0
        %770 = vmatmul.mubr.bf16.gmra.mxu0 %v616
        %v771 = vpop.f32.mrf.mxu0
        %v772 = vadd.f32 0.0, %v771
        %v773 = vpop.f32.mrf.mxu0
        %v774 = vpop.f32.mrf.mxu0
        %v775 = vadd.f32 0.0, %v774
        %v776 = vpop.f32.mrf.mxu0
        %777 = vmatprep.mubr.bf16.mxu0 0
        %778 = vmatmul.mubr.bf16.gmra.mxu0 %v619
        %v779 = vpop.f32.mrf.mxu0
        %v780 = vadd.f32 0.0, %v779
        %v781 = vpop.f32.mrf.mxu0
        %v782 = vpop.f32.mrf.mxu0
        %v783 = vadd.f32 0.0, %v782
        %v784 = vpop.f32.mrf.mxu0
        %785 = vdwg.mxu0
        %v786 = vld [vmem:[%s2] sm:$0x1]
        %v788 = vlaneseq
        %v789 = vshrl.u32 %v788, 7
        %v790 = vsub.s32 0, %v789
        %v791 = vrot.slane %v786, %v790
        %v793 = vmul.f32 %v660, %v791
        %v794 = vmul.f32 %v663, %v791
        %v795 = vmul.f32 %v668, %v791
        %v796 = vmul.f32 %v671, %v791
        %v797 = vmul.f32 %v676, %v791
        %v798 = vmul.f32 %v679, %v791
        %v799 = vmul.f32 %v684, %v791
        %v800 = vmul.f32 %v687, %v791
        %v801 = vmul.f32 %v692, %v791
        %v802 = vmul.f32 %v695, %v791
        %v803 = vmul.f32 %v700, %v791
        %v804 = vmul.f32 %v703, %v791
        %v805 = vmul.f32 %v708, %v791
        %v806 = vmul.f32 %v711, %v791
        %v807 = vmul.f32 %v716, %v791
        %v808 = vmul.f32 %v719, %v791
        %v809 = vmul.f32 %v724, %v791
        %v810 = vmul.f32 %v727, %v791
        %v811 = vmul.f32 %v732, %v791
        %v812 = vmul.f32 %v735, %v791
        %v813 = vmul.f32 %v740, %v791
        %v814 = vmul.f32 %v743, %v791
        %v815 = vmul.f32 %v748, %v791
        %v816 = vmul.f32 %v751, %v791
        %v817 = vmul.f32 %v756, %v791
        %v818 = vmul.f32 %v759, %v791
        %v819 = vmul.f32 %v764, %v791
        %v820 = vmul.f32 %v767, %v791
        %v821 = vmul.f32 %v772, %v791
        %v822 = vmul.f32 %v775, %v791
        %v823 = vmul.f32 %v780, %v791
        %v824 = vmul.f32 %v783, %v791
        %v825 = vld [vmem:[%s3] sm:$0x1]
        %v827 = vlaneseq
        %v828 = vshrl.u32 %v827, 7
        %v829 = vsub.s32 0, %v828
        %v830 = vrot.slane %v825, %v829
        %v832 = vadd.f32 %v793, %v830
        %v833 = vadd.f32 %v794, %v830
        %v834 = vadd.f32 %v795, %v830
        %v835 = vadd.f32 %v796, %v830
        %v836 = vadd.f32 %v797, %v830
        %v837 = vadd.f32 %v798, %v830
        %v838 = vadd.f32 %v799, %v830
        %v839 = vadd.f32 %v800, %v830
        %v840 = vadd.f32 %v801, %v830
        %v841 = vadd.f32 %v802, %v830
        %v842 = vadd.f32 %v803, %v830
        %v843 = vadd.f32 %v804, %v830
        %v844 = vadd.f32 %v805, %v830
        %v845 = vadd.f32 %v806, %v830
        %v846 = vadd.f32 %v807, %v830
        %v847 = vadd.f32 %v808, %v830
        %v848 = vadd.f32 %v809, %v830
        %v849 = vadd.f32 %v810, %v830
        %v850 = vadd.f32 %v811, %v830
        %v851 = vadd.f32 %v812, %v830
        %v852 = vadd.f32 %v813, %v830
        %v853 = vadd.f32 %v814, %v830
        %v854 = vadd.f32 %v815, %v830
        %v855 = vadd.f32 %v816, %v830
        %v856 = vadd.f32 %v817, %v830
        %v857 = vadd.f32 %v818, %v830
        %v858 = vadd.f32 %v819, %v830
        %v859 = vadd.f32 %v820, %v830
        %v860 = vadd.f32 %v821, %v830
        %v861 = vadd.f32 %v822, %v830
        %v862 = vadd.f32 %v823, %v830
        %v863 = vadd.f32 %v824, %v830
        %v864 = vmax.f32 %v832, 0.0
        %v865 = vmax.f32 %v833, 0.0
        %v866 = vmax.f32 %v834, 0.0
        %v867 = vmax.f32 %v835, 0.0
        %v868 = vmax.f32 %v836, 0.0
        %v869 = vmax.f32 %v837, 0.0
        %v870 = vmax.f32 %v838, 0.0
        %v871 = vmax.f32 %v839, 0.0
        %v872 = vmax.f32 %v840, 0.0
        %v873 = vmax.f32 %v841, 0.0
        %v874 = vmax.f32 %v842, 0.0
        %v875 = vmax.f32 %v843, 0.0
        %v876 = vmax.f32 %v844, 0.0
        %v877 = vmax.f32 %v845, 0.0
        %v878 = vmax.f32 %v846, 0.0
        %v879 = vmax.f32 %v847, 0.0
        %v880 = vmax.f32 %v848, 0.0
        %v881 = vmax.f32 %v849, 0.0
        %v882 = vmax.f32 %v850, 0.0
        %v883 = vmax.f32 %v851, 0.0
        %v884 = vmax.f32 %v852, 0.0
        %v885 = vmax.f32 %v853, 0.0
        %v886 = vmax.f32 %v854, 0.0
        %v887 = vmax.f32 %v855, 0.0
        %v888 = vmax.f32 %v856, 0.0
        %v889 = vmax.f32 %v857, 0.0
        %v890 = vmax.f32 %v858, 0.0
        %v891 = vmax.f32 %v859, 0.0
        %v892 = vmax.f32 %v860, 0.0
        %v893 = vmax.f32 %v861, 0.0
        %v894 = vmax.f32 %v862, 0.0
        %v895 = vmax.f32 %v863, 0.0
        %v896 = vpack.c.bf16 %v865, %v864
        %v897 = vpack.c.bf16 %v867, %v866
        %v898 = vpack.c.bf16 %v869, %v868
        %v899 = vpack.c.bf16 %v871, %v870
        %v900 = vpack.c.bf16 %v873, %v872
        %v901 = vpack.c.bf16 %v875, %v874
        %v902 = vpack.c.bf16 %v877, %v876
        %v903 = vpack.c.bf16 %v879, %v878
        %v904 = vpack.c.bf16 %v881, %v880
        %v905 = vpack.c.bf16 %v883, %v882
        %v906 = vpack.c.bf16 %v885, %v884
        %v907 = vpack.c.bf16 %v887, %v886
        %v908 = vpack.c.bf16 %v889, %v888
        %v909 = vpack.c.bf16 %v891, %v890
        %v910 = vpack.c.bf16 %v893, %v892
        %v911 = vpack.c.bf16 %v895, %v894
        %vm912 = vcmask 257024
        %913 = vst.msk [vmem:[#allocation2] sm:$0xf] %vm912, 0
        %914 = vst.msk [vmem:[#allocation2 + $0x4] sm:$0xf] %vm912, 0
        %vm915 = vcmask 253952
        %916 = vst.msk [vmem:[#allocation2 + $0x8] sm:$0x1] %vm915, 0
        %s917 = scalar_lea.vmem [#allocation2], 204
        %918 = vst.msk [vmem:[%s917] sm:$0xf] %vm912, 0
        %919 = vst.msk [vmem:[%s917 + $0x4] sm:$0xf] %vm912, 0
        %920 = vst.msk [vmem:[%s917 + $0x8] sm:$0x1] %vm915, 0
        %v922 = vshrl.u32 %v896, 16
        %v924 = vrot.slane %v922, 7
        %v925 = vshll.u32 %v896, 16
        %v927 = vor.u32 %v924, %v925
        %v929 = vshrl.u32 %v897, 16
        %v931 = vrot.slane %v929, 7
        %v932 = vshll.u32 %v897, 16
        %v934 = vor.u32 %v931, %v932
        %v936 = vshrl.u32 %v898, 16
        %v938 = vrot.slane %v936, 7
        %v939 = vshll.u32 %v898, 16
        %v941 = vor.u32 %v938, %v939
        %v943 = vshrl.u32 %v899, 16
        %v945 = vrot.slane %v943, 7
        %v946 = vshll.u32 %v899, 16
        %v948 = vor.u32 %v945, %v946
        %v950 = vshrl.u32 %v900, 16
        %v952 = vrot.slane %v950, 7
        %v953 = vshll.u32 %v900, 16
        %v955 = vor.u32 %v952, %v953
        %v957 = vshrl.u32 %v901, 16
        %v959 = vrot.slane %v957, 7
        %v960 = vshll.u32 %v901, 16
        %v962 = vor.u32 %v959, %v960
        %v964 = vshrl.u32 %v902, 16
        %v966 = vrot.slane %v964, 7
        %v967 = vshll.u32 %v902, 16
        %v969 = vor.u32 %v966, %v967
        %v971 = vshrl.u32 %v903, 16
        %v973 = vrot.slane %v971, 7
        %v974 = vshll.u32 %v903, 16
        %v976 = vor.u32 %v973, %v974
        %v978 = vshrl.u32 %v904, 16
        %v980 = vrot.slane %v978, 7
        %v981 = vshll.u32 %v904, 16
        %v983 = vor.u32 %v980, %v981
        %v985 = vshrl.u32 %v905, 16
        %v987 = vrot.slane %v985, 7
        %v988 = vshll.u32 %v905, 16
        %v990 = vor.u32 %v987, %v988
        %v992 = vshrl.u32 %v906, 16
        %v994 = vrot.slane %v992, 7
        %v995 = vshll.u32 %v906, 16
        %v997 = vor.u32 %v994, %v995
        %v999 = vshrl.u32 %v907, 16
        %v1001 = vrot.slane %v999, 7
        %v1002 = vshll.u32 %v907, 16
        %v1004 = vor.u32 %v1001, %v1002
        %v1006 = vshrl.u32 %v908, 16
        %v1008 = vrot.slane %v1006, 7
        %v1009 = vshll.u32 %v908, 16
        %v1011 = vor.u32 %v1008, %v1009
        %v1013 = vshrl.u32 %v909, 16
        %v1015 = vrot.slane %v1013, 7
        %v1016 = vshll.u32 %v909, 16
        %v1018 = vor.u32 %v1015, %v1016
        %v1020 = vshrl.u32 %v910, 16
        %v1022 = vrot.slane %v1020, 7
        %v1023 = vshll.u32 %v910, 16
        %v1025 = vor.u32 %v1022, %v1023
        %v1027 = vshrl.u32 %v911, 16
        %v1029 = vrot.slane %v1027, 7
        %v1030 = vshll.u32 %v911, 16
        %v1032 = vor.u32 %v1029, %v1030
        %vm1065 = vcmask 1040384
        %vm1066 = vsmask.f32 256
        %vm1067 = vmand %vm1065, %vm1066
        %v1068 = vsel %vm1067, 0, %v927
        %v1069 = vsel %vm1067, 0, %v934
        %v1070 = vsel %vm1067, 0, %v941
        %v1071 = vsel %vm1067, 0, %v948
        %v1072 = vsel %vm1067, 0, %v955
        %v1073 = vsel %vm1067, 0, %v962
        %v1074 = vsel %vm1067, 0, %v969
        %v1075 = vsel %vm1067, 0, %v976
        %v1076 = vsel %vm1067, 0, %v983
        %v1077 = vsel %vm1067, 0, %v990
        %v1078 = vsel %vm1067, 0, %v997
        %v1079 = vsel %vm1067, 0, %v1004
        %v1080 = vsel %vm1067, 0, %v1011
        %v1081 = vsel %vm1067, 0, %v1018
        %v1082 = vsel %vm1067, 0, %v1025
        %v1083 = vsel %vm1067, 0, %v1032
        %v1084 = vsel %vm1067, %v924, 0
        %v1085 = vsel %vm1067, %v931, 0
        %v1086 = vsel %vm1067, %v938, 0
        %v1087 = vsel %vm1067, %v945, 0
        %v1088 = vsel %vm1067, %v952, 0
        %v1089 = vsel %vm1067, %v959, 0
        %v1090 = vsel %vm1067, %v966, 0
        %v1091 = vsel %vm1067, %v973, 0
        %v1092 = vsel %vm1067, %v980, 0
        %v1093 = vsel %vm1067, %v987, 0
        %v1094 = vsel %vm1067, %v994, 0
        %v1095 = vsel %vm1067, %v1001, 0
        %v1096 = vsel %vm1067, %v1008, 0
        %v1097 = vsel %vm1067, %v1015, 0
        %v1098 = vsel %vm1067, %v1022, 0
        %v1099 = vsel %vm1067, %v1029, 0
        %v1132 = vunpack.c.l.b16 %v1068
        %v1133 = vunpack.c.h.b16 %v1068
        %v1134 = vunpack.c.l.b16 %v1084
        %v1135 = vunpack.c.l.b16 %v1069
        %v1136 = vunpack.c.h.b16 %v1069
        %v1137 = vunpack.c.l.b16 %v1085
        %v1138 = vunpack.c.l.b16 %v1070
        %v1139 = vunpack.c.h.b16 %v1070
        %v1140 = vunpack.c.l.b16 %v1086
        %v1141 = vunpack.c.l.b16 %v1071
        %v1142 = vunpack.c.h.b16 %v1071
        %v1143 = vunpack.c.l.b16 %v1087
        %v1144 = vunpack.c.l.b16 %v1072
        %v1145 = vunpack.c.h.b16 %v1072
        %v1146 = vunpack.c.l.b16 %v1088
        %v1147 = vunpack.c.l.b16 %v1073
        %v1148 = vunpack.c.h.b16 %v1073
        %v1149 = vunpack.c.l.b16 %v1089
        %v1150 = vunpack.c.l.b16 %v1074
        %v1151 = vunpack.c.h.b16 %v1074
        %v1152 = vunpack.c.l.b16 %v1090
        %v1153 = vunpack.c.l.b16 %v1075
        %v1154 = vunpack.c.h.b16 %v1075
        %v1155 = vunpack.c.l.b16 %v1091
        %v1156 = vunpack.c.l.b16 %v1076
        %v1157 = vunpack.c.h.b16 %v1076
        %v1158 = vunpack.c.l.b16 %v1092
        %v1159 = vunpack.c.l.b16 %v1077
        %v1160 = vunpack.c.h.b16 %v1077
        %v1161 = vunpack.c.l.b16 %v1093
        %v1162 = vunpack.c.l.b16 %v1078
        %v1163 = vunpack.c.h.b16 %v1078
        %v1164 = vunpack.c.l.b16 %v1094
        %v1165 = vunpack.c.l.b16 %v1079
        %v1166 = vunpack.c.h.b16 %v1079
        %v1167 = vunpack.c.l.b16 %v1095
        %v1168 = vunpack.c.l.b16 %v1080
        %v1169 = vunpack.c.h.b16 %v1080
        %v1170 = vunpack.c.l.b16 %v1096
        %v1171 = vunpack.c.l.b16 %v1081
        %v1172 = vunpack.c.h.b16 %v1081
        %v1173 = vunpack.c.l.b16 %v1097
        %v1174 = vunpack.c.l.b16 %v1082
        %v1175 = vunpack.c.h.b16 %v1082
        %v1176 = vunpack.c.l.b16 %v1098
        %v1177 = vunpack.c.l.b16 %v1083
        %v1178 = vunpack.c.h.b16 %v1083
        %v1179 = vunpack.c.l.b16 %v1099
        %v1180 = vpack.c.b16 %v1132, %v1132
        %v1181 = vpack.c.b16 %v1133, %v1133
        %v1182 = vpack.c.b16 %v1134, %v1134
        %v1183 = vpack.c.b16 %v1135, %v1135
        %v1184 = vpack.c.b16 %v1136, %v1136
        %v1185 = vpack.c.b16 %v1137, %v1137
        %v1186 = vpack.c.b16 %v1138, %v1138
        %v1187 = vpack.c.b16 %v1139, %v1139
        %v1188 = vpack.c.b16 %v1140, %v1140
        %v1189 = vpack.c.b16 %v1141, %v1141
        %v1190 = vpack.c.b16 %v1142, %v1142
        %v1191 = vpack.c.b16 %v1143, %v1143
        %v1192 = vpack.c.b16 %v1144, %v1144
        %v1193 = vpack.c.b16 %v1145, %v1145
        %v1194 = vpack.c.b16 %v1146, %v1146
        %v1195 = vpack.c.b16 %v1147, %v1147
        %v1196 = vpack.c.b16 %v1148, %v1148
        %v1197 = vpack.c.b16 %v1149, %v1149
        %v1198 = vpack.c.b16 %v1150, %v1150
        %v1199 = vpack.c.b16 %v1151, %v1151
        %v1200 = vpack.c.b16 %v1152, %v1152
        %v1201 = vpack.c.b16 %v1153, %v1153
        %v1202 = vpack.c.b16 %v1154, %v1154
        %v1203 = vpack.c.b16 %v1155, %v1155
        %v1204 = vpack.c.b16 %v1156, %v1156
        %v1205 = vpack.c.b16 %v1157, %v1157
        %v1206 = vpack.c.b16 %v1158, %v1158
        %v1207 = vpack.c.b16 %v1159, %v1159
        %v1208 = vpack.c.b16 %v1160, %v1160
        %v1209 = vpack.c.b16 %v1161, %v1161
        %v1210 = vpack.c.b16 %v1162, %v1162
        %v1211 = vpack.c.b16 %v1163, %v1163
        %v1212 = vpack.c.b16 %v1164, %v1164
        %v1213 = vpack.c.b16 %v1165, %v1165
        %v1214 = vpack.c.b16 %v1166, %v1166
        %v1215 = vpack.c.b16 %v1167, %v1167
        %v1216 = vpack.c.b16 %v1168, %v1168
        %v1217 = vpack.c.b16 %v1169, %v1169
        %v1218 = vpack.c.b16 %v1170, %v1170
        %v1219 = vpack.c.b16 %v1171, %v1171
        %v1220 = vpack.c.b16 %v1172, %v1172
        %v1221 = vpack.c.b16 %v1173, %v1173
        %v1222 = vpack.c.b16 %v1174, %v1174
        %v1223 = vpack.c.b16 %v1175, %v1175
        %v1224 = vpack.c.b16 %v1176, %v1176
        %v1225 = vpack.c.b16 %v1177, %v1177
        %v1226 = vpack.c.b16 %v1178, %v1178
        %v1227 = vpack.c.b16 %v1179, %v1179
        %s1276 = scalar_lea.vmem [#allocation2], 12
        %1277 = vst.msk [vmem:[%s1276] sm:$0xf] %vm912, %v1180
        %1278 = vst.msk [vmem:[%s1276 + $0x4] sm:$0xf] %vm912, %v1181
        %1279 = vst.msk [vmem:[%s1276 + $0x8] sm:$0x1] %vm915, %v1182
        %1280 = vst.msk [vmem:[%s1276 + $0xc] sm:$0xf] %vm912, %v1183
        %1281 = vst.msk [vmem:[%s1276 + $0x10] sm:$0xf] %vm912, %v1184
        %1282 = vst.msk [vmem:[%s1276 + $0x14] sm:$0x1] %vm915, %v1185
        %1283 = vst.msk [vmem:[%s1276 + $0x18] sm:$0xf] %vm912, %v1186
        %1284 = vst.msk [vmem:[%s1276 + $0x1c] sm:$0xf] %vm912, %v1187
        %1285 = vst.msk [vmem:[%s1276 + $0x20] sm:$0x1] %vm915, %v1188
        %1286 = vst.msk [vmem:[%s1276 + $0x24] sm:$0xf] %vm912, %v1189
        %1287 = vst.msk [vmem:[%s1276 + $0x28] sm:$0xf] %vm912, %v1190
        %1288 = vst.msk [vmem:[%s1276 + $0x2c] sm:$0x1] %vm915, %v1191
        %1289 = vst.msk [vmem:[%s1276 + $0x30] sm:$0xf] %vm912, %v1192
        %1290 = vst.msk [vmem:[%s1276 + $0x34] sm:$0xf] %vm912, %v1193
        %1291 = vst.msk [vmem:[%s1276 + $0x38] sm:$0x1] %vm915, %v1194
        %1292 = vst.msk [vmem:[%s1276 + $0x3c] sm:$0xf] %vm912, %v1195
        %1293 = vst.msk [vmem:[%s1276 + $0x40] sm:$0xf] %vm912, %v1196
        %1294 = vst.msk [vmem:[%s1276 + $0x44] sm:$0x1] %vm915, %v1197
        %1295 = vst.msk [vmem:[%s1276 + $0x48] sm:$0xf] %vm912, %v1198
        %1296 = vst.msk [vmem:[%s1276 + $0x4c] sm:$0xf] %vm912, %v1199
        %1297 = vst.msk [vmem:[%s1276 + $0x50] sm:$0x1] %vm915, %v1200
        %1298 = vst.msk [vmem:[%s1276 + $0x54] sm:$0xf] %vm912, %v1201
        %1299 = vst.msk [vmem:[%s1276 + $0x58] sm:$0xf] %vm912, %v1202
        %1300 = vst.msk [vmem:[%s1276 + $0x5c] sm:$0x1] %vm915, %v1203
        %1301 = vst.msk [vmem:[%s1276 + $0x60] sm:$0xf] %vm912, %v1204
        %1302 = vst.msk [vmem:[%s1276 + $0x64] sm:$0xf] %vm912, %v1205
        %1303 = vst.msk [vmem:[%s1276 + $0x68] sm:$0x1] %vm915, %v1206
        %1304 = vst.msk [vmem:[%s1276 + $0x6c] sm:$0xf] %vm912, %v1207
        %1305 = vst.msk [vmem:[%s1276 + $0x70] sm:$0xf] %vm912, %v1208
        %1306 = vst.msk [vmem:[%s1276 + $0x74] sm:$0x1] %vm915, %v1209
        %1307 = vst.msk [vmem:[%s1276 + $0x78] sm:$0xf] %vm912, %v1210
        %1308 = vst.msk [vmem:[%s1276 + $0x7c] sm:$0xf] %vm912, %v1211
        %1309 = vst.msk [vmem:[%s1276 + $0x80] sm:$0x1] %vm915, %v1212
        %1310 = vst.msk [vmem:[%s1276 + $0x84] sm:$0xf] %vm912, %v1213
        %1311 = vst.msk [vmem:[%s1276 + $0x88] sm:$0xf] %vm912, %v1214
        %1312 = vst.msk [vmem:[%s1276 + $0x8c] sm:$0x1] %vm915, %v1215
        %1313 = vst.msk [vmem:[%s1276 + $0x90] sm:$0xf] %vm912, %v1216
        %1314 = vst.msk [vmem:[%s1276 + $0x94] sm:$0xf] %vm912, %v1217
        %1315 = vst.msk [vmem:[%s1276 + $0x98] sm:$0x1] %vm915, %v1218
        %1316 = vst.msk [vmem:[%s1276 + $0x9c] sm:$0xf] %vm912, %v1219
        %1317 = vst.msk [vmem:[%s1276 + $0xa0] sm:$0xf] %vm912, %v1220
        %1318 = vst.msk [vmem:[%s1276 + $0xa4] sm:$0x1] %vm915, %v1221
        %1319 = vst.msk [vmem:[%s1276 + $0xa8] sm:$0xf] %vm912, %v1222
        %1320 = vst.msk [vmem:[%s1276 + $0xac] sm:$0xf] %vm912, %v1223
        %1321 = vst.msk [vmem:[%s1276 + $0xb0] sm:$0x1] %vm915, %v1224
        %1322 = vst.msk [vmem:[%s1276 + $0xb4] sm:$0xf] %vm912, %v1225
        %1323 = vst.msk [vmem:[%s1276 + $0xb8] sm:$0xf] %vm912, %v1226
        %1324 = vst.msk [vmem:[%s1276 + $0xbc] sm:$0x1] %vm915, %v1227
        %v1325 = vld [vmem:[#allocation2] sm:$0xf]
        %v1326 = vld [vmem:[#allocation2 + $0x4] sm:$0xf]
        %v1327 = vld [vmem:[#allocation2 + $0xc] sm:$0xf]
        %v1328 = vld [vmem:[#allocation2 + $0x10] sm:$0xf]
        %v1329 = vld [vmem:[#allocation2 + $0x18] sm:$0xf]
        %v1330 = vld [vmem:[#allocation2 + $0x1c] sm:$0xf]
        %v1331 = vld [vmem:[#allocation2 + $0x24] sm:$0xf]
        %v1332 = vld [vmem:[#allocation2 + $0x28] sm:$0xf]
        %v1333 = vld [vmem:[#allocation2 + $0x30] sm:$0xf]
        %v1334 = vld [vmem:[#allocation2 + $0x34] sm:$0xf]
        %v1335 = vld [vmem:[#allocation2 + $0x3c] sm:$0xf]
        %v1336 = vld [vmem:[#allocation2 + $0x40] sm:$0xf]
        %v1337 = vld [vmem:[#allocation2 + $0x48] sm:$0xf]
        %v1338 = vld [vmem:[#allocation2 + $0x4c] sm:$0xf]
        %v1339 = vld [vmem:[#allocation2 + $0x54] sm:$0xf]
        %v1340 = vld [vmem:[#allocation2 + $0x58] sm:$0xf]
        %v1341 = vld [vmem:[#allocation2 + $0x60] sm:$0xf]
        %v1342 = vld [vmem:[#allocation2 + $0x64] sm:$0xf]
        %v1343 = vld [vmem:[#allocation2 + $0x6c] sm:$0xf]
        %v1344 = vld [vmem:[#allocation2 + $0x70] sm:$0xf]
        %v1345 = vld [vmem:[#allocation2 + $0x78] sm:$0xf]
        %v1346 = vld [vmem:[#allocation2 + $0x7c] sm:$0xf]
        %v1347 = vld [vmem:[#allocation2 + $0x84] sm:$0xf]
        %v1348 = vld [vmem:[#allocation2 + $0x88] sm:$0xf]
        %v1349 = vld [vmem:[#allocation2 + $0x90] sm:$0xf]
        %v1350 = vld [vmem:[#allocation2 + $0x94] sm:$0xf]
        %v1351 = vld [vmem:[#allocation2 + $0x9c] sm:$0xf]
        %v1352 = vld [vmem:[#allocation2 + $0xa0] sm:$0xf]
        %v1353 = vld [vmem:[#allocation2 + $0xa8] sm:$0xf]
        %v1354 = vld [vmem:[#allocation2 + $0xac] sm:$0xf]
        %v1355 = vld [vmem:[#allocation2 + $0xb4] sm:$0xf]
        %v1356 = vld [vmem:[#allocation2 + $0xb8] sm:$0xf]
        %v1357 = vld [vmem:[#allocation2 + $0x8] sm:$0x1]
        %v1358 = vld [vmem:[#allocation2 + $0x14] sm:$0x1]
        %v1359 = vld [vmem:[#allocation2 + $0x20] sm:$0x1]
        %v1360 = vld [vmem:[#allocation2 + $0x2c] sm:$0x1]
        %v1361 = vld [vmem:[#allocation2 + $0x38] sm:$0x1]
        %v1362 = vld [vmem:[#allocation2 + $0x44] sm:$0x1]
        %v1363 = vld [vmem:[#allocation2 + $0x50] sm:$0x1]
        %v1364 = vld [vmem:[#allocation2 + $0x5c] sm:$0x1]
        %v1365 = vld [vmem:[#allocation2 + $0x68] sm:$0x1]
        %v1366 = vld [vmem:[#allocation2 + $0x74] sm:$0x1]
        %v1367 = vld [vmem:[#allocation2 + $0x80] sm:$0x1]
        %v1368 = vld [vmem:[#allocation2 + $0x8c] sm:$0x1]
        %v1369 = vld [vmem:[#allocation2 + $0x98] sm:$0x1]
        %v1370 = vld [vmem:[#allocation2 + $0xa4] sm:$0x1]
        %v1371 = vld [vmem:[#allocation2 + $0xb0] sm:$0x1]
        %v1372 = vld [vmem:[#allocation2 + $0xbc] sm:$0x1]
        %vm1373 = vsmask.f32 3328
        %vm1374 = vsmask.f32 7440
        %vm1375 = vmor %vm1373, %vm1374
        %v1377 = vshrl.u32 %v1325, 16
        %v1379 = vrot.slane %v1377, 4
        %v1380 = vshll.u32 %v1325, 16
        %v1382 = vrot.slane %v1380, 5
        %v1383 = vor.u32 %v1379, %v1382
        %v1384 = vrot.slane %v1383, 4
        %v1386 = vshll.u32 %v1326, 16
        %v1388 = vrot.slane %v1386, 5
        %v1389 = vsel %vm1375, %v1384, %v1388
        %v1390 = vshrl.u32 %v1326, 16
        %v1392 = vrot.slane %v1390, 4
        %v1393 = vor.u32 %v1392, %v1388
        %v1394 = vrot.slane %v1393, 4
        %v1396 = vshll.u32 %v1357, 16
        %v1398 = vrot.slane %v1396, 5
        %v1399 = vsel %vm1375, %v1394, %v1398
        %v1401 = vshrl.u32 %v1327, 16
        %v1403 = vrot.slane %v1401, 4
        %v1404 = vshll.u32 %v1327, 16
        %v1406 = vrot.slane %v1404, 5
        %v1407 = vor.u32 %v1403, %v1406
        %v1408 = vrot.slane %v1407, 4
        %v1410 = vshll.u32 %v1328, 16
        %v1412 = vrot.slane %v1410, 5
        %v1413 = vsel %vm1375, %v1408, %v1412
        %v1414 = vshrl.u32 %v1328, 16
        %v1416 = vrot.slane %v1414, 4
        %v1417 = vor.u32 %v1416, %v1412
        %v1418 = vrot.slane %v1417, 4
        %v1420 = vshll.u32 %v1358, 16
        %v1422 = vrot.slane %v1420, 5
        %v1423 = vsel %vm1375, %v1418, %v1422
        %v1425 = vshrl.u32 %v1329, 16
        %v1427 = vrot.slane %v1425, 4
        %v1428 = vshll.u32 %v1329, 16
        %v1430 = vrot.slane %v1428, 5
        %v1431 = vor.u32 %v1427, %v1430
        %v1432 = vrot.slane %v1431, 4
        %v1434 = vshll.u32 %v1330, 16
        %v1436 = vrot.slane %v1434, 5
        %v1437 = vsel %vm1375, %v1432, %v1436
        %v1438 = vshrl.u32 %v1330, 16
        %v1440 = vrot.slane %v1438, 4
        %v1441 = vor.u32 %v1440, %v1436
        %v1442 = vrot.slane %v1441, 4
        %v1444 = vshll.u32 %v1359, 16
        %v1446 = vrot.slane %v1444, 5
        %v1447 = vsel %vm1375, %v1442, %v1446
        %v1449 = vshrl.u32 %v1331, 16
        %v1451 = vrot.slane %v1449, 4
        %v1452 = vshll.u32 %v1331, 16
        %v1454 = vrot.slane %v1452, 5
        %v1455 = vor.u32 %v1451, %v1454
        %v1456 = vrot.slane %v1455, 4
        %v1458 = vshll.u32 %v1332, 16
        %v1460 = vrot.slane %v1458, 5
        %v1461 = vsel %vm1375, %v1456, %v1460
        %v1462 = vshrl.u32 %v1332, 16
        %v1464 = vrot.slane %v1462, 4
        %v1465 = vor.u32 %v1464, %v1460
        %v1466 = vrot.slane %v1465, 4
        %v1468 = vshll.u32 %v1360, 16
        %v1470 = vrot.slane %v1468, 5
        %v1471 = vsel %vm1375, %v1466, %v1470
        %v1473 = vshrl.u32 %v1333, 16
        %v1475 = vrot.slane %v1473, 4
        %v1476 = vshll.u32 %v1333, 16
        %v1478 = vrot.slane %v1476, 5
        %v1479 = vor.u32 %v1475, %v1478
        %v1480 = vrot.slane %v1479, 4
        %v1482 = vshll.u32 %v1334, 16
        %v1484 = vrot.slane %v1482, 5
        %v1485 = vsel %vm1375, %v1480, %v1484
        %v1486 = vshrl.u32 %v1334, 16
        %v1488 = vrot.slane %v1486, 4
        %v1489 = vor.u32 %v1488, %v1484
        %v1490 = vrot.slane %v1489, 4
        %v1492 = vshll.u32 %v1361, 16
        %v1494 = vrot.slane %v1492, 5
        %v1495 = vsel %vm1375, %v1490, %v1494
        %v1497 = vshrl.u32 %v1335, 16
        %v1499 = vrot.slane %v1497, 4
        %v1500 = vshll.u32 %v1335, 16
        %v1502 = vrot.slane %v1500, 5
        %v1503 = vor.u32 %v1499, %v1502
        %v1504 = vrot.slane %v1503, 4
        %v1506 = vshll.u32 %v1336, 16
        %v1508 = vrot.slane %v1506, 5
        %v1509 = vsel %vm1375, %v1504, %v1508
        %v1510 = vshrl.u32 %v1336, 16
        %v1512 = vrot.slane %v1510, 4
        %v1513 = vor.u32 %v1512, %v1508
        %v1514 = vrot.slane %v1513, 4
        %v1516 = vshll.u32 %v1362, 16
        %v1518 = vrot.slane %v1516, 5
        %v1519 = vsel %vm1375, %v1514, %v1518
        %v1521 = vshrl.u32 %v1337, 16
        %v1523 = vrot.slane %v1521, 4
        %v1524 = vshll.u32 %v1337, 16
        %v1526 = vrot.slane %v1524, 5
        %v1527 = vor.u32 %v1523, %v1526
        %v1528 = vrot.slane %v1527, 4
        %v1530 = vshll.u32 %v1338, 16
        %v1532 = vrot.slane %v1530, 5
        %v1533 = vsel %vm1375, %v1528, %v1532
        %v1534 = vshrl.u32 %v1338, 16
        %v1536 = vrot.slane %v1534, 4
        %v1537 = vor.u32 %v1536, %v1532
        %v1538 = vrot.slane %v1537, 4
        %v1540 = vshll.u32 %v1363, 16
        %v1542 = vrot.slane %v1540, 5
        %v1543 = vsel %vm1375, %v1538, %v1542
        %v1545 = vshrl.u32 %v1339, 16
        %v1547 = vrot.slane %v1545, 4
        %v1548 = vshll.u32 %v1339, 16
        %v1550 = vrot.slane %v1548, 5
        %v1551 = vor.u32 %v1547, %v1550
        %v1552 = vrot.slane %v1551, 4
        %v1554 = vshll.u32 %v1340, 16
        %v1556 = vrot.slane %v1554, 5
        %v1557 = vsel %vm1375, %v1552, %v1556
        %v1558 = vshrl.u32 %v1340, 16
        %v1560 = vrot.slane %v1558, 4
        %v1561 = vor.u32 %v1560, %v1556
        %v1562 = vrot.slane %v1561, 4
        %v1564 = vshll.u32 %v1364, 16
        %v1566 = vrot.slane %v1564, 5
        %v1567 = vsel %vm1375, %v1562, %v1566
        %v1569 = vshrl.u32 %v1341, 16
        %v1571 = vrot.slane %v1569, 4
        %v1572 = vshll.u32 %v1341, 16
        %v1574 = vrot.slane %v1572, 5
        %v1575 = vor.u32 %v1571, %v1574
        %v1576 = vrot.slane %v1575, 4
        %v1578 = vshll.u32 %v1342, 16
        %v1580 = vrot.slane %v1578, 5
        %v1581 = vsel %vm1375, %v1576, %v1580
        %v1582 = vshrl.u32 %v1342, 16
        %v1584 = vrot.slane %v1582, 4
        %v1585 = vor.u32 %v1584, %v1580
        %v1586 = vrot.slane %v1585, 4
        %v1588 = vshll.u32 %v1365, 16
        %v1590 = vrot.slane %v1588, 5
        %v1591 = vsel %vm1375, %v1586, %v1590
        %v1593 = vshrl.u32 %v1343, 16
        %v1595 = vrot.slane %v1593, 4
        %v1596 = vshll.u32 %v1343, 16
        %v1598 = vrot.slane %v1596, 5
        %v1599 = vor.u32 %v1595, %v1598
        %v1600 = vrot.slane %v1599, 4
        %v1602 = vshll.u32 %v1344, 16
        %v1604 = vrot.slane %v1602, 5
        %v1605 = vsel %vm1375, %v1600, %v1604
        %v1606 = vshrl.u32 %v1344, 16
        %v1608 = vrot.slane %v1606, 4
        %v1609 = vor.u32 %v1608, %v1604
        %v1610 = vrot.slane %v1609, 4
        %v1612 = vshll.u32 %v1366, 16
        %v1614 = vrot.slane %v1612, 5
        %v1615 = vsel %vm1375, %v1610, %v1614
        %v1617 = vshrl.u32 %v1345, 16
        %v1619 = vrot.slane %v1617, 4
        %v1620 = vshll.u32 %v1345, 16
        %v1622 = vrot.slane %v1620, 5
        %v1623 = vor.u32 %v1619, %v1622
        %v1624 = vrot.slane %v1623, 4
        %v1626 = vshll.u32 %v1346, 16
        %v1628 = vrot.slane %v1626, 5
        %v1629 = vsel %vm1375, %v1624, %v1628
        %v1630 = vshrl.u32 %v1346, 16
        %v1632 = vrot.slane %v1630, 4
        %v1633 = vor.u32 %v1632, %v1628
        %v1634 = vrot.slane %v1633, 4
        %v1636 = vshll.u32 %v1367, 16
        %v1638 = vrot.slane %v1636, 5
        %v1639 = vsel %vm1375, %v1634, %v1638
        %v1641 = vshrl.u32 %v1347, 16
        %v1643 = vrot.slane %v1641, 4
        %v1644 = vshll.u32 %v1347, 16
        %v1646 = vrot.slane %v1644, 5
        %v1647 = vor.u32 %v1643, %v1646
        %v1648 = vrot.slane %v1647, 4
        %v1650 = vshll.u32 %v1348, 16
        %v1652 = vrot.slane %v1650, 5
        %v1653 = vsel %vm1375, %v1648, %v1652
        %v1654 = vshrl.u32 %v1348, 16
        %v1656 = vrot.slane %v1654, 4
        %v1657 = vor.u32 %v1656, %v1652
        %v1658 = vrot.slane %v1657, 4
        %v1660 = vshll.u32 %v1368, 16
        %v1662 = vrot.slane %v1660, 5
        %v1663 = vsel %vm1375, %v1658, %v1662
        %v1665 = vshrl.u32 %v1349, 16
        %v1667 = vrot.slane %v1665, 4
        %v1668 = vshll.u32 %v1349, 16
        %v1670 = vrot.slane %v1668, 5
        %v1671 = vor.u32 %v1667, %v1670
        %v1672 = vrot.slane %v1671, 4
        %v1674 = vshll.u32 %v1350, 16
        %v1676 = vrot.slane %v1674, 5
        %v1677 = vsel %vm1375, %v1672, %v1676
        %v1678 = vshrl.u32 %v1350, 16
        %v1680 = vrot.slane %v1678, 4
        %v1681 = vor.u32 %v1680, %v1676
        %v1682 = vrot.slane %v1681, 4
        %v1684 = vshll.u32 %v1369, 16
        %v1686 = vrot.slane %v1684, 5
        %v1687 = vsel %vm1375, %v1682, %v1686
        %v1689 = vshrl.u32 %v1351, 16
        %v1691 = vrot.slane %v1689, 4
        %v1692 = vshll.u32 %v1351, 16
        %v1694 = vrot.slane %v1692, 5
        %v1695 = vor.u32 %v1691, %v1694
        %v1696 = vrot.slane %v1695, 4
        %v1698 = vshll.u32 %v1352, 16
        %v1700 = vrot.slane %v1698, 5
        %v1701 = vsel %vm1375, %v1696, %v1700
        %v1702 = vshrl.u32 %v1352, 16
        %v1704 = vrot.slane %v1702, 4
        %v1705 = vor.u32 %v1704, %v1700
        %v1706 = vrot.slane %v1705, 4
        %v1708 = vshll.u32 %v1370, 16
        %v1710 = vrot.slane %v1708, 5
        %v1711 = vsel %vm1375, %v1706, %v1710
        %v1713 = vshrl.u32 %v1353, 16
        %v1715 = vrot.slane %v1713, 4
        %v1716 = vshll.u32 %v1353, 16
        %v1718 = vrot.slane %v1716, 5
        %v1719 = vor.u32 %v1715, %v1718
        %v1720 = vrot.slane %v1719, 4
        %v1722 = vshll.u32 %v1354, 16
        %v1724 = vrot.slane %v1722, 5
        %v1725 = vsel %vm1375, %v1720, %v1724
        %v1726 = vshrl.u32 %v1354, 16
        %v1728 = vrot.slane %v1726, 4
        %v1729 = vor.u32 %v1728, %v1724
        %v1730 = vrot.slane %v1729, 4
        %v1732 = vshll.u32 %v1371, 16
        %v1734 = vrot.slane %v1732, 5
        %v1735 = vsel %vm1375, %v1730, %v1734
        %v1737 = vshrl.u32 %v1355, 16
        %v1739 = vrot.slane %v1737, 4
        %v1740 = vshll.u32 %v1355, 16
        %v1742 = vrot.slane %v1740, 5
        %v1743 = vor.u32 %v1739, %v1742
        %v1744 = vrot.slane %v1743, 4
        %v1746 = vshll.u32 %v1356, 16
        %v1748 = vrot.slane %v1746, 5
        %v1749 = vsel %vm1375, %v1744, %v1748
        %v1750 = vshrl.u32 %v1356, 16
        %v1752 = vrot.slane %v1750, 4
        %v1753 = vor.u32 %v1752, %v1748
        %v1754 = vrot.slane %v1753, 4
        %v1756 = vshll.u32 %v1372, 16
        %v1758 = vrot.slane %v1756, 5
        %v1759 = vsel %vm1375, %v1754, %v1758
        %v1760 = vld [vmem:[#allocation2] sm:$0xe]
        %v1761 = vld [vmem:[#allocation2 + $0xc] sm:$0xe]
        %v1762 = vld [vmem:[#allocation2 + $0x18] sm:$0xe]
        %v1763 = vld [vmem:[#allocation2 + $0x24] sm:$0xe]
        %v1764 = vld [vmem:[#allocation2 + $0x30] sm:$0xe]
        %v1765 = vld [vmem:[#allocation2 + $0x3c] sm:$0xe]
        %v1766 = vld [vmem:[#allocation2 + $0x48] sm:$0xe]
        %v1767 = vld [vmem:[#allocation2 + $0x54] sm:$0xe]
        %v1768 = vld [vmem:[#allocation2 + $0x60] sm:$0xe]
        %v1769 = vld [vmem:[#allocation2 + $0x6c] sm:$0xe]
        %v1770 = vld [vmem:[#allocation2 + $0x78] sm:$0xe]
        %v1771 = vld [vmem:[#allocation2 + $0x84] sm:$0xe]
        %v1772 = vld [vmem:[#allocation2 + $0x90] sm:$0xe]
        %v1773 = vld [vmem:[#allocation2 + $0x9c] sm:$0xe]
        %v1774 = vld [vmem:[#allocation2 + $0xa8] sm:$0xe]
        %v1775 = vld [vmem:[#allocation2 + $0xb4] sm:$0xe]
        %vm1824 = vcmask 1042432
        %vm1825 = vcmask 1046532
        %vm1826 = vmor %vm1824, %vm1825
        %v1827 = vrot.slane %v1760, 5
        %v1828 = vrot.slane %v1827, 4
        %v1829 = vrot.slane %v1326, 5
        %v1830 = vsel %vm1826, %v1828, %v1829
        %v1831 = vrot.slane %v1829, 4
        %v1832 = vrot.slane %v1357, 5
        %v1833 = vsel %vm1826, %v1831, %v1832
        %v1834 = vrot.slane %v1761, 5
        %v1835 = vrot.slane %v1834, 4
        %v1836 = vrot.slane %v1328, 5
        %v1837 = vsel %vm1826, %v1835, %v1836
        %v1838 = vrot.slane %v1836, 4
        %v1839 = vrot.slane %v1358, 5
        %v1840 = vsel %vm1826, %v1838, %v1839
        %v1841 = vrot.slane %v1762, 5
        %v1842 = vrot.slane %v1841, 4
        %v1843 = vrot.slane %v1330, 5
        %v1844 = vsel %vm1826, %v1842, %v1843
        %v1845 = vrot.slane %v1843, 4
        %v1846 = vrot.slane %v1359, 5
        %v1847 = vsel %vm1826, %v1845, %v1846
        %v1848 = vrot.slane %v1763, 5
        %v1849 = vrot.slane %v1848, 4
        %v1850 = vrot.slane %v1332, 5
        %v1851 = vsel %vm1826, %v1849, %v1850
        %v1852 = vrot.slane %v1850, 4
        %v1853 = vrot.slane %v1360, 5
        %v1854 = vsel %vm1826, %v1852, %v1853
        %v1855 = vrot.slane %v1764, 5
        %v1856 = vrot.slane %v1855, 4
        %v1857 = vrot.slane %v1334, 5
        %v1858 = vsel %vm1826, %v1856, %v1857
        %v1859 = vrot.slane %v1857, 4
        %v1860 = vrot.slane %v1361, 5
        %v1861 = vsel %vm1826, %v1859, %v1860
        %v1862 = vrot.slane %v1765, 5
        %v1863 = vrot.slane %v1862, 4
        %v1864 = vrot.slane %v1336, 5
        %v1865 = vsel %vm1826, %v1863, %v1864
        %v1866 = vrot.slane %v1864, 4
        %v1867 = vrot.slane %v1362, 5
        %v1868 = vsel %vm1826, %v1866, %v1867
        %v1869 = vrot.slane %v1766, 5
        %v1870 = vrot.slane %v1869, 4
        %v1871 = vrot.slane %v1338, 5
        %v1872 = vsel %vm1826, %v1870, %v1871
        %v1873 = vrot.slane %v1871, 4
        %v1874 = vrot.slane %v1363, 5
        %v1875 = vsel %vm1826, %v1873, %v1874
        %v1876 = vrot.slane %v1767, 5
        %v1877 = vrot.slane %v1876, 4
        %v1878 = vrot.slane %v1340, 5
        %v1879 = vsel %vm1826, %v1877, %v1878
        %v1880 = vrot.slane %v1878, 4
        %v1881 = vrot.slane %v1364, 5
        %v1882 = vsel %vm1826, %v1880, %v1881
        %v1883 = vrot.slane %v1768, 5
        %v1884 = vrot.slane %v1883, 4
        %v1885 = vrot.slane %v1342, 5
        %v1886 = vsel %vm1826, %v1884, %v1885
        %v1887 = vrot.slane %v1885, 4
        %v1888 = vrot.slane %v1365, 5
        %v1889 = vsel %vm1826, %v1887, %v1888
        %v1890 = vrot.slane %v1769, 5
        %v1891 = vrot.slane %v1890, 4
        %v1892 = vrot.slane %v1344, 5
        %v1893 = vsel %vm1826, %v1891, %v1892
        %v1894 = vrot.slane %v1892, 4
        %v1895 = vrot.slane %v1366, 5
        %v1896 = vsel %vm1826, %v1894, %v1895
        %v1897 = vrot.slane %v1770, 5
        %v1898 = vrot.slane %v1897, 4
        %v1899 = vrot.slane %v1346, 5
        %v1900 = vsel %vm1826, %v1898, %v1899
        %v1901 = vrot.slane %v1899, 4
        %v1902 = vrot.slane %v1367, 5
        %v1903 = vsel %vm1826, %v1901, %v1902
        %v1904 = vrot.slane %v1771, 5
        %v1905 = vrot.slane %v1904, 4
        %v1906 = vrot.slane %v1348, 5
        %v1907 = vsel %vm1826, %v1905, %v1906
        %v1908 = vrot.slane %v1906, 4
        %v1909 = vrot.slane %v1368, 5
        %v1910 = vsel %vm1826, %v1908, %v1909
        %v1911 = vrot.slane %v1772, 5
        %v1912 = vrot.slane %v1911, 4
        %v1913 = vrot.slane %v1350, 5
        %v1914 = vsel %vm1826, %v1912, %v1913
        %v1915 = vrot.slane %v1913, 4
        %v1916 = vrot.slane %v1369, 5
        %v1917 = vsel %vm1826, %v1915, %v1916
        %v1918 = vrot.slane %v1773, 5
        %v1919 = vrot.slane %v1918, 4
        %v1920 = vrot.slane %v1352, 5
        %v1921 = vsel %vm1826, %v1919, %v1920
        %v1922 = vrot.slane %v1920, 4
        %v1923 = vrot.slane %v1370, 5
        %v1924 = vsel %vm1826, %v1922, %v1923
        %v1925 = vrot.slane %v1774, 5
        %v1926 = vrot.slane %v1925, 4
        %v1927 = vrot.slane %v1354, 5
        %v1928 = vsel %vm1826, %v1926, %v1927
        %v1929 = vrot.slane %v1927, 4
        %v1930 = vrot.slane %v1371, 5
        %v1931 = vsel %vm1826, %v1929, %v1930
        %v1932 = vrot.slane %v1775, 5
        %v1933 = vrot.slane %v1932, 4
        %v1934 = vrot.slane %v1356, 5
        %v1935 = vsel %vm1826, %v1933, %v1934
        %v1936 = vrot.slane %v1934, 4
        %v1937 = vrot.slane %v1372, 5
        %v1938 = vsel %vm1826, %v1936, %v1937
        %v1939 = vld [vmem:[%s1276] sm:$0xf]
        %v1940 = vld [vmem:[%s1276 + $0x4] sm:$0xf]
        %v1941 = vld [vmem:[%s1276 + $0xc] sm:$0xf]
        %v1942 = vld [vmem:[%s1276 + $0x10] sm:$0xf]
        %v1943 = vld [vmem:[%s1276 + $0x18] sm:$0xf]
        %v1944 = vld [vmem:[%s1276 + $0x1c] sm:$0xf]
        %v1945 = vld [vmem:[%s1276 + $0x24] sm:$0xf]
        %v1946 = vld [vmem:[%s1276 + $0x28] sm:$0xf]
        %v1947 = vld [vmem:[%s1276 + $0x30] sm:$0xf]
        %v1948 = vld [vmem:[%s1276 + $0x34] sm:$0xf]
        %v1949 = vld [vmem:[%s1276 + $0x3c] sm:$0xf]
        %v1950 = vld [vmem:[%s1276 + $0x40] sm:$0xf]
        %v1951 = vld [vmem:[%s1276 + $0x48] sm:$0xf]
        %v1952 = vld [vmem:[%s1276 + $0x4c] sm:$0xf]
        %v1953 = vld [vmem:[%s1276 + $0x54] sm:$0xf]
        %v1954 = vld [vmem:[%s1276 + $0x58] sm:$0xf]
        %v1955 = vld [vmem:[%s1276 + $0x60] sm:$0xf]
        %v1956 = vld [vmem:[%s1276 + $0x64] sm:$0xf]
        %v1957 = vld [vmem:[%s1276 + $0x6c] sm:$0xf]
        %v1958 = vld [vmem:[%s1276 + $0x70] sm:$0xf]
        %v1959 = vld [vmem:[%s1276 + $0x78] sm:$0xf]
        %v1960 = vld [vmem:[%s1276 + $0x7c] sm:$0xf]
        %v1961 = vld [vmem:[%s1276 + $0x84] sm:$0xf]
        %v1962 = vld [vmem:[%s1276 + $0x88] sm:$0xf]
        %v1963 = vld [vmem:[%s1276 + $0x90] sm:$0xf]
        %v1964 = vld [vmem:[%s1276 + $0x94] sm:$0xf]
        %v1965 = vld [vmem:[%s1276 + $0x9c] sm:$0xf]
        %v1966 = vld [vmem:[%s1276 + $0xa0] sm:$0xf]
        %v1967 = vld [vmem:[%s1276 + $0xa8] sm:$0xf]
        %v1968 = vld [vmem:[%s1276 + $0xac] sm:$0xf]
        %v1969 = vld [vmem:[%s1276 + $0xb4] sm:$0xf]
        %v1970 = vld [vmem:[%s1276 + $0xb8] sm:$0xf]
        %v1971 = vld [vmem:[%s1276 + $0x8] sm:$0x1]
        %v1972 = vld [vmem:[%s1276 + $0x14] sm:$0x1]
        %v1973 = vld [vmem:[%s1276 + $0x20] sm:$0x1]
        %v1974 = vld [vmem:[%s1276 + $0x2c] sm:$0x1]
        %v1975 = vld [vmem:[%s1276 + $0x38] sm:$0x1]
        %v1976 = vld [vmem:[%s1276 + $0x44] sm:$0x1]
        %v1977 = vld [vmem:[%s1276 + $0x50] sm:$0x1]
        %v1978 = vld [vmem:[%s1276 + $0x5c] sm:$0x1]
        %v1979 = vld [vmem:[%s1276 + $0x68] sm:$0x1]
        %v1980 = vld [vmem:[%s1276 + $0x74] sm:$0x1]
        %v1981 = vld [vmem:[%s1276 + $0x80] sm:$0x1]
        %v1982 = vld [vmem:[%s1276 + $0x8c] sm:$0x1]
        %v1983 = vld [vmem:[%s1276 + $0x98] sm:$0x1]
        %v1984 = vld [vmem:[%s1276 + $0xa4] sm:$0x1]
        %v1985 = vld [vmem:[%s1276 + $0xb0] sm:$0x1]
        %v1986 = vld [vmem:[%s1276 + $0xbc] sm:$0x1]
        %v1988 = vshrl.u32 %v1939, 16
        %v1990 = vrot.slane %v1988, 4
        %v1991 = vshll.u32 %v1939, 16
        %v1993 = vrot.slane %v1991, 5
        %v1994 = vor.u32 %v1990, %v1993
        %v1995 = vrot.slane %v1994, 4
        %v1997 = vshll.u32 %v1940, 16
        %v1999 = vrot.slane %v1997, 5
        %v2000 = vsel %vm1375, %v1995, %v1999
        %v2001 = vshrl.u32 %v1940, 16
        %v2003 = vrot.slane %v2001, 4
        %v2004 = vor.u32 %v2003, %v1999
        %v2005 = vrot.slane %v2004, 4
        %v2007 = vshll.u32 %v1971, 16
        %v2009 = vrot.slane %v2007, 5
        %v2010 = vsel %vm1375, %v2005, %v2009
        %v2012 = vshrl.u32 %v1941, 16
        %v2014 = vrot.slane %v2012, 4
        %v2015 = vshll.u32 %v1941, 16
        %v2017 = vrot.slane %v2015, 5
        %v2018 = vor.u32 %v2014, %v2017
        %v2019 = vrot.slane %v2018, 4
        %v2021 = vshll.u32 %v1942, 16
        %v2023 = vrot.slane %v2021, 5
        %v2024 = vsel %vm1375, %v2019, %v2023
        %v2025 = vshrl.u32 %v1942, 16
        %v2027 = vrot.slane %v2025, 4
        %v2028 = vor.u32 %v2027, %v2023
        %v2029 = vrot.slane %v2028, 4
        %v2031 = vshll.u32 %v1972, 16
        %v2033 = vrot.slane %v2031, 5
        %v2034 = vsel %vm1375, %v2029, %v2033
        %v2036 = vshrl.u32 %v1943, 16
        %v2038 = vrot.slane %v2036, 4
        %v2039 = vshll.u32 %v1943, 16
        %v2041 = vrot.slane %v2039, 5
        %v2042 = vor.u32 %v2038, %v2041
        %v2043 = vrot.slane %v2042, 4
        %v2045 = vshll.u32 %v1944, 16
        %v2047 = vrot.slane %v2045, 5
        %v2048 = vsel %vm1375, %v2043, %v2047
        %v2049 = vshrl.u32 %v1944, 16
        %v2051 = vrot.slane %v2049, 4
        %v2052 = vor.u32 %v2051, %v2047
        %v2053 = vrot.slane %v2052, 4
        %v2055 = vshll.u32 %v1973, 16
        %v2057 = vrot.slane %v2055, 5
        %v2058 = vsel %vm1375, %v2053, %v2057
        %v2060 = vshrl.u32 %v1945, 16
        %v2062 = vrot.slane %v2060, 4
        %v2063 = vshll.u32 %v1945, 16
        %v2065 = vrot.slane %v2063, 5
        %v2066 = vor.u32 %v2062, %v2065
        %v2067 = vrot.slane %v2066, 4
        %v2069 = vshll.u32 %v1946, 16
        %v2071 = vrot.slane %v2069, 5
        %v2072 = vsel %vm1375, %v2067, %v2071
        %v2073 = vshrl.u32 %v1946, 16
        %v2075 = vrot.slane %v2073, 4
        %v2076 = vor.u32 %v2075, %v2071
        %v2077 = vrot.slane %v2076, 4
        %v2079 = vshll.u32 %v1974, 16
        %v2081 = vrot.slane %v2079, 5
        %v2082 = vsel %vm1375, %v2077, %v2081
        %v2084 = vshrl.u32 %v1947, 16
        %v2086 = vrot.slane %v2084, 4
        %v2087 = vshll.u32 %v1947, 16
        %v2089 = vrot.slane %v2087, 5
        %v2090 = vor.u32 %v2086, %v2089
        %v2091 = vrot.slane %v2090, 4
        %v2093 = vshll.u32 %v1948, 16
        %v2095 = vrot.slane %v2093, 5
        %v2096 = vsel %vm1375, %v2091, %v2095
        %v2097 = vshrl.u32 %v1948, 16
        %v2099 = vrot.slane %v2097, 4
        %v2100 = vor.u32 %v2099, %v2095
        %v2101 = vrot.slane %v2100, 4
        %v2103 = vshll.u32 %v1975, 16
        %v2105 = vrot.slane %v2103, 5
        %v2106 = vsel %vm1375, %v2101, %v2105
        %v2108 = vshrl.u32 %v1949, 16
        %v2110 = vrot.slane %v2108, 4
        %v2111 = vshll.u32 %v1949, 16
        %v2113 = vrot.slane %v2111, 5
        %v2114 = vor.u32 %v2110, %v2113
        %v2115 = vrot.slane %v2114, 4
        %v2117 = vshll.u32 %v1950, 16
        %v2119 = vrot.slane %v2117, 5
        %v2120 = vsel %vm1375, %v2115, %v2119
        %v2121 = vshrl.u32 %v1950, 16
        %v2123 = vrot.slane %v2121, 4
        %v2124 = vor.u32 %v2123, %v2119
        %v2125 = vrot.slane %v2124, 4
        %v2127 = vshll.u32 %v1976, 16
        %v2129 = vrot.slane %v2127, 5
        %v2130 = vsel %vm1375, %v2125, %v2129
        %v2132 = vshrl.u32 %v1951, 16
        %v2134 = vrot.slane %v2132, 4
        %v2135 = vshll.u32 %v1951, 16
        %v2137 = vrot.slane %v2135, 5
        %v2138 = vor.u32 %v2134, %v2137
        %v2139 = vrot.slane %v2138, 4
        %v2141 = vshll.u32 %v1952, 16
        %v2143 = vrot.slane %v2141, 5
        %v2144 = vsel %vm1375, %v2139, %v2143
        %v2145 = vshrl.u32 %v1952, 16
        %v2147 = vrot.slane %v2145, 4
        %v2148 = vor.u32 %v2147, %v2143
        %v2149 = vrot.slane %v2148, 4
        %v2151 = vshll.u32 %v1977, 16
        %v2153 = vrot.slane %v2151, 5
        %v2154 = vsel %vm1375, %v2149, %v2153
        %v2156 = vshrl.u32 %v1953, 16
        %v2158 = vrot.slane %v2156, 4
        %v2159 = vshll.u32 %v1953, 16
        %v2161 = vrot.slane %v2159, 5
        %v2162 = vor.u32 %v2158, %v2161
        %v2163 = vrot.slane %v2162, 4
        %v2165 = vshll.u32 %v1954, 16
        %v2167 = vrot.slane %v2165, 5
        %v2168 = vsel %vm1375, %v2163, %v2167
        %v2169 = vshrl.u32 %v1954, 16
        %v2171 = vrot.slane %v2169, 4
        %v2172 = vor.u32 %v2171, %v2167
        %v2173 = vrot.slane %v2172, 4
        %v2175 = vshll.u32 %v1978, 16
        %v2177 = vrot.slane %v2175, 5
        %v2178 = vsel %vm1375, %v2173, %v2177
        %v2180 = vshrl.u32 %v1955, 16
        %v2182 = vrot.slane %v2180, 4
        %v2183 = vshll.u32 %v1955, 16
        %v2185 = vrot.slane %v2183, 5
        %v2186 = vor.u32 %v2182, %v2185
        %v2187 = vrot.slane %v2186, 4
        %v2189 = vshll.u32 %v1956, 16
        %v2191 = vrot.slane %v2189, 5
        %v2192 = vsel %vm1375, %v2187, %v2191
        %v2193 = vshrl.u32 %v1956, 16
        %v2195 = vrot.slane %v2193, 4
        %v2196 = vor.u32 %v2195, %v2191
        %v2197 = vrot.slane %v2196, 4
        %v2199 = vshll.u32 %v1979, 16
        %v2201 = vrot.slane %v2199, 5
        %v2202 = vsel %vm1375, %v2197, %v2201
        %v2204 = vshrl.u32 %v1957, 16
        %v2206 = vrot.slane %v2204, 4
        %v2207 = vshll.u32 %v1957, 16
        %v2209 = vrot.slane %v2207, 5
        %v2210 = vor.u32 %v2206, %v2209
        %v2211 = vrot.slane %v2210, 4
        %v2213 = vshll.u32 %v1958, 16
        %v2215 = vrot.slane %v2213, 5
        %v2216 = vsel %vm1375, %v2211, %v2215
        %v2217 = vshrl.u32 %v1958, 16
        %v2219 = vrot.slane %v2217, 4
        %v2220 = vor.u32 %v2219, %v2215
        %v2221 = vrot.slane %v2220, 4
        %v2223 = vshll.u32 %v1980, 16
        %v2225 = vrot.slane %v2223, 5
        %v2226 = vsel %vm1375, %v2221, %v2225
        %v2228 = vshrl.u32 %v1959, 16
        %v2230 = vrot.slane %v2228, 4
        %v2231 = vshll.u32 %v1959, 16
        %v2233 = vrot.slane %v2231, 5
        %v2234 = vor.u32 %v2230, %v2233
        %v2235 = vrot.slane %v2234, 4
        %v2237 = vshll.u32 %v1960, 16
        %v2239 = vrot.slane %v2237, 5
        %v2240 = vsel %vm1375, %v2235, %v2239
        %v2241 = vshrl.u32 %v1960, 16
        %v2243 = vrot.slane %v2241, 4
        %v2244 = vor.u32 %v2243, %v2239
        %v2245 = vrot.slane %v2244, 4
        %v2247 = vshll.u32 %v1981, 16
        %v2249 = vrot.slane %v2247, 5
        %v2250 = vsel %vm1375, %v2245, %v2249
        %v2252 = vshrl.u32 %v1961, 16
        %v2254 = vrot.slane %v2252, 4
        %v2255 = vshll.u32 %v1961, 16
        %v2257 = vrot.slane %v2255, 5
        %v2258 = vor.u32 %v2254, %v2257
        %v2259 = vrot.slane %v2258, 4
        %v2261 = vshll.u32 %v1962, 16
        %v2263 = vrot.slane %v2261, 5
        %v2264 = vsel %vm1375, %v2259, %v2263
        %v2265 = vshrl.u32 %v1962, 16
        %v2267 = vrot.slane %v2265, 4
        %v2268 = vor.u32 %v2267, %v2263
        %v2269 = vrot.slane %v2268, 4
        %v2271 = vshll.u32 %v1982, 16
        %v2273 = vrot.slane %v2271, 5
        %v2274 = vsel %vm1375, %v2269, %v2273
        %v2276 = vshrl.u32 %v1963, 16
        %v2278 = vrot.slane %v2276, 4
        %v2279 = vshll.u32 %v1963, 16
        %v2281 = vrot.slane %v2279, 5
        %v2282 = vor.u32 %v2278, %v2281
        %v2283 = vrot.slane %v2282, 4
        %v2285 = vshll.u32 %v1964, 16
        %v2287 = vrot.slane %v2285, 5
        %v2288 = vsel %vm1375, %v2283, %v2287
        %v2289 = vshrl.u32 %v1964, 16
        %v2291 = vrot.slane %v2289, 4
        %v2292 = vor.u32 %v2291, %v2287
        %v2293 = vrot.slane %v2292, 4
        %v2295 = vshll.u32 %v1983, 16
        %v2297 = vrot.slane %v2295, 5
        %v2298 = vsel %vm1375, %v2293, %v2297
        %v2300 = vshrl.u32 %v1965, 16
        %v2302 = vrot.slane %v2300, 4
        %v2303 = vshll.u32 %v1965, 16
        %v2305 = vrot.slane %v2303, 5
        %v2306 = vor.u32 %v2302, %v2305
        %v2307 = vrot.slane %v2306, 4
        %v2309 = vshll.u32 %v1966, 16
        %v2311 = vrot.slane %v2309, 5
        %v2312 = vsel %vm1375, %v2307, %v2311
        %v2313 = vshrl.u32 %v1966, 16
        %v2315 = vrot.slane %v2313, 4
        %v2316 = vor.u32 %v2315, %v2311
        %v2317 = vrot.slane %v2316, 4
        %v2319 = vshll.u32 %v1984, 16
        %v2321 = vrot.slane %v2319, 5
        %v2322 = vsel %vm1375, %v2317, %v2321
        %v2324 = vshrl.u32 %v1967, 16
        %v2326 = vrot.slane %v2324, 4
        %v2327 = vshll.u32 %v1967, 16
        %v2329 = vrot.slane %v2327, 5
        %v2330 = vor.u32 %v2326, %v2329
        %v2331 = vrot.slane %v2330, 4
        %v2333 = vshll.u32 %v1968, 16
        %v2335 = vrot.slane %v2333, 5
        %v2336 = vsel %vm1375, %v2331, %v2335
        %v2337 = vshrl.u32 %v1968, 16
        %v2339 = vrot.slane %v2337, 4
        %v2340 = vor.u32 %v2339, %v2335
        %v2341 = vrot.slane %v2340, 4
        %v2343 = vshll.u32 %v1985, 16
        %v2345 = vrot.slane %v2343, 5
        %v2346 = vsel %vm1375, %v2341, %v2345
        %v2348 = vshrl.u32 %v1969, 16
        %v2350 = vrot.slane %v2348, 4
        %v2351 = vshll.u32 %v1969, 16
        %v2353 = vrot.slane %v2351, 5
        %v2354 = vor.u32 %v2350, %v2353
        %v2355 = vrot.slane %v2354, 4
        %v2357 = vshll.u32 %v1970, 16
        %v2359 = vrot.slane %v2357, 5
        %v2360 = vsel %vm1375, %v2355, %v2359
        %v2361 = vshrl.u32 %v1970, 16
        %v2363 = vrot.slane %v2361, 4
        %v2364 = vor.u32 %v2363, %v2359
        %v2365 = vrot.slane %v2364, 4
        %v2367 = vshll.u32 %v1986, 16
        %v2369 = vrot.slane %v2367, 5
        %v2370 = vsel %vm1375, %v2365, %v2369
        %v2371 = vld [vmem:[%s1276] sm:$0xe]
        %v2372 = vld [vmem:[%s1276 + $0xc] sm:$0xe]
        %v2373 = vld [vmem:[%s1276 + $0x18] sm:$0xe]
        %v2374 = vld [vmem:[%s1276 + $0x24] sm:$0xe]
        %v2375 = vld [vmem:[%s1276 + $0x30] sm:$0xe]
        %v2376 = vld [vmem:[%s1276 + $0x3c] sm:$0xe]
        %v2377 = vld [vmem:[%s1276 + $0x48] sm:$0xe]
        %v2378 = vld [vmem:[%s1276 + $0x54] sm:$0xe]
        %v2379 = vld [vmem:[%s1276 + $0x60] sm:$0xe]
        %v2380 = vld [vmem:[%s1276 + $0x6c] sm:$0xe]
        %v2381 = vld [vmem:[%s1276 + $0x78] sm:$0xe]
        %v2382 = vld [vmem:[%s1276 + $0x84] sm:$0xe]
        %v2383 = vld [vmem:[%s1276 + $0x90] sm:$0xe]
        %v2384 = vld [vmem:[%s1276 + $0x9c] sm:$0xe]
        %v2385 = vld [vmem:[%s1276 + $0xa8] sm:$0xe]
        %v2386 = vld [vmem:[%s1276 + $0xb4] sm:$0xe]
        %v2435 = vrot.slane %v2371, 5
        %v2436 = vrot.slane %v2435, 4
        %v2437 = vrot.slane %v1940, 5
        %v2438 = vsel %vm1826, %v2436, %v2437
        %v2439 = vrot.slane %v2437, 4
        %v2440 = vrot.slane %v1971, 5
        %v2441 = vsel %vm1826, %v2439, %v2440
        %v2442 = vrot.slane %v2372, 5
        %v2443 = vrot.slane %v2442, 4
        %v2444 = vrot.slane %v1942, 5
        %v2445 = vsel %vm1826, %v2443, %v2444
        %v2446 = vrot.slane %v2444, 4
        %v2447 = vrot.slane %v1972, 5
        %v2448 = vsel %vm1826, %v2446, %v2447
        %v2449 = vrot.slane %v2373, 5
        %v2450 = vrot.slane %v2449, 4
        %v2451 = vrot.slane %v1944, 5
        %v2452 = vsel %vm1826, %v2450, %v2451
        %v2453 = vrot.slane %v2451, 4
        %v2454 = vrot.slane %v1973, 5
        %v2455 = vsel %vm1826, %v2453, %v2454
        %v2456 = vrot.slane %v2374, 5
        %v2457 = vrot.slane %v2456, 4
        %v2458 = vrot.slane %v1946, 5
        %v2459 = vsel %vm1826, %v2457, %v2458
        %v2460 = vrot.slane %v2458, 4
        %v2461 = vrot.slane %v1974, 5
        %v2462 = vsel %vm1826, %v2460, %v2461
        %v2463 = vrot.slane %v2375, 5
        %v2464 = vrot.slane %v2463, 4
        %v2465 = vrot.slane %v1948, 5
        %v2466 = vsel %vm1826, %v2464, %v2465
        %v2467 = vrot.slane %v2465, 4
        %v2468 = vrot.slane %v1975, 5
        %v2469 = vsel %vm1826, %v2467, %v2468
        %v2470 = vrot.slane %v2376, 5
        %v2471 = vrot.slane %v2470, 4
        %v2472 = vrot.slane %v1950, 5
        %v2473 = vsel %vm1826, %v2471, %v2472
        %v2474 = vrot.slane %v2472, 4
        %v2475 = vrot.slane %v1976, 5
        %v2476 = vsel %vm1826, %v2474, %v2475
        %v2477 = vrot.slane %v2377, 5
        %v2478 = vrot.slane %v2477, 4
        %v2479 = vrot.slane %v1952, 5
        %v2480 = vsel %vm1826, %v2478, %v2479
        %v2481 = vrot.slane %v2479, 4
        %v2482 = vrot.slane %v1977, 5
        %v2483 = vsel %vm1826, %v2481, %v2482
        %v2484 = vrot.slane %v2378, 5
        %v2485 = vrot.slane %v2484, 4
        %v2486 = vrot.slane %v1954, 5
        %v2487 = vsel %vm1826, %v2485, %v2486
        %v2488 = vrot.slane %v2486, 4
        %v2489 = vrot.slane %v1978, 5
        %v2490 = vsel %vm1826, %v2488, %v2489
        %v2491 = vrot.slane %v2379, 5
        %v2492 = vrot.slane %v2491, 4
        %v2493 = vrot.slane %v1956, 5
        %v2494 = vsel %vm1826, %v2492, %v2493
        %v2495 = vrot.slane %v2493, 4
        %v2496 = vrot.slane %v1979, 5
        %v2497 = vsel %vm1826, %v2495, %v2496
        %v2498 = vrot.slane %v2380, 5
        %v2499 = vrot.slane %v2498, 4
        %v2500 = vrot.slane %v1958, 5
        %v2501 = vsel %vm1826, %v2499, %v2500
        %v2502 = vrot.slane %v2500, 4
        %v2503 = vrot.slane %v1980, 5
        %v2504 = vsel %vm1826, %v2502, %v2503
        %v2505 = vrot.slane %v2381, 5
        %v2506 = vrot.slane %v2505, 4
        %v2507 = vrot.slane %v1960, 5
        %v2508 = vsel %vm1826, %v2506, %v2507
        %v2509 = vrot.slane %v2507, 4
        %v2510 = vrot.slane %v1981, 5
        %v2511 = vsel %vm1826, %v2509, %v2510
        %v2512 = vrot.slane %v2382, 5
        %v2513 = vrot.slane %v2512, 4
        %v2514 = vrot.slane %v1962, 5
        %v2515 = vsel %vm1826, %v2513, %v2514
        %v2516 = vrot.slane %v2514, 4
        %v2517 = vrot.slane %v1982, 5
        %v2518 = vsel %vm1826, %v2516, %v2517
        %v2519 = vrot.slane %v2383, 5
        %v2520 = vrot.slane %v2519, 4
        %v2521 = vrot.slane %v1964, 5
        %v2522 = vsel %vm1826, %v2520, %v2521
        %v2523 = vrot.slane %v2521, 4
        %v2524 = vrot.slane %v1983, 5
        %v2525 = vsel %vm1826, %v2523, %v2524
        %v2526 = vrot.slane %v2384, 5
        %v2527 = vrot.slane %v2526, 4
        %v2528 = vrot.slane %v1966, 5
        %v2529 = vsel %vm1826, %v2527, %v2528
        %v2530 = vrot.slane %v2528, 4
        %v2531 = vrot.slane %v1984, 5
        %v2532 = vsel %vm1826, %v2530, %v2531
        %v2533 = vrot.slane %v2385, 5
        %v2534 = vrot.slane %v2533, 4
        %v2535 = vrot.slane %v1968, 5
        %v2536 = vsel %vm1826, %v2534, %v2535
        %v2537 = vrot.slane %v2535, 4
        %v2538 = vrot.slane %v1985, 5
        %v2539 = vsel %vm1826, %v2537, %v2538
        %v2540 = vrot.slane %v2386, 5
        %v2541 = vrot.slane %v2540, 4
        %v2542 = vrot.slane %v1970, 5
        %v2543 = vsel %vm1826, %v2541, %v2542
        %v2544 = vrot.slane %v2542, 4
        %v2545 = vrot.slane %v1986, 5
        %v2546 = vsel %vm1826, %v2544, %v2545
        %s2547 = scalar_lea.vmem [#allocation2], 24
        %v2548 = vld [vmem:[%s2547] sm:$0xf]
        %v2549 = vld [vmem:[%s2547 + $0x4] sm:$0xf]
        %v2550 = vld [vmem:[%s2547 + $0xc] sm:$0xf]
        %v2551 = vld [vmem:[%s2547 + $0x10] sm:$0xf]
        %v2552 = vld [vmem:[%s2547 + $0x18] sm:$0xf]
        %v2553 = vld [vmem:[%s2547 + $0x1c] sm:$0xf]
        %v2554 = vld [vmem:[%s2547 + $0x24] sm:$0xf]
        %v2555 = vld [vmem:[%s2547 + $0x28] sm:$0xf]
        %v2556 = vld [vmem:[%s2547 + $0x30] sm:$0xf]
        %v2557 = vld [vmem:[%s2547 + $0x34] sm:$0xf]
        %v2558 = vld [vmem:[%s2547 + $0x3c] sm:$0xf]
        %v2559 = vld [vmem:[%s2547 + $0x40] sm:$0xf]
        %v2560 = vld [vmem:[%s2547 + $0x48] sm:$0xf]
        %v2561 = vld [vmem:[%s2547 + $0x4c] sm:$0xf]
        %v2562 = vld [vmem:[%s2547 + $0x54] sm:$0xf]
        %v2563 = vld [vmem:[%s2547 + $0x58] sm:$0xf]
        %v2564 = vld [vmem:[%s2547 + $0x60] sm:$0xf]
        %v2565 = vld [vmem:[%s2547 + $0x64] sm:$0xf]
        %v2566 = vld [vmem:[%s2547 + $0x6c] sm:$0xf]
        %v2567 = vld [vmem:[%s2547 + $0x70] sm:$0xf]
        %v2568 = vld [vmem:[%s2547 + $0x78] sm:$0xf]
        %v2569 = vld [vmem:[%s2547 + $0x7c] sm:$0xf]
        %v2570 = vld [vmem:[%s2547 + $0x84] sm:$0xf]
        %v2571 = vld [vmem:[%s2547 + $0x88] sm:$0xf]
        %v2572 = vld [vmem:[%s2547 + $0x90] sm:$0xf]
        %v2573 = vld [vmem:[%s2547 + $0x94] sm:$0xf]
        %v2574 = vld [vmem:[%s2547 + $0x9c] sm:$0xf]
        %v2575 = vld [vmem:[%s2547 + $0xa0] sm:$0xf]
        %v2576 = vld [vmem:[%s2547 + $0xa8] sm:$0xf]
        %v2577 = vld [vmem:[%s2547 + $0xac] sm:$0xf]
        %v2578 = vld [vmem:[%s2547 + $0xb4] sm:$0xf]
        %v2579 = vld [vmem:[%s2547 + $0xb8] sm:$0xf]
        %v2580 = vld [vmem:[%s2547 + $0x8] sm:$0x1]
        %v2581 = vld [vmem:[%s2547 + $0x14] sm:$0x1]
        %v2582 = vld [vmem:[%s2547 + $0x20] sm:$0x1]
        %v2583 = vld [vmem:[%s2547 + $0x2c] sm:$0x1]
        %v2584 = vld [vmem:[%s2547 + $0x38] sm:$0x1]
        %v2585 = vld [vmem:[%s2547 + $0x44] sm:$0x1]
        %v2586 = vld [vmem:[%s2547 + $0x50] sm:$0x1]
        %v2587 = vld [vmem:[%s2547 + $0x5c] sm:$0x1]
        %v2588 = vld [vmem:[%s2547 + $0x68] sm:$0x1]
        %v2589 = vld [vmem:[%s2547 + $0x74] sm:$0x1]
        %v2590 = vld [vmem:[%s2547 + $0x80] sm:$0x1]
        %v2591 = vld [vmem:[%s2547 + $0x8c] sm:$0x1]
        %v2592 = vld [vmem:[%s2547 + $0x98] sm:$0x1]
        %v2593 = vld [vmem:[%s2547 + $0xa4] sm:$0x1]
        %v2594 = vld [vmem:[%s2547 + $0xb0] sm:$0x1]
        %v2595 = vld [vmem:[%s2547 + $0xbc] sm:$0x1]
        %v2597 = vshrl.u32 %v2548, 16
        %v2599 = vrot.slane %v2597, 4
        %v2600 = vshll.u32 %v2548, 16
        %v2602 = vrot.slane %v2600, 5
        %v2603 = vor.u32 %v2599, %v2602
        %v2604 = vrot.slane %v2603, 4
        %v2606 = vshll.u32 %v2549, 16
        %v2608 = vrot.slane %v2606, 5
        %v2609 = vsel %vm1375, %v2604, %v2608
        %v2610 = vshrl.u32 %v2549, 16
        %v2612 = vrot.slane %v2610, 4
        %v2613 = vor.u32 %v2612, %v2608
        %v2614 = vrot.slane %v2613, 4
        %v2616 = vshll.u32 %v2580, 16
        %v2618 = vrot.slane %v2616, 5
        %v2619 = vsel %vm1375, %v2614, %v2618
        %v2621 = vshrl.u32 %v2550, 16
        %v2623 = vrot.slane %v2621, 4
        %v2624 = vshll.u32 %v2550, 16
        %v2626 = vrot.slane %v2624, 5
        %v2627 = vor.u32 %v2623, %v2626
        %v2628 = vrot.slane %v2627, 4
        %v2630 = vshll.u32 %v2551, 16
        %v2632 = vrot.slane %v2630, 5
        %v2633 = vsel %vm1375, %v2628, %v2632
        %v2634 = vshrl.u32 %v2551, 16
        %v2636 = vrot.slane %v2634, 4
        %v2637 = vor.u32 %v2636, %v2632
        %v2638 = vrot.slane %v2637, 4
        %v2640 = vshll.u32 %v2581, 16
        %v2642 = vrot.slane %v2640, 5
        %v2643 = vsel %vm1375, %v2638, %v2642
        %v2645 = vshrl.u32 %v2552, 16
        %v2647 = vrot.slane %v2645, 4
        %v2648 = vshll.u32 %v2552, 16
        %v2650 = vrot.slane %v2648, 5
        %v2651 = vor.u32 %v2647, %v2650
        %v2652 = vrot.slane %v2651, 4
        %v2654 = vshll.u32 %v2553, 16
        %v2656 = vrot.slane %v2654, 5
        %v2657 = vsel %vm1375, %v2652, %v2656
        %v2658 = vshrl.u32 %v2553, 16
        %v2660 = vrot.slane %v2658, 4
        %v2661 = vor.u32 %v2660, %v2656
        %v2662 = vrot.slane %v2661, 4
        %v2664 = vshll.u32 %v2582, 16
        %v2666 = vrot.slane %v2664, 5
        %v2667 = vsel %vm1375, %v2662, %v2666
        %v2669 = vshrl.u32 %v2554, 16
        %v2671 = vrot.slane %v2669, 4
        %v2672 = vshll.u32 %v2554, 16
        %v2674 = vrot.slane %v2672, 5
        %v2675 = vor.u32 %v2671, %v2674
        %v2676 = vrot.slane %v2675, 4
        %v2678 = vshll.u32 %v2555, 16
        %v2680 = vrot.slane %v2678, 5
        %v2681 = vsel %vm1375, %v2676, %v2680
        %v2682 = vshrl.u32 %v2555, 16
        %v2684 = vrot.slane %v2682, 4
        %v2685 = vor.u32 %v2684, %v2680
        %v2686 = vrot.slane %v2685, 4
        %v2688 = vshll.u32 %v2583, 16
        %v2690 = vrot.slane %v2688, 5
        %v2691 = vsel %vm1375, %v2686, %v2690
        %v2693 = vshrl.u32 %v2556, 16
        %v2695 = vrot.slane %v2693, 4
        %v2696 = vshll.u32 %v2556, 16
        %v2698 = vrot.slane %v2696, 5
        %v2699 = vor.u32 %v2695, %v2698
        %v2700 = vrot.slane %v2699, 4
        %v2702 = vshll.u32 %v2557, 16
        %v2704 = vrot.slane %v2702, 5
        %v2705 = vsel %vm1375, %v2700, %v2704
        %v2706 = vshrl.u32 %v2557, 16
        %v2708 = vrot.slane %v2706, 4
        %v2709 = vor.u32 %v2708, %v2704
        %v2710 = vrot.slane %v2709, 4
        %v2712 = vshll.u32 %v2584, 16
        %v2714 = vrot.slane %v2712, 5
        %v2715 = vsel %vm1375, %v2710, %v2714
        %v2717 = vshrl.u32 %v2558, 16
        %v2719 = vrot.slane %v2717, 4
        %v2720 = vshll.u32 %v2558, 16
        %v2722 = vrot.slane %v2720, 5
        %v2723 = vor.u32 %v2719, %v2722
        %v2724 = vrot.slane %v2723, 4
        %v2726 = vshll.u32 %v2559, 16
        %v2728 = vrot.slane %v2726, 5
        %v2729 = vsel %vm1375, %v2724, %v2728
        %v2730 = vshrl.u32 %v2559, 16
        %v2732 = vrot.slane %v2730, 4
        %v2733 = vor.u32 %v2732, %v2728
        %v2734 = vrot.slane %v2733, 4
        %v2736 = vshll.u32 %v2585, 16
        %v2738 = vrot.slane %v2736, 5
        %v2739 = vsel %vm1375, %v2734, %v2738
        %v2741 = vshrl.u32 %v2560, 16
        %v2743 = vrot.slane %v2741, 4
        %v2744 = vshll.u32 %v2560, 16
        %v2746 = vrot.slane %v2744, 5
        %v2747 = vor.u32 %v2743, %v2746
        %v2748 = vrot.slane %v2747, 4
        %v2750 = vshll.u32 %v2561, 16
        %v2752 = vrot.slane %v2750, 5
        %v2753 = vsel %vm1375, %v2748, %v2752
        %v2754 = vshrl.u32 %v2561, 16
        %v2756 = vrot.slane %v2754, 4
        %v2757 = vor.u32 %v2756, %v2752
        %v2758 = vrot.slane %v2757, 4
        %v2760 = vshll.u32 %v2586, 16
        %v2762 = vrot.slane %v2760, 5
        %v2763 = vsel %vm1375, %v2758, %v2762
        %v2765 = vshrl.u32 %v2562, 16
        %v2767 = vrot.slane %v2765, 4
        %v2768 = vshll.u32 %v2562, 16
        %v2770 = vrot.slane %v2768, 5
        %v2771 = vor.u32 %v2767, %v2770
        %v2772 = vrot.slane %v2771, 4
        %v2774 = vshll.u32 %v2563, 16
        %v2776 = vrot.slane %v2774, 5
        %v2777 = vsel %vm1375, %v2772, %v2776
        %v2778 = vshrl.u32 %v2563, 16
        %v2780 = vrot.slane %v2778, 4
        %v2781 = vor.u32 %v2780, %v2776
        %v2782 = vrot.slane %v2781, 4
        %v2784 = vshll.u32 %v2587, 16
        %v2786 = vrot.slane %v2784, 5
        %v2787 = vsel %vm1375, %v2782, %v2786
        %v2789 = vshrl.u32 %v2564, 16
        %v2791 = vrot.slane %v2789, 4
        %v2792 = vshll.u32 %v2564, 16
        %v2794 = vrot.slane %v2792, 5
        %v2795 = vor.u32 %v2791, %v2794
        %v2796 = vrot.slane %v2795, 4
        %v2798 = vshll.u32 %v2565, 16
        %v2800 = vrot.slane %v2798, 5
        %v2801 = vsel %vm1375, %v2796, %v2800
        %v2802 = vshrl.u32 %v2565, 16
        %v2804 = vrot.slane %v2802, 4
        %v2805 = vor.u32 %v2804, %v2800
        %v2806 = vrot.slane %v2805, 4
        %v2808 = vshll.u32 %v2588, 16
        %v2810 = vrot.slane %v2808, 5
        %v2811 = vsel %vm1375, %v2806, %v2810
        %v2813 = vshrl.u32 %v2566, 16
        %v2815 = vrot.slane %v2813, 4
        %v2816 = vshll.u32 %v2566, 16
        %v2818 = vrot.slane %v2816, 5
        %v2819 = vor.u32 %v2815, %v2818
        %v2820 = vrot.slane %v2819, 4
        %v2822 = vshll.u32 %v2567, 16
        %v2824 = vrot.slane %v2822, 5
        %v2825 = vsel %vm1375, %v2820, %v2824
        %v2826 = vshrl.u32 %v2567, 16
        %v2828 = vrot.slane %v2826, 4
        %v2829 = vor.u32 %v2828, %v2824
        %v2830 = vrot.slane %v2829, 4
        %v2832 = vshll.u32 %v2589, 16
        %v2834 = vrot.slane %v2832, 5
        %v2835 = vsel %vm1375, %v2830, %v2834
        %v2837 = vshrl.u32 %v2568, 16
        %v2839 = vrot.slane %v2837, 4
        %v2840 = vshll.u32 %v2568, 16
        %v2842 = vrot.slane %v2840, 5
        %v2843 = vor.u32 %v2839, %v2842
        %v2844 = vrot.slane %v2843, 4
        %v2846 = vshll.u32 %v2569, 16
        %v2848 = vrot.slane %v2846, 5
        %v2849 = vsel %vm1375, %v2844, %v2848
        %v2850 = vshrl.u32 %v2569, 16
        %v2852 = vrot.slane %v2850, 4
        %v2853 = vor.u32 %v2852, %v2848
        %v2854 = vrot.slane %v2853, 4
        %v2856 = vshll.u32 %v2590, 16
        %v2858 = vrot.slane %v2856, 5
        %v2859 = vsel %vm1375, %v2854, %v2858
        %v2861 = vshrl.u32 %v2570, 16
        %v2863 = vrot.slane %v2861, 4
        %v2864 = vshll.u32 %v2570, 16
        %v2866 = vrot.slane %v2864, 5
        %v2867 = vor.u32 %v2863, %v2866
        %v2868 = vrot.slane %v2867, 4
        %v2870 = vshll.u32 %v2571, 16
        %v2872 = vrot.slane %v2870, 5
        %v2873 = vsel %vm1375, %v2868, %v2872
        %v2874 = vshrl.u32 %v2571, 16
        %v2876 = vrot.slane %v2874, 4
        %v2877 = vor.u32 %v2876, %v2872
        %v2878 = vrot.slane %v2877, 4
        %v2880 = vshll.u32 %v2591, 16
        %v2882 = vrot.slane %v2880, 5
        %v2883 = vsel %vm1375, %v2878, %v2882
        %v2885 = vshrl.u32 %v2572, 16
        %v2887 = vrot.slane %v2885, 4
        %v2888 = vshll.u32 %v2572, 16
        %v2890 = vrot.slane %v2888, 5
        %v2891 = vor.u32 %v2887, %v2890
        %v2892 = vrot.slane %v2891, 4
        %v2894 = vshll.u32 %v2573, 16
        %v2896 = vrot.slane %v2894, 5
        %v2897 = vsel %vm1375, %v2892, %v2896
        %v2898 = vshrl.u32 %v2573, 16
        %v2900 = vrot.slane %v2898, 4
        %v2901 = vor.u32 %v2900, %v2896
        %v2902 = vrot.slane %v2901, 4
        %v2904 = vshll.u32 %v2592, 16
        %v2906 = vrot.slane %v2904, 5
        %v2907 = vsel %vm1375, %v2902, %v2906
        %v2909 = vshrl.u32 %v2574, 16
        %v2911 = vrot.slane %v2909, 4
        %v2912 = vshll.u32 %v2574, 16
        %v2914 = vrot.slane %v2912, 5
        %v2915 = vor.u32 %v2911, %v2914
        %v2916 = vrot.slane %v2915, 4
        %v2918 = vshll.u32 %v2575, 16
        %v2920 = vrot.slane %v2918, 5
        %v2921 = vsel %vm1375, %v2916, %v2920
        %v2922 = vshrl.u32 %v2575, 16
        %v2924 = vrot.slane %v2922, 4
        %v2925 = vor.u32 %v2924, %v2920
        %v2926 = vrot.slane %v2925, 4
        %v2928 = vshll.u32 %v2593, 16
        %v2930 = vrot.slane %v2928, 5
        %v2931 = vsel %vm1375, %v2926, %v2930
        %v2933 = vshrl.u32 %v2576, 16
        %v2935 = vrot.slane %v2933, 4
        %v2936 = vshll.u32 %v2576, 16
        %v2938 = vrot.slane %v2936, 5
        %v2939 = vor.u32 %v2935, %v2938
        %v2940 = vrot.slane %v2939, 4
        %v2942 = vshll.u32 %v2577, 16
        %v2944 = vrot.slane %v2942, 5
        %v2945 = vsel %vm1375, %v2940, %v2944
        %v2946 = vshrl.u32 %v2577, 16
        %v2948 = vrot.slane %v2946, 4
        %v2949 = vor.u32 %v2948, %v2944
        %v2950 = vrot.slane %v2949, 4
        %v2952 = vshll.u32 %v2594, 16
        %v2954 = vrot.slane %v2952, 5
        %v2955 = vsel %vm1375, %v2950, %v2954
        %v2957 = vshrl.u32 %v2578, 16
        %v2959 = vrot.slane %v2957, 4
        %v2960 = vshll.u32 %v2578, 16
        %v2962 = vrot.slane %v2960, 5
        %v2963 = vor.u32 %v2959, %v2962
        %v2964 = vrot.slane %v2963, 4
        %v2966 = vshll.u32 %v2579, 16
        %v2968 = vrot.slane %v2966, 5
        %v2969 = vsel %vm1375, %v2964, %v2968
        %v2970 = vshrl.u32 %v2579, 16
        %v2972 = vrot.slane %v2970, 4
        %v2973 = vor.u32 %v2972, %v2968
        %v2974 = vrot.slane %v2973, 4
        %v2976 = vshll.u32 %v2595, 16
        %v2978 = vrot.slane %v2976, 5
        %v2979 = vsel %vm1375, %v2974, %v2978
        %v2980 = vld [vmem:[%s2547] sm:$0xe]
        %v2981 = vld [vmem:[%s2547 + $0xc] sm:$0xe]
        %v2982 = vld [vmem:[%s2547 + $0x18] sm:$0xe]
        %v2983 = vld [vmem:[%s2547 + $0x24] sm:$0xe]
        %v2984 = vld [vmem:[%s2547 + $0x30] sm:$0xe]
        %v2985 = vld [vmem:[%s2547 + $0x3c] sm:$0xe]
        %v2986 = vld [vmem:[%s2547 + $0x48] sm:$0xe]
        %v2987 = vld [vmem:[%s2547 + $0x54] sm:$0xe]
        %v2988 = vld [vmem:[%s2547 + $0x60] sm:$0xe]
        %v2989 = vld [vmem:[%s2547 + $0x6c] sm:$0xe]
        %v2990 = vld [vmem:[%s2547 + $0x78] sm:$0xe]
        %v2991 = vld [vmem:[%s2547 + $0x84] sm:$0xe]
        %v2992 = vld [vmem:[%s2547 + $0x90] sm:$0xe]
        %v2993 = vld [vmem:[%s2547 + $0x9c] sm:$0xe]
        %v2994 = vld [vmem:[%s2547 + $0xa8] sm:$0xe]
        %v2995 = vld [vmem:[%s2547 + $0xb4] sm:$0xe]
        %v3044 = vrot.slane %v2980, 5
        %v3045 = vrot.slane %v3044, 4
        %v3046 = vrot.slane %v2549, 5
        %v3047 = vsel %vm1826, %v3045, %v3046
        %v3048 = vrot.slane %v3046, 4
        %v3049 = vrot.slane %v2580, 5
        %v3050 = vsel %vm1826, %v3048, %v3049
        %v3051 = vrot.slane %v2981, 5
        %v3052 = vrot.slane %v3051, 4
        %v3053 = vrot.slane %v2551, 5
        %v3054 = vsel %vm1826, %v3052, %v3053
        %v3055 = vrot.slane %v3053, 4
        %v3056 = vrot.slane %v2581, 5
        %v3057 = vsel %vm1826, %v3055, %v3056
        %v3058 = vrot.slane %v2982, 5
        %v3059 = vrot.slane %v3058, 4
        %v3060 = vrot.slane %v2553, 5
        %v3061 = vsel %vm1826, %v3059, %v3060
        %v3062 = vrot.slane %v3060, 4
        %v3063 = vrot.slane %v2582, 5
        %v3064 = vsel %vm1826, %v3062, %v3063
        %v3065 = vrot.slane %v2983, 5
        %v3066 = vrot.slane %v3065, 4
        %v3067 = vrot.slane %v2555, 5
        %v3068 = vsel %vm1826, %v3066, %v3067
        %v3069 = vrot.slane %v3067, 4
        %v3070 = vrot.slane %v2583, 5
        %v3071 = vsel %vm1826, %v3069, %v3070
        %v3072 = vrot.slane %v2984, 5
        %v3073 = vrot.slane %v3072, 4
        %v3074 = vrot.slane %v2557, 5
        %v3075 = vsel %vm1826, %v3073, %v3074
        %v3076 = vrot.slane %v3074, 4
        %v3077 = vrot.slane %v2584, 5
        %v3078 = vsel %vm1826, %v3076, %v3077
        %v3079 = vrot.slane %v2985, 5
        %v3080 = vrot.slane %v3079, 4
        %v3081 = vrot.slane %v2559, 5
        %v3082 = vsel %vm1826, %v3080, %v3081
        %v3083 = vrot.slane %v3081, 4
        %v3084 = vrot.slane %v2585, 5
        %v3085 = vsel %vm1826, %v3083, %v3084
        %v3086 = vrot.slane %v2986, 5
        %v3087 = vrot.slane %v3086, 4
        %v3088 = vrot.slane %v2561, 5
        %v3089 = vsel %vm1826, %v3087, %v3088
        %v3090 = vrot.slane %v3088, 4
        %v3091 = vrot.slane %v2586, 5
        %v3092 = vsel %vm1826, %v3090, %v3091
        %v3093 = vrot.slane %v2987, 5
        %v3094 = vrot.slane %v3093, 4
        %v3095 = vrot.slane %v2563, 5
        %v3096 = vsel %vm1826, %v3094, %v3095
        %v3097 = vrot.slane %v3095, 4
        %v3098 = vrot.slane %v2587, 5
        %v3099 = vsel %vm1826, %v3097, %v3098
        %v3100 = vrot.slane %v2988, 5
        %v3101 = vrot.slane %v3100, 4
        %v3102 = vrot.slane %v2565, 5
        %v3103 = vsel %vm1826, %v3101, %v3102
        %v3104 = vrot.slane %v3102, 4
        %v3105 = vrot.slane %v2588, 5
        %v3106 = vsel %vm1826, %v3104, %v3105
        %v3107 = vrot.slane %v2989, 5
        %v3108 = vrot.slane %v3107, 4
        %v3109 = vrot.slane %v2567, 5
        %v3110 = vsel %vm1826, %v3108, %v3109
        %v3111 = vrot.slane %v3109, 4
        %v3112 = vrot.slane %v2589, 5
        %v3113 = vsel %vm1826, %v3111, %v3112
        %v3114 = vrot.slane %v2990, 5
        %v3115 = vrot.slane %v3114, 4
        %v3116 = vrot.slane %v2569, 5
        %v3117 = vsel %vm1826, %v3115, %v3116
        %v3118 = vrot.slane %v3116, 4
        %v3119 = vrot.slane %v2590, 5
        %v3120 = vsel %vm1826, %v3118, %v3119
        %v3121 = vrot.slane %v2991, 5
        %v3122 = vrot.slane %v3121, 4
        %v3123 = vrot.slane %v2571, 5
        %v3124 = vsel %vm1826, %v3122, %v3123
        %v3125 = vrot.slane %v3123, 4
        %v3126 = vrot.slane %v2591, 5
        %v3127 = vsel %vm1826, %v3125, %v3126
        %v3128 = vrot.slane %v2992, 5
        %v3129 = vrot.slane %v3128, 4
        %v3130 = vrot.slane %v2573, 5
        %v3131 = vsel %vm1826, %v3129, %v3130
        %v3132 = vrot.slane %v3130, 4
        %v3133 = vrot.slane %v2592, 5
        %v3134 = vsel %vm1826, %v3132, %v3133
        %v3135 = vrot.slane %v2993, 5
        %v3136 = vrot.slane %v3135, 4
        %v3137 = vrot.slane %v2575, 5
        %v3138 = vsel %vm1826, %v3136, %v3137
        %v3139 = vrot.slane %v3137, 4
        %v3140 = vrot.slane %v2593, 5
        %v3141 = vsel %vm1826, %v3139, %v3140
        %v3142 = vrot.slane %v2994, 5
        %v3143 = vrot.slane %v3142, 4
        %v3144 = vrot.slane %v2577, 5
        %v3145 = vsel %vm1826, %v3143, %v3144
        %v3146 = vrot.slane %v3144, 4
        %v3147 = vrot.slane %v2594, 5
        %v3148 = vsel %vm1826, %v3146, %v3147
        %v3149 = vrot.slane %v2995, 5
        %v3150 = vrot.slane %v3149, 4
        %v3151 = vrot.slane %v2579, 5
        %v3152 = vsel %vm1826, %v3150, %v3151
        %v3153 = vrot.slane %v3151, 4
        %v3154 = vrot.slane %v2595, 5
        %v3155 = vsel %vm1826, %v3153, %v3154
        %v3172 = vunpack.c.l.b16 %v1325
        %v3173 = vunpack.c.l.b16 %v1326
        %v3174 = vunpack.c.l.b16 %v1327
        %v3175 = vunpack.c.l.b16 %v1328
        %v3176 = vunpack.c.l.b16 %v1329
        %v3177 = vunpack.c.l.b16 %v1330
        %v3178 = vunpack.c.l.b16 %v1331
        %v3179 = vunpack.c.l.b16 %v1332
        %v3180 = vunpack.c.l.b16 %v1333
        %v3181 = vunpack.c.l.b16 %v1334
        %v3182 = vunpack.c.l.b16 %v1335
        %v3183 = vunpack.c.l.b16 %v1336
        %v3184 = vunpack.c.l.b16 %v1337
        %v3185 = vunpack.c.l.b16 %v1338
        %v3186 = vunpack.c.l.b16 %v1339
        %v3187 = vunpack.c.l.b16 %v1340
        %v3188 = vunpack.c.l.b16 %v1341
        %v3189 = vunpack.c.l.b16 %v1342
        %v3190 = vunpack.c.l.b16 %v1343
        %v3191 = vunpack.c.l.b16 %v1344
        %v3192 = vunpack.c.l.b16 %v1345
        %v3193 = vunpack.c.l.b16 %v1346
        %v3194 = vunpack.c.l.b16 %v1347
        %v3195 = vunpack.c.l.b16 %v1348
        %v3196 = vunpack.c.l.b16 %v1349
        %v3197 = vunpack.c.l.b16 %v1350
        %v3198 = vunpack.c.l.b16 %v1351
        %v3199 = vunpack.c.l.b16 %v1352
        %v3200 = vunpack.c.l.b16 %v1353
        %v3201 = vunpack.c.l.b16 %v1354
        %v3202 = vunpack.c.l.b16 %v1355
        %v3203 = vunpack.c.l.b16 %v1356
        %v3204 = vpack.c.b16 %v3173, %v3172
        %v3205 = vpack.c.b16 %v3175, %v3174
        %v3206 = vpack.c.b16 %v3177, %v3176
        %v3207 = vpack.c.b16 %v3179, %v3178
        %v3208 = vpack.c.b16 %v3181, %v3180
        %v3209 = vpack.c.b16 %v3183, %v3182
        %v3210 = vpack.c.b16 %v3185, %v3184
        %v3211 = vpack.c.b16 %v3187, %v3186
        %v3212 = vpack.c.b16 %v3189, %v3188
        %v3213 = vpack.c.b16 %v3191, %v3190
        %v3214 = vpack.c.b16 %v3193, %v3192
        %v3215 = vpack.c.b16 %v3195, %v3194
        %v3216 = vpack.c.b16 %v3197, %v3196
        %v3217 = vpack.c.b16 %v3199, %v3198
        %v3218 = vpack.c.b16 %v3201, %v3200
        %v3219 = vpack.c.b16 %v3203, %v3202
        %v3220 = vunpack.c.l.b16 %v1389
        %v3221 = vunpack.c.l.b16 %v1399
        %v3222 = vunpack.c.l.b16 %v1413
        %v3223 = vunpack.c.l.b16 %v1423
        %v3224 = vunpack.c.l.b16 %v1437
        %v3225 = vunpack.c.l.b16 %v1447
        %v3226 = vunpack.c.l.b16 %v1461
        %v3227 = vunpack.c.l.b16 %v1471
        %v3228 = vunpack.c.l.b16 %v1485
        %v3229 = vunpack.c.l.b16 %v1495
        %v3230 = vunpack.c.l.b16 %v1509
        %v3231 = vunpack.c.l.b16 %v1519
        %v3232 = vunpack.c.l.b16 %v1533
        %v3233 = vunpack.c.l.b16 %v1543
        %v3234 = vunpack.c.l.b16 %v1557
        %v3235 = vunpack.c.l.b16 %v1567
        %v3236 = vunpack.c.l.b16 %v1581
        %v3237 = vunpack.c.l.b16 %v1591
        %v3238 = vunpack.c.l.b16 %v1605
        %v3239 = vunpack.c.l.b16 %v1615
        %v3240 = vunpack.c.l.b16 %v1629
        %v3241 = vunpack.c.l.b16 %v1639
        %v3242 = vunpack.c.l.b16 %v1653
        %v3243 = vunpack.c.l.b16 %v1663
        %v3244 = vunpack.c.l.b16 %v1677
        %v3245 = vunpack.c.l.b16 %v1687
        %v3246 = vunpack.c.l.b16 %v1701
        %v3247 = vunpack.c.l.b16 %v1711
        %v3248 = vunpack.c.l.b16 %v1725
        %v3249 = vunpack.c.l.b16 %v1735
        %v3250 = vunpack.c.l.b16 %v1749
        %v3251 = vunpack.c.l.b16 %v1759
        %v3252 = vpack.c.b16 %v3221, %v3220
        %v3253 = vpack.c.b16 %v3223, %v3222
        %v3254 = vpack.c.b16 %v3225, %v3224
        %v3255 = vpack.c.b16 %v3227, %v3226
        %v3256 = vpack.c.b16 %v3229, %v3228
        %v3257 = vpack.c.b16 %v3231, %v3230
        %v3258 = vpack.c.b16 %v3233, %v3232
        %v3259 = vpack.c.b16 %v3235, %v3234
        %v3260 = vpack.c.b16 %v3237, %v3236
        %v3261 = vpack.c.b16 %v3239, %v3238
        %v3262 = vpack.c.b16 %v3241, %v3240
        %v3263 = vpack.c.b16 %v3243, %v3242
        %v3264 = vpack.c.b16 %v3245, %v3244
        %v3265 = vpack.c.b16 %v3247, %v3246
        %v3266 = vpack.c.b16 %v3249, %v3248
        %v3267 = vpack.c.b16 %v3251, %v3250
        %3268 = vrot.lane.b32.xlu0 %v3252, 32
        %v3269 = vpop.permute.xlu0 %3268
        %3270 = vrot.lane.b32.xlu0 %v3253, 32
        %v3271 = vpop.permute.xlu0 %3270
        %3272 = vrot.lane.b32.xlu0 %v3254, 32
        %v3273 = vpop.permute.xlu0 %3272
        %3274 = vrot.lane.b32.xlu0 %v3255, 32
        %v3275 = vpop.permute.xlu0 %3274
        %3276 = vrot.lane.b32.xlu0 %v3256, 32
        %v3277 = vpop.permute.xlu0 %3276
        %3278 = vrot.lane.b32.xlu0 %v3257, 32
        %v3279 = vpop.permute.xlu0 %3278
        %3280 = vrot.lane.b32.xlu0 %v3258, 32
        %v3281 = vpop.permute.xlu0 %3280
        %3282 = vrot.lane.b32.xlu0 %v3259, 32
        %v3283 = vpop.permute.xlu0 %3282
        %3284 = vrot.lane.b32.xlu0 %v3260, 32
        %v3285 = vpop.permute.xlu0 %3284
        %3286 = vrot.lane.b32.xlu0 %v3261, 32
        %v3287 = vpop.permute.xlu0 %3286
        %3288 = vrot.lane.b32.xlu0 %v3262, 32
        %v3289 = vpop.permute.xlu0 %3288
        %3290 = vrot.lane.b32.xlu0 %v3263, 32
        %v3291 = vpop.permute.xlu0 %3290
        %3292 = vrot.lane.b32.xlu0 %v3264, 32
        %v3293 = vpop.permute.xlu0 %3292
        %3294 = vrot.lane.b32.xlu0 %v3265, 32
        %v3295 = vpop.permute.xlu0 %3294
        %3296 = vrot.lane.b32.xlu0 %v3266, 32
        %v3297 = vpop.permute.xlu0 %3296
        %3298 = vrot.lane.b32.xlu0 %v3267, 32
        %v3299 = vpop.permute.xlu0 %3298
        %v3300 = vunpack.c.l.b16 %v1830
        %v3301 = vunpack.c.l.b16 %v1833
        %v3302 = vunpack.c.l.b16 %v1837
        %v3303 = vunpack.c.l.b16 %v1840
        %v3304 = vunpack.c.l.b16 %v1844
        %v3305 = vunpack.c.l.b16 %v1847
        %v3306 = vunpack.c.l.b16 %v1851
        %v3307 = vunpack.c.l.b16 %v1854
        %v3308 = vunpack.c.l.b16 %v1858
        %v3309 = vunpack.c.l.b16 %v1861
        %v3310 = vunpack.c.l.b16 %v1865
        %v3311 = vunpack.c.l.b16 %v1868
        %v3312 = vunpack.c.l.b16 %v1872
        %v3313 = vunpack.c.l.b16 %v1875
        %v3314 = vunpack.c.l.b16 %v1879
        %v3315 = vunpack.c.l.b16 %v1882
        %v3316 = vunpack.c.l.b16 %v1886
        %v3317 = vunpack.c.l.b16 %v1889
        %v3318 = vunpack.c.l.b16 %v1893
        %v3319 = vunpack.c.l.b16 %v1896
        %v3320 = vunpack.c.l.b16 %v1900
        %v3321 = vunpack.c.l.b16 %v1903
        %v3322 = vunpack.c.l.b16 %v1907
        %v3323 = vunpack.c.l.b16 %v1910
        %v3324 = vunpack.c.l.b16 %v1914
        %v3325 = vunpack.c.l.b16 %v1917
        %v3326 = vunpack.c.l.b16 %v1921
        %v3327 = vunpack.c.l.b16 %v1924
        %v3328 = vunpack.c.l.b16 %v1928
        %v3329 = vunpack.c.l.b16 %v1931
        %v3330 = vunpack.c.l.b16 %v1935
        %v3331 = vunpack.c.l.b16 %v1938
        %v3332 = vpack.c.b16 %v3301, %v3300
        %v3333 = vpack.c.b16 %v3303, %v3302
        %v3334 = vpack.c.b16 %v3305, %v3304
        %v3335 = vpack.c.b16 %v3307, %v3306
        %v3336 = vpack.c.b16 %v3309, %v3308
        %v3337 = vpack.c.b16 %v3311, %v3310
        %v3338 = vpack.c.b16 %v3313, %v3312
        %v3339 = vpack.c.b16 %v3315, %v3314
        %v3340 = vpack.c.b16 %v3317, %v3316
        %v3341 = vpack.c.b16 %v3319, %v3318
        %v3342 = vpack.c.b16 %v3321, %v3320
        %v3343 = vpack.c.b16 %v3323, %v3322
        %v3344 = vpack.c.b16 %v3325, %v3324
        %v3345 = vpack.c.b16 %v3327, %v3326
        %v3346 = vpack.c.b16 %v3329, %v3328
        %v3347 = vpack.c.b16 %v3331, %v3330
        %3348 = vrot.lane.b32.xlu0 %v3332, 64
        %v3349 = vpop.permute.xlu0 %3348
        %3350 = vrot.lane.b32.xlu0 %v3333, 64
        %v3351 = vpop.permute.xlu0 %3350
        %3352 = vrot.lane.b32.xlu0 %v3334, 64
        %v3353 = vpop.permute.xlu0 %3352
        %3354 = vrot.lane.b32.xlu0 %v3335, 64
        %v3355 = vpop.permute.xlu0 %3354
        %3356 = vrot.lane.b32.xlu0 %v3336, 64
        %v3357 = vpop.permute.xlu0 %3356
        %3358 = vrot.lane.b32.xlu0 %v3337, 64
        %v3359 = vpop.permute.xlu0 %3358
        %3360 = vrot.lane.b32.xlu0 %v3338, 64
        %v3361 = vpop.permute.xlu0 %3360
        %3362 = vrot.lane.b32.xlu0 %v3339, 64
        %v3363 = vpop.permute.xlu0 %3362
        %3364 = vrot.lane.b32.xlu0 %v3340, 64
        %v3365 = vpop.permute.xlu0 %3364
        %3366 = vrot.lane.b32.xlu0 %v3341, 64
        %v3367 = vpop.permute.xlu0 %3366
        %3368 = vrot.lane.b32.xlu0 %v3342, 64
        %v3369 = vpop.permute.xlu0 %3368
        %3370 = vrot.lane.b32.xlu0 %v3343, 64
        %v3371 = vpop.permute.xlu0 %3370
        %3372 = vrot.lane.b32.xlu0 %v3344, 64
        %v3373 = vpop.permute.xlu0 %3372
        %3374 = vrot.lane.b32.xlu0 %v3345, 64
        %v3375 = vpop.permute.xlu0 %3374
        %3376 = vrot.lane.b32.xlu0 %v3346, 64
        %v3377 = vpop.permute.xlu0 %3376
        %3378 = vrot.lane.b32.xlu0 %v3347, 64
        %v3379 = vpop.permute.xlu0 %3378
        %v3396 = vunpack.c.l.b16 %v1939
        %v3397 = vunpack.c.l.b16 %v1940
        %v3398 = vunpack.c.l.b16 %v1941
        %v3399 = vunpack.c.l.b16 %v1942
        %v3400 = vunpack.c.l.b16 %v1943
        %v3401 = vunpack.c.l.b16 %v1944
        %v3402 = vunpack.c.l.b16 %v1945
        %v3403 = vunpack.c.l.b16 %v1946
        %v3404 = vunpack.c.l.b16 %v1947
        %v3405 = vunpack.c.l.b16 %v1948
        %v3406 = vunpack.c.l.b16 %v1949
        %v3407 = vunpack.c.l.b16 %v1950
        %v3408 = vunpack.c.l.b16 %v1951
        %v3409 = vunpack.c.l.b16 %v1952
        %v3410 = vunpack.c.l.b16 %v1953
        %v3411 = vunpack.c.l.b16 %v1954
        %v3412 = vunpack.c.l.b16 %v1955
        %v3413 = vunpack.c.l.b16 %v1956
        %v3414 = vunpack.c.l.b16 %v1957
        %v3415 = vunpack.c.l.b16 %v1958
        %v3416 = vunpack.c.l.b16 %v1959
        %v3417 = vunpack.c.l.b16 %v1960
        %v3418 = vunpack.c.l.b16 %v1961
        %v3419 = vunpack.c.l.b16 %v1962
        %v3420 = vunpack.c.l.b16 %v1963
        %v3421 = vunpack.c.l.b16 %v1964
        %v3422 = vunpack.c.l.b16 %v1965
        %v3423 = vunpack.c.l.b16 %v1966
        %v3424 = vunpack.c.l.b16 %v1967
        %v3425 = vunpack.c.l.b16 %v1968
        %v3426 = vunpack.c.l.b16 %v1969
        %v3427 = vunpack.c.l.b16 %v1970
        %v3428 = vpack.c.b16 %v3397, %v3396
        %v3429 = vpack.c.b16 %v3399, %v3398
        %v3430 = vpack.c.b16 %v3401, %v3400
        %v3431 = vpack.c.b16 %v3403, %v3402
        %v3432 = vpack.c.b16 %v3405, %v3404
        %v3433 = vpack.c.b16 %v3407, %v3406
        %v3434 = vpack.c.b16 %v3409, %v3408
        %v3435 = vpack.c.b16 %v3411, %v3410
        %v3436 = vpack.c.b16 %v3413, %v3412
        %v3437 = vpack.c.b16 %v3415, %v3414
        %v3438 = vpack.c.b16 %v3417, %v3416
        %v3439 = vpack.c.b16 %v3419, %v3418
        %v3440 = vpack.c.b16 %v3421, %v3420
        %v3441 = vpack.c.b16 %v3423, %v3422
        %v3442 = vpack.c.b16 %v3425, %v3424
        %v3443 = vpack.c.b16 %v3427, %v3426
        %3444 = vrot.lane.b32.xlu0 %v3428, 96
        %v3445 = vpop.permute.xlu0 %3444
        %3446 = vrot.lane.b32.xlu0 %v3429, 96
        %v3447 = vpop.permute.xlu0 %3446
        %3448 = vrot.lane.b32.xlu0 %v3430, 96
        %v3449 = vpop.permute.xlu0 %3448
        %3450 = vrot.lane.b32.xlu0 %v3431, 96
        %v3451 = vpop.permute.xlu0 %3450
        %3452 = vrot.lane.b32.xlu0 %v3432, 96
        %v3453 = vpop.permute.xlu0 %3452
        %3454 = vrot.lane.b32.xlu0 %v3433, 96
        %v3455 = vpop.permute.xlu0 %3454
        %3456 = vrot.lane.b32.xlu0 %v3434, 96
        %v3457 = vpop.permute.xlu0 %3456
        %3458 = vrot.lane.b32.xlu0 %v3435, 96
        %v3459 = vpop.permute.xlu0 %3458
        %3460 = vrot.lane.b32.xlu0 %v3436, 96
        %v3461 = vpop.permute.xlu0 %3460
        %3462 = vrot.lane.b32.xlu0 %v3437, 96
        %v3463 = vpop.permute.xlu0 %3462
        %3464 = vrot.lane.b32.xlu0 %v3438, 96
        %v3465 = vpop.permute.xlu0 %3464
        %3466 = vrot.lane.b32.xlu0 %v3439, 96
        %v3467 = vpop.permute.xlu0 %3466
        %3468 = vrot.lane.b32.xlu0 %v3440, 96
        %v3469 = vpop.permute.xlu0 %3468
        %3470 = vrot.lane.b32.xlu0 %v3441, 96
        %v3471 = vpop.permute.xlu0 %3470
        %3472 = vrot.lane.b32.xlu0 %v3442, 96
        %v3473 = vpop.permute.xlu0 %3472
        %3474 = vrot.lane.b32.xlu0 %v3443, 96
        %v3475 = vpop.permute.xlu0 %3474
        %v3476 = vunpack.c.l.b16 %v2000
        %v3477 = vunpack.c.l.b16 %v2010
        %v3478 = vunpack.c.l.b16 %v2024
        %v3479 = vunpack.c.l.b16 %v2034
        %v3480 = vunpack.c.l.b16 %v2048
        %v3481 = vunpack.c.l.b16 %v2058
        %v3482 = vunpack.c.l.b16 %v2072
        %v3483 = vunpack.c.l.b16 %v2082
        %v3484 = vunpack.c.l.b16 %v2096
        %v3485 = vunpack.c.l.b16 %v2106
        %v3486 = vunpack.c.l.b16 %v2120
        %v3487 = vunpack.c.l.b16 %v2130
        %v3488 = vunpack.c.l.b16 %v2144
        %v3489 = vunpack.c.l.b16 %v2154
        %v3490 = vunpack.c.l.b16 %v2168
        %v3491 = vunpack.c.l.b16 %v2178
        %v3492 = vunpack.c.l.b16 %v2192
        %v3493 = vunpack.c.l.b16 %v2202
        %v3494 = vunpack.c.l.b16 %v2216
        %v3495 = vunpack.c.l.b16 %v2226
        %v3496 = vunpack.c.l.b16 %v2240
        %v3497 = vunpack.c.l.b16 %v2250
        %v3498 = vunpack.c.l.b16 %v2264
        %v3499 = vunpack.c.l.b16 %v2274
        %v3500 = vunpack.c.l.b16 %v2288
        %v3501 = vunpack.c.l.b16 %v2298
        %v3502 = vunpack.c.l.b16 %v2312
        %v3503 = vunpack.c.l.b16 %v2322
        %v3504 = vunpack.c.l.b16 %v2336
        %v3505 = vunpack.c.l.b16 %v2346
        %v3506 = vunpack.c.l.b16 %v2360
        %v3507 = vunpack.c.l.b16 %v2370
        %v3508 = vpack.c.b16 %v3477, %v3476
        %v3509 = vpack.c.b16 %v3479, %v3478
        %v3510 = vpack.c.b16 %v3481, %v3480
        %v3511 = vpack.c.b16 %v3483, %v3482
        %v3512 = vpack.c.b16 %v3485, %v3484
        %v3513 = vpack.c.b16 %v3487, %v3486
        %v3514 = vpack.c.b16 %v3489, %v3488
        %v3515 = vpack.c.b16 %v3491, %v3490
        %v3516 = vpack.c.b16 %v3493, %v3492
        %v3517 = vpack.c.b16 %v3495, %v3494
        %v3518 = vpack.c.b16 %v3497, %v3496
        %v3519 = vpack.c.b16 %v3499, %v3498
        %v3520 = vpack.c.b16 %v3501, %v3500
        %v3521 = vpack.c.b16 %v3503, %v3502
        %v3522 = vpack.c.b16 %v3505, %v3504
        %v3523 = vpack.c.b16 %v3507, %v3506
        %v3524 = vunpack.c.l.b16 %v2438
        %v3525 = vunpack.c.l.b16 %v2441
        %v3526 = vunpack.c.l.b16 %v2445
        %v3527 = vunpack.c.l.b16 %v2448
        %v3528 = vunpack.c.l.b16 %v2452
        %v3529 = vunpack.c.l.b16 %v2455
        %v3530 = vunpack.c.l.b16 %v2459
        %v3531 = vunpack.c.l.b16 %v2462
        %v3532 = vunpack.c.l.b16 %v2466
        %v3533 = vunpack.c.l.b16 %v2469
        %v3534 = vunpack.c.l.b16 %v2473
        %v3535 = vunpack.c.l.b16 %v2476
        %v3536 = vunpack.c.l.b16 %v2480
        %v3537 = vunpack.c.l.b16 %v2483
        %v3538 = vunpack.c.l.b16 %v2487
        %v3539 = vunpack.c.l.b16 %v2490
        %v3540 = vunpack.c.l.b16 %v2494
        %v3541 = vunpack.c.l.b16 %v2497
        %v3542 = vunpack.c.l.b16 %v2501
        %v3543 = vunpack.c.l.b16 %v2504
        %v3544 = vunpack.c.l.b16 %v2508
        %v3545 = vunpack.c.l.b16 %v2511
        %v3546 = vunpack.c.l.b16 %v2515
        %v3547 = vunpack.c.l.b16 %v2518
        %v3548 = vunpack.c.l.b16 %v2522
        %v3549 = vunpack.c.l.b16 %v2525
        %v3550 = vunpack.c.l.b16 %v2529
        %v3551 = vunpack.c.l.b16 %v2532
        %v3552 = vunpack.c.l.b16 %v2536
        %v3553 = vunpack.c.l.b16 %v2539
        %v3554 = vunpack.c.l.b16 %v2543
        %v3555 = vunpack.c.l.b16 %v2546
        %v3556 = vpack.c.b16 %v3525, %v3524
        %v3557 = vpack.c.b16 %v3527, %v3526
        %v3558 = vpack.c.b16 %v3529, %v3528
        %v3559 = vpack.c.b16 %v3531, %v3530
        %v3560 = vpack.c.b16 %v3533, %v3532
        %v3561 = vpack.c.b16 %v3535, %v3534
        %v3562 = vpack.c.b16 %v3537, %v3536
        %v3563 = vpack.c.b16 %v3539, %v3538
        %v3564 = vpack.c.b16 %v3541, %v3540
        %v3565 = vpack.c.b16 %v3543, %v3542
        %v3566 = vpack.c.b16 %v3545, %v3544
        %v3567 = vpack.c.b16 %v3547, %v3546
        %v3568 = vpack.c.b16 %v3549, %v3548
        %v3569 = vpack.c.b16 %v3551, %v3550
        %v3570 = vpack.c.b16 %v3553, %v3552
        %v3571 = vpack.c.b16 %v3555, %v3554
        %3572 = vrot.lane.b32.xlu0 %v3556, 32
        %v3573 = vpop.permute.xlu0 %3572
        %3574 = vrot.lane.b32.xlu0 %v3557, 32
        %v3575 = vpop.permute.xlu0 %3574
        %3576 = vrot.lane.b32.xlu0 %v3558, 32
        %v3577 = vpop.permute.xlu0 %3576
        %3578 = vrot.lane.b32.xlu0 %v3559, 32
        %v3579 = vpop.permute.xlu0 %3578
        %3580 = vrot.lane.b32.xlu0 %v3560, 32
        %v3581 = vpop.permute.xlu0 %3580
        %3582 = vrot.lane.b32.xlu0 %v3561, 32
        %v3583 = vpop.permute.xlu0 %3582
        %3584 = vrot.lane.b32.xlu0 %v3562, 32
        %v3585 = vpop.permute.xlu0 %3584
        %3586 = vrot.lane.b32.xlu0 %v3563, 32
        %v3587 = vpop.permute.xlu0 %3586
        %3588 = vrot.lane.b32.xlu0 %v3564, 32
        %v3589 = vpop.permute.xlu0 %3588
        %3590 = vrot.lane.b32.xlu0 %v3565, 32
        %v3591 = vpop.permute.xlu0 %3590
        %3592 = vrot.lane.b32.xlu0 %v3566, 32
        %v3593 = vpop.permute.xlu0 %3592
        %3594 = vrot.lane.b32.xlu0 %v3567, 32
        %v3595 = vpop.permute.xlu0 %3594
        %3596 = vrot.lane.b32.xlu0 %v3568, 32
        %v3597 = vpop.permute.xlu0 %3596
        %3598 = vrot.lane.b32.xlu0 %v3569, 32
        %v3599 = vpop.permute.xlu0 %3598
        %3600 = vrot.lane.b32.xlu0 %v3570, 32
        %v3601 = vpop.permute.xlu0 %3600
        %3602 = vrot.lane.b32.xlu0 %v3571, 32
        %v3603 = vpop.permute.xlu0 %3602
        %v3620 = vunpack.c.l.b16 %v2548
        %v3621 = vunpack.c.l.b16 %v2549
        %v3622 = vunpack.c.l.b16 %v2550
        %v3623 = vunpack.c.l.b16 %v2551
        %v3624 = vunpack.c.l.b16 %v2552
        %v3625 = vunpack.c.l.b16 %v2553
        %v3626 = vunpack.c.l.b16 %v2554
        %v3627 = vunpack.c.l.b16 %v2555
        %v3628 = vunpack.c.l.b16 %v2556
        %v3629 = vunpack.c.l.b16 %v2557
        %v3630 = vunpack.c.l.b16 %v2558
        %v3631 = vunpack.c.l.b16 %v2559
        %v3632 = vunpack.c.l.b16 %v2560
        %v3633 = vunpack.c.l.b16 %v2561
        %v3634 = vunpack.c.l.b16 %v2562
        %v3635 = vunpack.c.l.b16 %v2563
        %v3636 = vunpack.c.l.b16 %v2564
        %v3637 = vunpack.c.l.b16 %v2565
        %v3638 = vunpack.c.l.b16 %v2566
        %v3639 = vunpack.c.l.b16 %v2567
        %v3640 = vunpack.c.l.b16 %v2568
        %v3641 = vunpack.c.l.b16 %v2569
        %v3642 = vunpack.c.l.b16 %v2570
        %v3643 = vunpack.c.l.b16 %v2571
        %v3644 = vunpack.c.l.b16 %v2572
        %v3645 = vunpack.c.l.b16 %v2573
        %v3646 = vunpack.c.l.b16 %v2574
        %v3647 = vunpack.c.l.b16 %v2575
        %v3648 = vunpack.c.l.b16 %v2576
        %v3649 = vunpack.c.l.b16 %v2577
        %v3650 = vunpack.c.l.b16 %v2578
        %v3651 = vunpack.c.l.b16 %v2579
        %v3652 = vpack.c.b16 %v3621, %v3620
        %v3653 = vpack.c.b16 %v3623, %v3622
        %v3654 = vpack.c.b16 %v3625, %v3624
        %v3655 = vpack.c.b16 %v3627, %v3626
        %v3656 = vpack.c.b16 %v3629, %v3628
        %v3657 = vpack.c.b16 %v3631, %v3630
        %v3658 = vpack.c.b16 %v3633, %v3632
        %v3659 = vpack.c.b16 %v3635, %v3634
        %v3660 = vpack.c.b16 %v3637, %v3636
        %v3661 = vpack.c.b16 %v3639, %v3638
        %v3662 = vpack.c.b16 %v3641, %v3640
        %v3663 = vpack.c.b16 %v3643, %v3642
        %v3664 = vpack.c.b16 %v3645, %v3644
        %v3665 = vpack.c.b16 %v3647, %v3646
        %v3666 = vpack.c.b16 %v3649, %v3648
        %v3667 = vpack.c.b16 %v3651, %v3650
        %3668 = vrot.lane.b32.xlu0 %v3652, 64
        %v3669 = vpop.permute.xlu0 %3668
        %3670 = vrot.lane.b32.xlu0 %v3653, 64
        %v3671 = vpop.permute.xlu0 %3670
        %3672 = vrot.lane.b32.xlu0 %v3654, 64
        %v3673 = vpop.permute.xlu0 %3672
        %3674 = vrot.lane.b32.xlu0 %v3655, 64
        %v3675 = vpop.permute.xlu0 %3674
        %3676 = vrot.lane.b32.xlu0 %v3656, 64
        %v3677 = vpop.permute.xlu0 %3676
        %3678 = vrot.lane.b32.xlu0 %v3657, 64
        %v3679 = vpop.permute.xlu0 %3678
        %3680 = vrot.lane.b32.xlu0 %v3658, 64
        %v3681 = vpop.permute.xlu0 %3680
        %3682 = vrot.lane.b32.xlu0 %v3659, 64
        %v3683 = vpop.permute.xlu0 %3682
        %3684 = vrot.lane.b32.xlu0 %v3660, 64
        %v3685 = vpop.permute.xlu0 %3684
        %3686 = vrot.lane.b32.xlu0 %v3661, 64
        %v3687 = vpop.permute.xlu0 %3686
        %3688 = vrot.lane.b32.xlu0 %v3662, 64
        %v3689 = vpop.permute.xlu0 %3688
        %3690 = vrot.lane.b32.xlu0 %v3663, 64
        %v3691 = vpop.permute.xlu0 %3690
        %3692 = vrot.lane.b32.xlu0 %v3664, 64
        %v3693 = vpop.permute.xlu0 %3692
        %3694 = vrot.lane.b32.xlu0 %v3665, 64
        %v3695 = vpop.permute.xlu0 %3694
        %3696 = vrot.lane.b32.xlu0 %v3666, 64
        %v3697 = vpop.permute.xlu0 %3696
        %3698 = vrot.lane.b32.xlu0 %v3667, 64
        %v3699 = vpop.permute.xlu0 %3698
        %v3700 = vunpack.c.l.b16 %v2609
        %v3701 = vunpack.c.l.b16 %v2619
        %v3702 = vunpack.c.l.b16 %v2633
        %v3703 = vunpack.c.l.b16 %v2643
        %v3704 = vunpack.c.l.b16 %v2657
        %v3705 = vunpack.c.l.b16 %v2667
        %v3706 = vunpack.c.l.b16 %v2681
        %v3707 = vunpack.c.l.b16 %v2691
        %v3708 = vunpack.c.l.b16 %v2705
        %v3709 = vunpack.c.l.b16 %v2715
        %v3710 = vunpack.c.l.b16 %v2729
        %v3711 = vunpack.c.l.b16 %v2739
        %v3712 = vunpack.c.l.b16 %v2753
        %v3713 = vunpack.c.l.b16 %v2763
        %v3714 = vunpack.c.l.b16 %v2777
        %v3715 = vunpack.c.l.b16 %v2787
        %v3716 = vunpack.c.l.b16 %v2801
        %v3717 = vunpack.c.l.b16 %v2811
        %v3718 = vunpack.c.l.b16 %v2825
        %v3719 = vunpack.c.l.b16 %v2835
        %v3720 = vunpack.c.l.b16 %v2849
        %v3721 = vunpack.c.l.b16 %v2859
        %v3722 = vunpack.c.l.b16 %v2873
        %v3723 = vunpack.c.l.b16 %v2883
        %v3724 = vunpack.c.l.b16 %v2897
        %v3725 = vunpack.c.l.b16 %v2907
        %v3726 = vunpack.c.l.b16 %v2921
        %v3727 = vunpack.c.l.b16 %v2931
        %v3728 = vunpack.c.l.b16 %v2945
        %v3729 = vunpack.c.l.b16 %v2955
        %v3730 = vunpack.c.l.b16 %v2969
        %v3731 = vunpack.c.l.b16 %v2979
        %v3732 = vpack.c.b16 %v3701, %v3700
        %v3733 = vpack.c.b16 %v3703, %v3702
        %v3734 = vpack.c.b16 %v3705, %v3704
        %v3735 = vpack.c.b16 %v3707, %v3706
        %v3736 = vpack.c.b16 %v3709, %v3708
        %v3737 = vpack.c.b16 %v3711, %v3710
        %v3738 = vpack.c.b16 %v3713, %v3712
        %v3739 = vpack.c.b16 %v3715, %v3714
        %v3740 = vpack.c.b16 %v3717, %v3716
        %v3741 = vpack.c.b16 %v3719, %v3718
        %v3742 = vpack.c.b16 %v3721, %v3720
        %v3743 = vpack.c.b16 %v3723, %v3722
        %v3744 = vpack.c.b16 %v3725, %v3724
        %v3745 = vpack.c.b16 %v3727, %v3726
        %v3746 = vpack.c.b16 %v3729, %v3728
        %v3747 = vpack.c.b16 %v3731, %v3730
        %3748 = vrot.lane.b32.xlu0 %v3732, 96
        %v3749 = vpop.permute.xlu0 %3748
        %3750 = vrot.lane.b32.xlu0 %v3733, 96
        %v3751 = vpop.permute.xlu0 %3750
        %3752 = vrot.lane.b32.xlu0 %v3734, 96
        %v3753 = vpop.permute.xlu0 %3752
        %3754 = vrot.lane.b32.xlu0 %v3735, 96
        %v3755 = vpop.permute.xlu0 %3754
        %3756 = vrot.lane.b32.xlu0 %v3736, 96
        %v3757 = vpop.permute.xlu0 %3756
        %3758 = vrot.lane.b32.xlu0 %v3737, 96
        %v3759 = vpop.permute.xlu0 %3758
        %3760 = vrot.lane.b32.xlu0 %v3738, 96
        %v3761 = vpop.permute.xlu0 %3760
        %3762 = vrot.lane.b32.xlu0 %v3739, 96
        %v3763 = vpop.permute.xlu0 %3762
        %3764 = vrot.lane.b32.xlu0 %v3740, 96
        %v3765 = vpop.permute.xlu0 %3764
        %3766 = vrot.lane.b32.xlu0 %v3741, 96
        %v3767 = vpop.permute.xlu0 %3766
        %3768 = vrot.lane.b32.xlu0 %v3742, 96
        %v3769 = vpop.permute.xlu0 %3768
        %3770 = vrot.lane.b32.xlu0 %v3743, 96
        %v3771 = vpop.permute.xlu0 %3770
        %3772 = vrot.lane.b32.xlu0 %v3744, 96
        %v3773 = vpop.permute.xlu0 %3772
        %3774 = vrot.lane.b32.xlu0 %v3745, 96
        %v3775 = vpop.permute.xlu0 %3774
        %3776 = vrot.lane.b32.xlu0 %v3746, 96
        %v3777 = vpop.permute.xlu0 %3776
        %3778 = vrot.lane.b32.xlu0 %v3747, 96
        %v3779 = vpop.permute.xlu0 %3778
        %v3780 = vunpack.c.l.b16 %v3047
        %v3781 = vunpack.c.l.b16 %v3050
        %v3782 = vunpack.c.l.b16 %v3054
        %v3783 = vunpack.c.l.b16 %v3057
        %v3784 = vunpack.c.l.b16 %v3061
        %v3785 = vunpack.c.l.b16 %v3064
        %v3786 = vunpack.c.l.b16 %v3068
        %v3787 = vunpack.c.l.b16 %v3071
        %v3788 = vunpack.c.l.b16 %v3075
        %v3789 = vunpack.c.l.b16 %v3078
        %v3790 = vunpack.c.l.b16 %v3082
        %v3791 = vunpack.c.l.b16 %v3085
        %v3792 = vunpack.c.l.b16 %v3089
        %v3793 = vunpack.c.l.b16 %v3092
        %v3794 = vunpack.c.l.b16 %v3096
        %v3795 = vunpack.c.l.b16 %v3099
        %v3796 = vunpack.c.l.b16 %v3103
        %v3797 = vunpack.c.l.b16 %v3106
        %v3798 = vunpack.c.l.b16 %v3110
        %v3799 = vunpack.c.l.b16 %v3113
        %v3800 = vunpack.c.l.b16 %v3117
        %v3801 = vunpack.c.l.b16 %v3120
        %v3802 = vunpack.c.l.b16 %v3124
        %v3803 = vunpack.c.l.b16 %v3127
        %v3804 = vunpack.c.l.b16 %v3131
        %v3805 = vunpack.c.l.b16 %v3134
        %v3806 = vunpack.c.l.b16 %v3138
        %v3807 = vunpack.c.l.b16 %v3141
        %v3808 = vunpack.c.l.b16 %v3145
        %v3809 = vunpack.c.l.b16 %v3148
        %v3810 = vunpack.c.l.b16 %v3152
        %v3811 = vunpack.c.l.b16 %v3155
        %v3812 = vpack.c.b16 %v3781, %v3780
        %v3813 = vpack.c.b16 %v3783, %v3782
        %v3814 = vpack.c.b16 %v3785, %v3784
        %v3815 = vpack.c.b16 %v3787, %v3786
        %v3816 = vpack.c.b16 %v3789, %v3788
        %v3817 = vpack.c.b16 %v3791, %v3790
        %v3818 = vpack.c.b16 %v3793, %v3792
        %v3819 = vpack.c.b16 %v3795, %v3794
        %v3820 = vpack.c.b16 %v3797, %v3796
        %v3821 = vpack.c.b16 %v3799, %v3798
        %v3822 = vpack.c.b16 %v3801, %v3800
        %v3823 = vpack.c.b16 %v3803, %v3802
        %v3824 = vpack.c.b16 %v3805, %v3804
        %v3825 = vpack.c.b16 %v3807, %v3806
        %v3826 = vpack.c.b16 %v3809, %v3808
        %v3827 = vpack.c.b16 %v3811, %v3810
        %vm3828 = vcmask 261120
        %v3831 = vsel %vm3828, %v3204, %v3269
        %v3834 = vsel %vm3828, %v3205, %v3271
        %v3837 = vsel %vm3828, %v3206, %v3273
        %v3840 = vsel %vm3828, %v3207, %v3275
        %v3843 = vsel %vm3828, %v3208, %v3277
        %v3846 = vsel %vm3828, %v3209, %v3279
        %v3849 = vsel %vm3828, %v3210, %v3281
        %v3852 = vsel %vm3828, %v3211, %v3283
        %v3855 = vsel %vm3828, %v3212, %v3285
        %v3858 = vsel %vm3828, %v3213, %v3287
        %v3861 = vsel %vm3828, %v3214, %v3289
        %v3864 = vsel %vm3828, %v3215, %v3291
        %v3867 = vsel %vm3828, %v3216, %v3293
        %v3870 = vsel %vm3828, %v3217, %v3295
        %v3873 = vsel %vm3828, %v3218, %v3297
        %v3876 = vsel %vm3828, %v3219, %v3299
        %vm3877 = vcmask 523264
        %v3879 = vsel %vm3877, %v3831, %v3349
        %v3881 = vsel %vm3877, %v3834, %v3351
        %v3883 = vsel %vm3877, %v3837, %v3353
        %v3885 = vsel %vm3877, %v3840, %v3355
        %v3887 = vsel %vm3877, %v3843, %v3357
        %v3889 = vsel %vm3877, %v3846, %v3359
        %v3891 = vsel %vm3877, %v3849, %v3361
        %v3893 = vsel %vm3877, %v3852, %v3363
        %v3895 = vsel %vm3877, %v3855, %v3365
        %v3897 = vsel %vm3877, %v3858, %v3367
        %v3899 = vsel %vm3877, %v3861, %v3369
        %v3901 = vsel %vm3877, %v3864, %v3371
        %v3903 = vsel %vm3877, %v3867, %v3373
        %v3905 = vsel %vm3877, %v3870, %v3375
        %v3907 = vsel %vm3877, %v3873, %v3377
        %v3909 = vsel %vm3877, %v3876, %v3379
        %vm3910 = vcmask 785408
        %v3912 = vsel %vm3910, %v3879, %v3445
        %v3915 = vsel %vm3910, %v3881, %v3447
        %v3918 = vsel %vm3910, %v3883, %v3449
        %v3921 = vsel %vm3910, %v3885, %v3451
        %v3924 = vsel %vm3910, %v3887, %v3453
        %v3927 = vsel %vm3910, %v3889, %v3455
        %v3930 = vsel %vm3910, %v3891, %v3457
        %v3933 = vsel %vm3910, %v3893, %v3459
        %v3936 = vsel %vm3910, %v3895, %v3461
        %v3939 = vsel %vm3910, %v3897, %v3463
        %v3942 = vsel %vm3910, %v3899, %v3465
        %v3945 = vsel %vm3910, %v3901, %v3467
        %v3948 = vsel %vm3910, %v3903, %v3469
        %v3951 = vsel %vm3910, %v3905, %v3471
        %v3954 = vsel %vm3910, %v3907, %v3473
        %v3957 = vsel %vm3910, %v3909, %v3475
        %v3961 = vsel %vm3828, %v3508, %v3573
        %v3964 = vsel %vm3828, %v3509, %v3575
        %v3967 = vsel %vm3828, %v3510, %v3577
        %v3970 = vsel %vm3828, %v3511, %v3579
        %v3973 = vsel %vm3828, %v3512, %v3581
        %v3976 = vsel %vm3828, %v3513, %v3583
        %v3979 = vsel %vm3828, %v3514, %v3585
        %v3982 = vsel %vm3828, %v3515, %v3587
        %v3985 = vsel %vm3828, %v3516, %v3589
        %v3988 = vsel %vm3828, %v3517, %v3591
        %v3991 = vsel %vm3828, %v3518, %v3593
        %v3994 = vsel %vm3828, %v3519, %v3595
        %v3997 = vsel %vm3828, %v3520, %v3597
        %v4000 = vsel %vm3828, %v3521, %v3599
        %v4003 = vsel %vm3828, %v3522, %v3601
        %v4006 = vsel %vm3828, %v3523, %v3603
        %v4008 = vsel %vm3877, %v3961, %v3669
        %v4010 = vsel %vm3877, %v3964, %v3671
        %v4012 = vsel %vm3877, %v3967, %v3673
        %v4014 = vsel %vm3877, %v3970, %v3675
        %v4016 = vsel %vm3877, %v3973, %v3677
        %v4018 = vsel %vm3877, %v3976, %v3679
        %v4020 = vsel %vm3877, %v3979, %v3681
        %v4022 = vsel %vm3877, %v3982, %v3683
        %v4024 = vsel %vm3877, %v3985, %v3685
        %v4026 = vsel %vm3877, %v3988, %v3687
        %v4028 = vsel %vm3877, %v3991, %v3689
        %v4030 = vsel %vm3877, %v3994, %v3691
        %v4032 = vsel %vm3877, %v3997, %v3693
        %v4034 = vsel %vm3877, %v4000, %v3695
        %v4036 = vsel %vm3877, %v4003, %v3697
        %v4038 = vsel %vm3877, %v4006, %v3699
        %v4040 = vsel %vm3910, %v4008, %v3749
        %v4043 = vsel %vm3910, %v4010, %v3751
        %v4046 = vsel %vm3910, %v4012, %v3753
        %v4049 = vsel %vm3910, %v4014, %v3755
        %v4052 = vsel %vm3910, %v4016, %v3757
        %v4055 = vsel %vm3910, %v4018, %v3759
        %v4058 = vsel %vm3910, %v4020, %v3761
        %v4061 = vsel %vm3910, %v4022, %v3763
        %v4064 = vsel %vm3910, %v4024, %v3765
        %v4067 = vsel %vm3910, %v4026, %v3767
        %v4070 = vsel %vm3910, %v4028, %v3769
        %v4073 = vsel %vm3910, %v4030, %v3771
        %v4076 = vsel %vm3910, %v4032, %v3773
        %v4079 = vsel %vm3910, %v4034, %v3775
        %v4082 = vsel %vm3910, %v4036, %v3777
        %v4085 = vsel %vm3910, %v4038, %v3779
        %v4087 = vld [vmem:[%s4] sm:$0xf]
        %v4088 = vld [vmem:[%s4 + $0x4] sm:$0xf]
        %v4089 = vld [vmem:[%s4 + $0x8] sm:$0xf]
        %v4090 = vld [vmem:[%s4 + $0xc] sm:$0xf]
        %v4091 = vld [vmem:[%s4 + $0x10] sm:$0xf]
        %v4092 = vld [vmem:[%s4 + $0x14] sm:$0xf]
        %v4093 = vld [vmem:[%s4 + $0x18] sm:$0xf]
        %v4094 = vld [vmem:[%s4 + $0x1c] sm:$0xf]
        %v4095 = vld [vmem:[%s4 + $0x20] sm:$0xf]
        %v4096 = vld [vmem:[%s4 + $0x24] sm:$0xf]
        %v4097 = vld [vmem:[%s4 + $0x28] sm:$0xf]
        %v4098 = vld [vmem:[%s4 + $0x2c] sm:$0xf]
        %v4099 = vld [vmem:[%s4 + $0x30] sm:$0xf]
        %v4100 = vld [vmem:[%s4 + $0x34] sm:$0xf]
        %v4101 = vld [vmem:[%s4 + $0x38] sm:$0xf]
        %v4102 = vld [vmem:[%s4 + $0x3c] sm:$0xf]
        %v4103 = vld [vmem:[%s4 + $0x40] sm:$0xf]
        %v4104 = vld [vmem:[%s4 + $0x44] sm:$0xf]
        %v4105 = vld [vmem:[%s4 + $0x48] sm:$0xf]
        %v4106 = vld [vmem:[%s4 + $0x4c] sm:$0xf]
        %v4107 = vld [vmem:[%s4 + $0x50] sm:$0xf]
        %v4108 = vld [vmem:[%s4 + $0x54] sm:$0xf]
        %v4109 = vld [vmem:[%s4 + $0x58] sm:$0xf]
        %v4110 = vld [vmem:[%s4 + $0x5c] sm:$0xf]
        %v4111 = vld [vmem:[%s4 + $0x60] sm:$0xf]
        %v4112 = vld [vmem:[%s4 + $0x64] sm:$0xf]
        %v4113 = vld [vmem:[%s4 + $0x68] sm:$0xf]
        %v4114 = vld [vmem:[%s4 + $0x6c] sm:$0xf]
        %v4115 = vld [vmem:[%s4 + $0x70] sm:$0xf]
        %v4116 = vld [vmem:[%s4 + $0x74] sm:$0xf]
        %v4117 = vld [vmem:[%s4 + $0x78] sm:$0xf]
        %v4118 = vld [vmem:[%s4 + $0x7c] sm:$0xf]
        %v4119 = vld [vmem:[%s4 + $0x80] sm:$0xf]
        %v4120 = vld [vmem:[%s4 + $0x84] sm:$0xf]
        %v4121 = vld [vmem:[%s4 + $0x88] sm:$0xf]
        %v4122 = vld [vmem:[%s4 + $0x8c] sm:$0xf]
        %v4159 = vunpack.c.l.b16 %v4087
        %v4160 = vunpack.c.l.b16 %v4088
        %v4161 = vunpack.c.l.b16 %v4089
        %v4162 = vunpack.c.l.b16 %v4090
        %v4163 = vunpack.c.l.b16 %v4091
        %v4164 = vunpack.c.l.b16 %v4092
        %v4165 = vunpack.c.l.b16 %v4093
        %v4166 = vunpack.c.l.b16 %v4094
        %v4167 = vunpack.c.l.b16 %v4095
        %v4168 = vunpack.c.l.b16 %v4096
        %v4169 = vunpack.c.l.b16 %v4097
        %v4170 = vunpack.c.l.b16 %v4098
        %v4171 = vunpack.c.l.b16 %v4099
        %v4172 = vunpack.c.l.b16 %v4100
        %v4173 = vunpack.c.l.b16 %v4101
        %v4174 = vunpack.c.l.b16 %v4102
        %v4175 = vunpack.c.l.b16 %v4103
        %v4176 = vunpack.c.l.b16 %v4104
        %v4177 = vunpack.c.l.b16 %v4105
        %v4178 = vunpack.c.l.b16 %v4106
        %v4179 = vunpack.c.l.b16 %v4107
        %v4180 = vunpack.c.l.b16 %v4108
        %v4181 = vunpack.c.l.b16 %v4109
        %v4182 = vunpack.c.l.b16 %v4110
        %v4183 = vunpack.c.l.b16 %v4111
        %v4184 = vunpack.c.l.b16 %v4112
        %v4185 = vunpack.c.l.b16 %v4113
        %v4186 = vunpack.c.l.b16 %v4114
        %v4187 = vunpack.c.l.b16 %v4115
        %v4188 = vunpack.c.l.b16 %v4116
        %v4189 = vunpack.c.l.b16 %v4117
        %v4190 = vunpack.c.l.b16 %v4118
        %v4191 = vunpack.c.l.b16 %v4119
        %v4192 = vunpack.c.l.b16 %v4120
        %v4193 = vunpack.c.l.b16 %v4121
        %v4194 = vunpack.c.l.b16 %v4122
        %v4195 = vpack.c.b16 %v4160, %v4159
        %v4196 = vpack.c.b16 %v4162, %v4161
        %v4197 = vpack.c.b16 %v4164, %v4163
        %v4198 = vpack.c.b16 %v4166, %v4165
        %v4199 = vpack.c.b16 %v4168, %v4167
        %v4200 = vpack.c.b16 %v4170, %v4169
        %v4201 = vpack.c.b16 %v4172, %v4171
        %v4202 = vpack.c.b16 %v4174, %v4173
        %v4203 = vpack.c.b16 %v4176, %v4175
        %v4204 = vpack.c.b16 %v4178, %v4177
        %v4205 = vpack.c.b16 %v4180, %v4179
        %v4206 = vpack.c.b16 %v4182, %v4181
        %v4207 = vpack.c.b16 %v4184, %v4183
        %v4208 = vpack.c.b16 %v4186, %v4185
        %v4209 = vpack.c.b16 %v4188, %v4187
        %v4210 = vpack.c.b16 %v4190, %v4189
        %v4211 = vpack.c.b16 %v4192, %v4191
        %v4212 = vpack.c.b16 %v4194, %v4193
        %v4232 = vsel %vm3828, %v3812, 0
        %v4235 = vsel %vm3828, %v3813, 0
        %v4238 = vsel %vm3828, %v3814, 0
        %v4241 = vsel %vm3828, %v3815, 0
        %v4244 = vsel %vm3828, %v3816, 0
        %v4247 = vsel %vm3828, %v3817, 0
        %v4250 = vsel %vm3828, %v3818, 0
        %v4253 = vsel %vm3828, %v3819, 0
        %v4256 = vsel %vm3828, %v3820, 0
        %v4259 = vsel %vm3828, %v3821, 0
        %v4262 = vsel %vm3828, %v3822, 0
        %v4265 = vsel %vm3828, %v3823, 0
        %v4268 = vsel %vm3828, %v3824, 0
        %v4271 = vsel %vm3828, %v3825, 0
        %v4274 = vsel %vm3828, %v3826, 0
        %v4277 = vsel %vm3828, %v3827, 0
        %4279 = vmatprep.subr.bf16.mxu0 0
        %4280 = vmatpush1.bf16.msra.mxu0 %v4202
        %4281 = vmatprep.subr.bf16.mxu0 0
        %4282 = vmatpush1.bf16.msra.mxu0 %v4201
        %4283 = vmatprep.subr.bf16.mxu0 0
        %4284 = vmatpush1.bf16.msra.mxu0 %v4200
        %4285 = vmatprep.subr.bf16.mxu0 0
        %4286 = vmatpush1.bf16.msra.mxu0 %v4199
        %4287 = vmatprep.subr.bf16.mxu0 0
        %4288 = vmatpush1.bf16.msra.mxu0 %v4198
        %4289 = vmatprep.subr.bf16.mxu0 0
        %4290 = vmatpush1.bf16.msra.mxu0 %v4197
        %4291 = vmatprep.subr.bf16.mxu0 0
        %4292 = vmatpush1.bf16.msra.mxu0 %v4196
        %4293 = vmatprep.subr.bf16.mxu0 0
        %4294 = vmatpush1.bf16.msra.mxu0 %v4195
        %4295 = vmatprep.subr.bf16.mxu0 0
        %4296 = vmatpush2.bf16.msra.mxu0 %v4210
        %4297 = vmatprep.subr.bf16.mxu0 0
        %4298 = vmatpush2.bf16.msra.mxu0 %v4209
        %4299 = vmatprep.subr.bf16.mxu0 0
        %4300 = vmatpush2.bf16.msra.mxu0 %v4208
        %4301 = vmatprep.subr.bf16.mxu0 0
        %4302 = vmatpush2.bf16.msra.mxu0 %v4207
        %4303 = vmatprep.subr.bf16.mxu0 0
        %4304 = vmatpush2.bf16.msra.mxu0 %v4206
        %4305 = vmatprep.subr.bf16.mxu0 0
        %4306 = vmatpush2.bf16.msra.mxu0 %v4205
        %4307 = vmatprep.subr.bf16.mxu0 0
        %4308 = vmatpush2.bf16.msra.mxu0 %v4204
        %4309 = vmatprep.subr.bf16.mxu0 0
        %4310 = vmatpush2.bf16.msra.mxu0 %v4203
        %4311 = vmatprep.mubr.bf16.mxu0 %v4040
        %4312 = vmatmul.mubr.bf16.gmra.mxu0 %v3912
        %v4313 = vpop.f32.mrf.mxu0
        %v4314 = vadd.f32 0.0, %v4313
        %v4315 = vpop.f32.mrf.mxu0
        %v4316 = vpop.f32.mrf.mxu0
        %v4317 = vadd.f32 0.0, %v4316
        %v4318 = vpop.f32.mrf.mxu0
        %4319 = vmatprep.mubr.bf16.mxu0 %v4043
        %4320 = vmatmul.mubr.bf16.gmra.mxu0 %v3915
        %v4321 = vpop.f32.mrf.mxu0
        %v4322 = vadd.f32 0.0, %v4321
        %v4323 = vpop.f32.mrf.mxu0
        %v4324 = vpop.f32.mrf.mxu0
        %v4325 = vadd.f32 0.0, %v4324
        %v4326 = vpop.f32.mrf.mxu0
        %4327 = vmatprep.mubr.bf16.mxu0 %v4046
        %4328 = vmatmul.mubr.bf16.gmra.mxu0 %v3918
        %v4329 = vpop.f32.mrf.mxu0
        %v4330 = vadd.f32 0.0, %v4329
        %v4331 = vpop.f32.mrf.mxu0
        %v4332 = vpop.f32.mrf.mxu0
        %v4333 = vadd.f32 0.0, %v4332
        %v4334 = vpop.f32.mrf.mxu0
        %4335 = vmatprep.mubr.bf16.mxu0 %v4049
        %4336 = vmatmul.mubr.bf16.gmra.mxu0 %v3921
        %v4337 = vpop.f32.mrf.mxu0
        %v4338 = vadd.f32 0.0, %v4337
        %v4339 = vpop.f32.mrf.mxu0
        %v4340 = vpop.f32.mrf.mxu0
        %v4341 = vadd.f32 0.0, %v4340
        %v4342 = vpop.f32.mrf.mxu0
        %4343 = vmatprep.mubr.bf16.mxu0 %v4052
        %4344 = vmatmul.mubr.bf16.gmra.mxu0 %v3924
        %v4345 = vpop.f32.mrf.mxu0
        %v4346 = vadd.f32 0.0, %v4345
        %v4347 = vpop.f32.mrf.mxu0
        %v4348 = vpop.f32.mrf.mxu0
        %v4349 = vadd.f32 0.0, %v4348
        %v4350 = vpop.f32.mrf.mxu0
        %4351 = vmatprep.mubr.bf16.mxu0 %v4055
        %4352 = vmatmul.mubr.bf16.gmra.mxu0 %v3927
        %v4353 = vpop.f32.mrf.mxu0
        %v4354 = vadd.f32 0.0, %v4353
        %v4355 = vpop.f32.mrf.mxu0
        %v4356 = vpop.f32.mrf.mxu0
        %v4357 = vadd.f32 0.0, %v4356
        %v4358 = vpop.f32.mrf.mxu0
        %4359 = vmatprep.mubr.bf16.mxu0 %v4058
        %4360 = vmatmul.mubr.bf16.gmra.mxu0 %v3930
        %v4361 = vpop.f32.mrf.mxu0
        %v4362 = vadd.f32 0.0, %v4361
        %v4363 = vpop.f32.mrf.mxu0
        %v4364 = vpop.f32.mrf.mxu0
        %v4365 = vadd.f32 0.0, %v4364
        %v4366 = vpop.f32.mrf.mxu0
        %4367 = vmatprep.mubr.bf16.mxu0 %v4061
        %4368 = vmatmul.mubr.bf16.gmra.mxu0 %v3933
        %v4369 = vpop.f32.mrf.mxu0
        %v4370 = vadd.f32 0.0, %v4369
        %v4371 = vpop.f32.mrf.mxu0
        %v4372 = vpop.f32.mrf.mxu0
        %v4373 = vadd.f32 0.0, %v4372
        %v4374 = vpop.f32.mrf.mxu0
        %4375 = vmatprep.mubr.bf16.mxu0 %v4064
        %4376 = vmatmul.mubr.bf16.gmra.mxu0 %v3936
        %v4377 = vpop.f32.mrf.mxu0
        %v4378 = vadd.f32 0.0, %v4377
        %v4379 = vpop.f32.mrf.mxu0
        %v4380 = vpop.f32.mrf.mxu0
        %v4381 = vadd.f32 0.0, %v4380
        %v4382 = vpop.f32.mrf.mxu0
        %4383 = vmatprep.mubr.bf16.mxu0 %v4067
        %4384 = vmatmul.mubr.bf16.gmra.mxu0 %v3939
        %v4385 = vpop.f32.mrf.mxu0
        %v4386 = vadd.f32 0.0, %v4385
        %v4387 = vpop.f32.mrf.mxu0
        %v4388 = vpop.f32.mrf.mxu0
        %v4389 = vadd.f32 0.0, %v4388
        %v4390 = vpop.f32.mrf.mxu0
        %4391 = vmatprep.mubr.bf16.mxu0 %v4070
        %4392 = vmatmul.mubr.bf16.gmra.mxu0 %v3942
        %v4393 = vpop.f32.mrf.mxu0
        %v4394 = vadd.f32 0.0, %v4393
        %v4395 = vpop.f32.mrf.mxu0
        %v4396 = vpop.f32.mrf.mxu0
        %v4397 = vadd.f32 0.0, %v4396
        %v4398 = vpop.f32.mrf.mxu0
        %4399 = vmatprep.mubr.bf16.mxu0 %v4073
        %4400 = vmatmul.mubr.bf16.gmra.mxu0 %v3945
        %v4401 = vpop.f32.mrf.mxu0
        %v4402 = vadd.f32 0.0, %v4401
        %v4403 = vpop.f32.mrf.mxu0
        %v4404 = vpop.f32.mrf.mxu0
        %v4405 = vadd.f32 0.0, %v4404
        %v4406 = vpop.f32.mrf.mxu0
        %4407 = vmatprep.mubr.bf16.mxu0 %v4076
        %4408 = vmatmul.mubr.bf16.gmra.mxu0 %v3948
        %v4409 = vpop.f32.mrf.mxu0
        %v4410 = vadd.f32 0.0, %v4409
        %v4411 = vpop.f32.mrf.mxu0
        %v4412 = vpop.f32.mrf.mxu0
        %v4413 = vadd.f32 0.0, %v4412
        %v4414 = vpop.f32.mrf.mxu0
        %4415 = vmatprep.mubr.bf16.mxu0 %v4079
        %4416 = vmatmul.mubr.bf16.gmra.mxu0 %v3951
        %v4417 = vpop.f32.mrf.mxu0
        %v4418 = vadd.f32 0.0, %v4417
        %v4419 = vpop.f32.mrf.mxu0
        %v4420 = vpop.f32.mrf.mxu0
        %v4421 = vadd.f32 0.0, %v4420
        %v4422 = vpop.f32.mrf.mxu0
        %4423 = vmatprep.mubr.bf16.mxu0 %v4082
        %4424 = vmatmul.mubr.bf16.gmra.mxu0 %v3954
        %v4425 = vpop.f32.mrf.mxu0
        %v4426 = vadd.f32 0.0, %v4425
        %v4427 = vpop.f32.mrf.mxu0
        %v4428 = vpop.f32.mrf.mxu0
        %v4429 = vadd.f32 0.0, %v4428
        %v4430 = vpop.f32.mrf.mxu0
        %4431 = vmatprep.mubr.bf16.mxu0 %v4085
        %4432 = vmatmul.mubr.bf16.gmra.mxu0 %v3957
        %v4433 = vpop.f32.mrf.mxu0
        %v4434 = vadd.f32 0.0, %v4433
        %v4435 = vpop.f32.mrf.mxu0
        %v4436 = vpop.f32.mrf.mxu0
        %v4437 = vadd.f32 0.0, %v4436
        %v4438 = vpop.f32.mrf.mxu0
        %4439 = vdwg.mxu0
        %4440 = vmatprep.subr.bf16.mxu0 0
        %4441 = vmatpush1.bf16.msra.mxu0 0
        %4442 = vmatprep.subr.bf16.mxu0 0
        %4443 = vmatpush1.bf16.msra.mxu0 0
        %4444 = vmatprep.subr.bf16.mxu0 0
        %4445 = vmatpush1.bf16.msra.mxu0 0
        %4446 = vmatprep.subr.bf16.mxu0 0
        %4447 = vmatpush1.bf16.msra.mxu0 0
        %4448 = vmatprep.subr.bf16.mxu0 0
        %4449 = vmatpush1.bf16.msra.mxu0 0
        %4450 = vmatprep.subr.bf16.mxu0 0
        %4451 = vmatpush1.bf16.msra.mxu0 0
        %4452 = vmatprep.subr.bf16.mxu0 0
        %4453 = vmatpush1.bf16.msra.mxu0 %v4212
        %4454 = vmatprep.subr.bf16.mxu0 0
        %4455 = vmatpush1.bf16.msra.mxu0 %v4211
        %4456 = vmatprep.subr.bf16.mxu0 0
        %4457 = vmatpush2.bf16.msra.mxu0 0
        %4458 = vmatprep.subr.bf16.mxu0 0
        %4459 = vmatpush2.bf16.msra.mxu0 0
        %4460 = vmatprep.subr.bf16.mxu0 0
        %4461 = vmatpush2.bf16.msra.mxu0 0
        %4462 = vmatprep.subr.bf16.mxu0 0
        %4463 = vmatpush2.bf16.msra.mxu0 0
        %4464 = vmatprep.subr.bf16.mxu0 0
        %4465 = vmatpush2.bf16.msra.mxu0 0
        %4466 = vmatprep.subr.bf16.mxu0 0
        %4467 = vmatpush2.bf16.msra.mxu0 0
        %4468 = vmatprep.subr.bf16.mxu0 0
        %4469 = vmatpush2.bf16.msra.mxu0 0
        %4470 = vmatprep.subr.bf16.mxu0 0
        %4471 = vmatpush2.bf16.msra.mxu0 0
        %4472 = vmatprep.mubr.bf16.mxu0 0
        %4473 = vmatmul.mubr.bf16.gmra.mxu0 %v4232
        %v4474 = vpop.f32.mrf.mxu0
        %v4475 = vadd.f32 %v4314, %v4474
        %v4476 = vpop.f32.mrf.mxu0
        %v4477 = vpop.f32.mrf.mxu0
        %v4478 = vadd.f32 %v4317, %v4477
        %v4479 = vpop.f32.mrf.mxu0
        %4480 = vmatprep.mubr.bf16.mxu0 0
        %4481 = vmatmul.mubr.bf16.gmra.mxu0 %v4235
        %v4482 = vpop.f32.mrf.mxu0
        %v4483 = vadd.f32 %v4322, %v4482
        %v4484 = vpop.f32.mrf.mxu0
        %v4485 = vpop.f32.mrf.mxu0
        %v4486 = vadd.f32 %v4325, %v4485
        %v4487 = vpop.f32.mrf.mxu0
        %4488 = vmatprep.mubr.bf16.mxu0 0
        %4489 = vmatmul.mubr.bf16.gmra.mxu0 %v4238
        %v4490 = vpop.f32.mrf.mxu0
        %v4491 = vadd.f32 %v4330, %v4490
        %v4492 = vpop.f32.mrf.mxu0
        %v4493 = vpop.f32.mrf.mxu0
        %v4494 = vadd.f32 %v4333, %v4493
        %v4495 = vpop.f32.mrf.mxu0
        %4496 = vmatprep.mubr.bf16.mxu0 0
        %4497 = vmatmul.mubr.bf16.gmra.mxu0 %v4241
        %v4498 = vpop.f32.mrf.mxu0
        %v4499 = vadd.f32 %v4338, %v4498
        %v4500 = vpop.f32.mrf.mxu0
        %v4501 = vpop.f32.mrf.mxu0
        %v4502 = vadd.f32 %v4341, %v4501
        %v4503 = vpop.f32.mrf.mxu0
        %4504 = vmatprep.mubr.bf16.mxu0 0
        %4505 = vmatmul.mubr.bf16.gmra.mxu0 %v4244
        %v4506 = vpop.f32.mrf.mxu0
        %v4507 = vadd.f32 %v4346, %v4506
        %v4508 = vpop.f32.mrf.mxu0
        %v4509 = vpop.f32.mrf.mxu0
        %v4510 = vadd.f32 %v4349, %v4509
        %v4511 = vpop.f32.mrf.mxu0
        %4512 = vmatprep.mubr.bf16.mxu0 0
        %4513 = vmatmul.mubr.bf16.gmra.mxu0 %v4247
        %v4514 = vpop.f32.mrf.mxu0
        %v4515 = vadd.f32 %v4354, %v4514
        %v4516 = vpop.f32.mrf.mxu0
        %v4517 = vpop.f32.mrf.mxu0
        %v4518 = vadd.f32 %v4357, %v4517
        %v4519 = vpop.f32.mrf.mxu0
        %4520 = vmatprep.mubr.bf16.mxu0 0
        %4521 = vmatmul.mubr.bf16.gmra.mxu0 %v4250
        %v4522 = vpop.f32.mrf.mxu0
        %v4523 = vadd.f32 %v4362, %v4522
        %v4524 = vpop.f32.mrf.mxu0
        %v4525 = vpop.f32.mrf.mxu0
        %v4526 = vadd.f32 %v4365, %v4525
        %v4527 = vpop.f32.mrf.mxu0
        %4528 = vmatprep.mubr.bf16.mxu0 0
        %4529 = vmatmul.mubr.bf16.gmra.mxu0 %v4253
        %v4530 = vpop.f32.mrf.mxu0
        %v4531 = vadd.f32 %v4370, %v4530
        %v4532 = vpop.f32.mrf.mxu0
        %v4533 = vpop.f32.mrf.mxu0
        %v4534 = vadd.f32 %v4373, %v4533
        %v4535 = vpop.f32.mrf.mxu0
        %4536 = vmatprep.mubr.bf16.mxu0 0
        %4537 = vmatmul.mubr.bf16.gmra.mxu0 %v4256
        %v4538 = vpop.f32.mrf.mxu0
        %v4539 = vadd.f32 %v4378, %v4538
        %v4540 = vpop.f32.mrf.mxu0
        %v4541 = vpop.f32.mrf.mxu0
        %v4542 = vadd.f32 %v4381, %v4541
        %v4543 = vpop.f32.mrf.mxu0
        %4544 = vmatprep.mubr.bf16.mxu0 0
        %4545 = vmatmul.mubr.bf16.gmra.mxu0 %v4259
        %v4546 = vpop.f32.mrf.mxu0
        %v4547 = vadd.f32 %v4386, %v4546
        %v4548 = vpop.f32.mrf.mxu0
        %v4549 = vpop.f32.mrf.mxu0
        %v4550 = vadd.f32 %v4389, %v4549
        %v4551 = vpop.f32.mrf.mxu0
        %4552 = vmatprep.mubr.bf16.mxu0 0
        %4553 = vmatmul.mubr.bf16.gmra.mxu0 %v4262
        %v4554 = vpop.f32.mrf.mxu0
        %v4555 = vadd.f32 %v4394, %v4554
        %v4556 = vpop.f32.mrf.mxu0
        %v4557 = vpop.f32.mrf.mxu0
        %v4558 = vadd.f32 %v4397, %v4557
        %v4559 = vpop.f32.mrf.mxu0
        %4560 = vmatprep.mubr.bf16.mxu0 0
        %4561 = vmatmul.mubr.bf16.gmra.mxu0 %v4265
        %v4562 = vpop.f32.mrf.mxu0
        %v4563 = vadd.f32 %v4402, %v4562
        %v4564 = vpop.f32.mrf.mxu0
        %v4565 = vpop.f32.mrf.mxu0
        %v4566 = vadd.f32 %v4405, %v4565
        %v4567 = vpop.f32.mrf.mxu0
        %4568 = vmatprep.mubr.bf16.mxu0 0
        %4569 = vmatmul.mubr.bf16.gmra.mxu0 %v4268
        %v4570 = vpop.f32.mrf.mxu0
        %v4571 = vadd.f32 %v4410, %v4570
        %v4572 = vpop.f32.mrf.mxu0
        %v4573 = vpop.f32.mrf.mxu0
        %v4574 = vadd.f32 %v4413, %v4573
        %v4575 = vpop.f32.mrf.mxu0
        %4576 = vmatprep.mubr.bf16.mxu0 0
        %4577 = vmatmul.mubr.bf16.gmra.mxu0 %v4271
        %v4578 = vpop.f32.mrf.mxu0
        %v4579 = vadd.f32 %v4418, %v4578
        %v4580 = vpop.f32.mrf.mxu0
        %v4581 = vpop.f32.mrf.mxu0
        %v4582 = vadd.f32 %v4421, %v4581
        %v4583 = vpop.f32.mrf.mxu0
        %4584 = vmatprep.mubr.bf16.mxu0 0
        %4585 = vmatmul.mubr.bf16.gmra.mxu0 %v4274
        %v4586 = vpop.f32.mrf.mxu0
        %v4587 = vadd.f32 %v4426, %v4586
        %v4588 = vpop.f32.mrf.mxu0
        %v4589 = vpop.f32.mrf.mxu0
        %v4590 = vadd.f32 %v4429, %v4589
        %v4591 = vpop.f32.mrf.mxu0
        %4592 = vmatprep.mubr.bf16.mxu0 0
        %4593 = vmatmul.mubr.bf16.gmra.mxu0 %v4277
        %v4594 = vpop.f32.mrf.mxu0
        %v4595 = vadd.f32 %v4434, %v4594
        %v4596 = vpop.f32.mrf.mxu0
        %v4597 = vpop.f32.mrf.mxu0
        %v4598 = vadd.f32 %v4437, %v4597
        %v4599 = vpop.f32.mrf.mxu0
        %4600 = vdwg.mxu0
        %v4601 = vld [vmem:[%s5] sm:$0x1]
        %v4603 = vlaneseq
        %v4604 = vshrl.u32 %v4603, 7
        %v4605 = vsub.s32 0, %v4604
        %v4606 = vrot.slane %v4601, %v4605
        %v4608 = vmul.f32 %v4475, %v4606
        %v4609 = vmul.f32 %v4478, %v4606
        %v4610 = vmul.f32 %v4483, %v4606
        %v4611 = vmul.f32 %v4486, %v4606
        %v4612 = vmul.f32 %v4491, %v4606
        %v4613 = vmul.f32 %v4494, %v4606
        %v4614 = vmul.f32 %v4499, %v4606
        %v4615 = vmul.f32 %v4502, %v4606
        %v4616 = vmul.f32 %v4507, %v4606
        %v4617 = vmul.f32 %v4510, %v4606
        %v4618 = vmul.f32 %v4515, %v4606
        %v4619 = vmul.f32 %v4518, %v4606
        %v4620 = vmul.f32 %v4523, %v4606
        %v4621 = vmul.f32 %v4526, %v4606
        %v4622 = vmul.f32 %v4531, %v4606
        %v4623 = vmul.f32 %v4534, %v4606
        %v4624 = vmul.f32 %v4539, %v4606
        %v4625 = vmul.f32 %v4542, %v4606
        %v4626 = vmul.f32 %v4547, %v4606
        %v4627 = vmul.f32 %v4550, %v4606
        %v4628 = vmul.f32 %v4555, %v4606
        %v4629 = vmul.f32 %v4558, %v4606
        %v4630 = vmul.f32 %v4563, %v4606
        %v4631 = vmul.f32 %v4566, %v4606
        %v4632 = vmul.f32 %v4571, %v4606
        %v4633 = vmul.f32 %v4574, %v4606
        %v4634 = vmul.f32 %v4579, %v4606
        %v4635 = vmul.f32 %v4582, %v4606
        %v4636 = vmul.f32 %v4587, %v4606
        %v4637 = vmul.f32 %v4590, %v4606
        %v4638 = vmul.f32 %v4595, %v4606
        %v4639 = vmul.f32 %v4598, %v4606
        %v4640 = vld [vmem:[%s6] sm:$0x1]
        %v4642 = vlaneseq
        %v4643 = vshrl.u32 %v4642, 7
        %v4644 = vsub.s32 0, %v4643
        %v4645 = vrot.slane %v4640, %v4644
        %v4647 = vadd.f32 %v4608, %v4645
        %v4648 = vadd.f32 %v4609, %v4645
        %v4649 = vadd.f32 %v4610, %v4645
        %v4650 = vadd.f32 %v4611, %v4645
        %v4651 = vadd.f32 %v4612, %v4645
        %v4652 = vadd.f32 %v4613, %v4645
        %v4653 = vadd.f32 %v4614, %v4645
        %v4654 = vadd.f32 %v4615, %v4645
        %v4655 = vadd.f32 %v4616, %v4645
        %v4656 = vadd.f32 %v4617, %v4645
        %v4657 = vadd.f32 %v4618, %v4645
        %v4658 = vadd.f32 %v4619, %v4645
        %v4659 = vadd.f32 %v4620, %v4645
        %v4660 = vadd.f32 %v4621, %v4645
        %v4661 = vadd.f32 %v4622, %v4645
        %v4662 = vadd.f32 %v4623, %v4645
        %v4663 = vadd.f32 %v4624, %v4645
        %v4664 = vadd.f32 %v4625, %v4645
        %v4665 = vadd.f32 %v4626, %v4645
        %v4666 = vadd.f32 %v4627, %v4645
        %v4667 = vadd.f32 %v4628, %v4645
        %v4668 = vadd.f32 %v4629, %v4645
        %v4669 = vadd.f32 %v4630, %v4645
        %v4670 = vadd.f32 %v4631, %v4645
        %v4671 = vadd.f32 %v4632, %v4645
        %v4672 = vadd.f32 %v4633, %v4645
        %v4673 = vadd.f32 %v4634, %v4645
        %v4674 = vadd.f32 %v4635, %v4645
        %v4675 = vadd.f32 %v4636, %v4645
        %v4676 = vadd.f32 %v4637, %v4645
        %v4677 = vadd.f32 %v4638, %v4645
        %v4678 = vadd.f32 %v4639, %v4645
        %v4679 = vmax.f32 %v4647, 0.0
        %v4680 = vmax.f32 %v4648, 0.0
        %v4681 = vmax.f32 %v4649, 0.0
        %v4682 = vmax.f32 %v4650, 0.0
        %v4683 = vmax.f32 %v4651, 0.0
        %v4684 = vmax.f32 %v4652, 0.0
        %v4685 = vmax.f32 %v4653, 0.0
        %v4686 = vmax.f32 %v4654, 0.0
        %v4687 = vmax.f32 %v4655, 0.0
        %v4688 = vmax.f32 %v4656, 0.0
        %v4689 = vmax.f32 %v4657, 0.0
        %v4690 = vmax.f32 %v4658, 0.0
        %v4691 = vmax.f32 %v4659, 0.0
        %v4692 = vmax.f32 %v4660, 0.0
        %v4693 = vmax.f32 %v4661, 0.0
        %v4694 = vmax.f32 %v4662, 0.0
        %v4695 = vmax.f32 %v4663, 0.0
        %v4696 = vmax.f32 %v4664, 0.0
        %v4697 = vmax.f32 %v4665, 0.0
        %v4698 = vmax.f32 %v4666, 0.0
        %v4699 = vmax.f32 %v4667, 0.0
        %v4700 = vmax.f32 %v4668, 0.0
        %v4701 = vmax.f32 %v4669, 0.0
        %v4702 = vmax.f32 %v4670, 0.0
        %v4703 = vmax.f32 %v4671, 0.0
        %v4704 = vmax.f32 %v4672, 0.0
        %v4705 = vmax.f32 %v4673, 0.0
        %v4706 = vmax.f32 %v4674, 0.0
        %v4707 = vmax.f32 %v4675, 0.0
        %v4708 = vmax.f32 %v4676, 0.0
        %v4709 = vmax.f32 %v4677, 0.0
        %v4710 = vmax.f32 %v4678, 0.0
        %4711 = vst.msk [vmem:[#allocation3] sm:$0xff] %vm3828, %v4679
        %4712 = vst.msk [vmem:[#allocation3 + $0x8] sm:$0xff] %vm3828, %v4680
        %4713 = vst.msk [vmem:[#allocation3 + $0x10] sm:$0xff] %vm3828, %v4681
        %4714 = vst.msk [vmem:[#allocation3 + $0x18] sm:$0xff] %vm3828, %v4682
        %4715 = vst.msk [vmem:[#allocation3 + $0x20] sm:$0xff] %vm3828, %v4683
        %4716 = vst.msk [vmem:[#allocation3 + $0x28] sm:$0xff] %vm3828, %v4684
        %4717 = vst.msk [vmem:[#allocation3 + $0x30] sm:$0xff] %vm3828, %v4685
        %4718 = vst.msk [vmem:[#allocation3 + $0x38] sm:$0xff] %vm3828, %v4686
        %4719 = vst.msk [vmem:[#allocation3 + $0x40] sm:$0xff] %vm3828, %v4687
        %4720 = vst.msk [vmem:[#allocation3 + $0x48] sm:$0xff] %vm3828, %v4688
        %4721 = vst.msk [vmem:[#allocation3 + $0x50] sm:$0xff] %vm3828, %v4689
        %4722 = vst.msk [vmem:[#allocation3 + $0x58] sm:$0xff] %vm3828, %v4690
        %4723 = vst.msk [vmem:[#allocation3 + $0x60] sm:$0xff] %vm3828, %v4691
        %4724 = vst.msk [vmem:[#allocation3 + $0x68] sm:$0xff] %vm3828, %v4692
        %4725 = vst.msk [vmem:[#allocation3 + $0x70] sm:$0xff] %vm3828, %v4693
        %4726 = vst.msk [vmem:[#allocation3 + $0x78] sm:$0xff] %vm3828, %v4694
        %4727 = vst.msk [vmem:[#allocation3 + $0x80] sm:$0xff] %vm3828, %v4695
        %4728 = vst.msk [vmem:[#allocation3 + $0x88] sm:$0xff] %vm3828, %v4696
        %4729 = vst.msk [vmem:[#allocation3 + $0x90] sm:$0xff] %vm3828, %v4697
        %4730 = vst.msk [vmem:[#allocation3 + $0x98] sm:$0xff] %vm3828, %v4698
        %4731 = vst.msk [vmem:[#allocation3 + $0xa0] sm:$0xff] %vm3828, %v4699
        %4732 = vst.msk [vmem:[#allocation3 + $0xa8] sm:$0xff] %vm3828, %v4700
        %4733 = vst.msk [vmem:[#allocation3 + $0xb0] sm:$0xff] %vm3828, %v4701
        %4734 = vst.msk [vmem:[#allocation3 + $0xb8] sm:$0xff] %vm3828, %v4702
        %4735 = vst.msk [vmem:[#allocation3 + $0xc0] sm:$0xff] %vm3828, %v4703
        %4736 = vst.msk [vmem:[#allocation3 + $0xc8] sm:$0xff] %vm3828, %v4704
        %4737 = vst.msk [vmem:[#allocation3 + $0xd0] sm:$0xff] %vm3828, %v4705
        %4738 = vst.msk [vmem:[#allocation3 + $0xd8] sm:$0xff] %vm3828, %v4706
        %4739 = vst.msk [vmem:[#allocation3 + $0xe0] sm:$0xff] %vm3828, %v4707
        %4740 = vst.msk [vmem:[#allocation3 + $0xe8] sm:$0xff] %vm3828, %v4708
        %4741 = vst.msk [vmem:[#allocation3 + $0xf0] sm:$0xff] %vm3828, %v4709
        %4742 = vst.msk [vmem:[#allocation3 + $0xf8] sm:$0xff] %vm3828, %v4710
        %v4743 = vld [vmem:[#allocation3] ss:$2 sm:$0xff]
        %s4744 = scalar_lea.vmem [#allocation3], 32
        %v4745 = vld [vmem:[%s4744] ss:$2 sm:$0xff]
        %s4746 = scalar_lea.vmem [#allocation3], 64
        %v4747 = vld [vmem:[%s4746] ss:$2 sm:$0xff]
        %s4748 = scalar_lea.vmem [#allocation3], 96
        %v4749 = vld [vmem:[%s4748] ss:$2 sm:$0xff]
        %s4750 = scalar_lea.vmem [#allocation3], 128
        %v4751 = vld [vmem:[%s4750] ss:$2 sm:$0xff]
        %s4752 = scalar_lea.vmem [#allocation3], 160
        %v4753 = vld [vmem:[%s4752] ss:$2 sm:$0xff]
        %s4754 = scalar_lea.vmem [#allocation3], 192
        %v4755 = vld [vmem:[%s4754] ss:$2 sm:$0xff]
        %s4756 = scalar_lea.vmem [#allocation3], 224
        %v4757 = vld [vmem:[%s4756] ss:$2 sm:$0xff]
        %s4758 = scalar_lea.vmem [#allocation3], 16
        %v4759 = vld [vmem:[%s4758] ss:$2 sm:$0xff]
        %s4760 = scalar_lea.vmem %s4758, 32 [#allocation3]
        %v4761 = vld [vmem:[%s4760] ss:$2 sm:$0xff]
        %s4762 = scalar_lea.vmem %s4758, 64 [#allocation3]
        %v4763 = vld [vmem:[%s4762] ss:$2 sm:$0xff]
        %s4764 = scalar_lea.vmem %s4758, 96 [#allocation3]
        %v4765 = vld [vmem:[%s4764] ss:$2 sm:$0xff]
        %s4766 = scalar_lea.vmem %s4758, 128 [#allocation3]
        %v4767 = vld [vmem:[%s4766] ss:$2 sm:$0xff]
        %s4768 = scalar_lea.vmem %s4758, 160 [#allocation3]
        %v4769 = vld [vmem:[%s4768] ss:$2 sm:$0xff]
        %s4770 = scalar_lea.vmem %s4758, 192 [#allocation3]
        %v4771 = vld [vmem:[%s4770] ss:$2 sm:$0xff]
        %s4772 = scalar_lea.vmem %s4758, 224 [#allocation3]
        %v4773 = vld [vmem:[%s4772] ss:$2 sm:$0xff]
        %s4774 = scalar_lea.vmem [#allocation3], 1
        %v4775 = vld [vmem:[%s4774] ss:$2 sm:$0xff]
        %s4776 = scalar_lea.vmem [#allocation3], 33
        %v4777 = vld [vmem:[%s4776] ss:$2 sm:$0xff]
        %s4778 = scalar_lea.vmem [#allocation3], 65
        %v4779 = vld [vmem:[%s4778] ss:$2 sm:$0xff]
        %s4780 = scalar_lea.vmem [#allocation3], 97
        %v4781 = vld [vmem:[%s4780] ss:$2 sm:$0xff]
        %s4782 = scalar_lea.vmem [#allocation3], 129
        %v4783 = vld [vmem:[%s4782] ss:$2 sm:$0xff]
        %s4784 = scalar_lea.vmem [#allocation3], 161
        %v4785 = vld [vmem:[%s4784] ss:$2 sm:$0xff]
        %s4786 = scalar_lea.vmem [#allocation3], 193
        %v4787 = vld [vmem:[%s4786] ss:$2 sm:$0xff]
        %s4788 = scalar_lea.vmem [#allocation3], 225
        %v4789 = vld [vmem:[%s4788] ss:$2 sm:$0xff]
        %s4790 = scalar_lea.vmem %s4758, 1 [#allocation3]
        %v4791 = vld [vmem:[%s4790] ss:$2 sm:$0xff]
        %s4792 = scalar_lea.vmem %s4758, 33 [#allocation3]
        %v4793 = vld [vmem:[%s4792] ss:$2 sm:$0xff]
        %s4794 = scalar_lea.vmem %s4758, 65 [#allocation3]
        %v4795 = vld [vmem:[%s4794] ss:$2 sm:$0xff]
        %s4796 = scalar_lea.vmem %s4758, 97 [#allocation3]
        %v4797 = vld [vmem:[%s4796] ss:$2 sm:$0xff]
        %s4798 = scalar_lea.vmem %s4758, 129 [#allocation3]
        %v4799 = vld [vmem:[%s4798] ss:$2 sm:$0xff]
        %s4800 = scalar_lea.vmem %s4758, 161 [#allocation3]
        %v4801 = vld [vmem:[%s4800] ss:$2 sm:$0xff]
        %s4802 = scalar_lea.vmem %s4758, 193 [#allocation3]
        %v4803 = vld [vmem:[%s4802] ss:$2 sm:$0xff]
        %s4804 = scalar_lea.vmem %s4758, 225 [#allocation3]
        %v4805 = vld [vmem:[%s4804] ss:$2 sm:$0xff]
        %v4806 = vadd.f32 %v4743, %v4759
        %v4807 = vadd.f32 %v4745, %v4761
        %v4808 = vadd.f32 %v4747, %v4763
        %v4809 = vadd.f32 %v4749, %v4765
        %v4810 = vadd.f32 %v4751, %v4767
        %v4811 = vadd.f32 %v4753, %v4769
        %v4812 = vadd.f32 %v4755, %v4771
        %v4813 = vadd.f32 %v4757, %v4773
        %v4814 = vadd.f32 %v4806, %v4775
        %v4815 = vadd.f32 %v4807, %v4777
        %v4816 = vadd.f32 %v4808, %v4779
        %v4817 = vadd.f32 %v4809, %v4781
        %v4818 = vadd.f32 %v4810, %v4783
        %v4819 = vadd.f32 %v4811, %v4785
        %v4820 = vadd.f32 %v4812, %v4787
        %v4821 = vadd.f32 %v4813, %v4789
        %v4822 = vadd.f32 %v4814, %v4791
        %v4823 = vadd.f32 %v4815, %v4793
        %v4824 = vadd.f32 %v4816, %v4795
        %v4825 = vadd.f32 %v4817, %v4797
        %v4826 = vadd.f32 %v4818, %v4799
        %v4827 = vadd.f32 %v4819, %v4801
        %v4828 = vadd.f32 %v4820, %v4803
        %v4829 = vadd.f32 %v4821, %v4805
        %v4830 = vmul.f32 %v4822, 0.5
        %v4831 = vmul.f32 %v4823, 0.5
        %v4832 = vmul.f32 %v4824, 0.5
        %v4833 = vmul.f32 %v4825, 0.5
        %v4834 = vmul.f32 %v4826, 0.5
        %v4835 = vmul.f32 %v4827, 0.5
        %v4836 = vmul.f32 %v4828, 0.5
        %v4837 = vmul.f32 %v4829, 0.5
        %v4838 = vpack.c.bf16 %v4831, %v4830
        %v4839 = vpack.c.bf16 %v4833, %v4832
        %v4840 = vpack.c.bf16 %v4835, %v4834
        %v4841 = vpack.c.bf16 %v4837, %v4836
        %v4842 = vsub.f32 0.0, %v4743
        %v4843 = vsub.f32 0.0, %v4745
        %v4844 = vsub.f32 0.0, %v4747
        %v4845 = vsub.f32 0.0, %v4749
        %v4846 = vsub.f32 0.0, %v4751
        %v4847 = vsub.f32 0.0, %v4753
        %v4848 = vsub.f32 0.0, %v4755
        %v4849 = vsub.f32 0.0, %v4757
        %v4850 = vsub.f32 %v4842, %v4759
        %v4851 = vsub.f32 %v4843, %v4761
        %v4852 = vsub.f32 %v4844, %v4763
        %v4853 = vsub.f32 %v4845, %v4765
        %v4854 = vsub.f32 %v4846, %v4767
        %v4855 = vsub.f32 %v4847, %v4769
        %v4856 = vsub.f32 %v4848, %v4771
        %v4857 = vsub.f32 %v4849, %v4773
        %v4858 = vadd.f32 %v4850, %v4775
        %v4859 = vadd.f32 %v4851, %v4777
        %v4860 = vadd.f32 %v4852, %v4779
        %v4861 = vadd.f32 %v4853, %v4781
        %v4862 = vadd.f32 %v4854, %v4783
        %v4863 = vadd.f32 %v4855, %v4785
        %v4864 = vadd.f32 %v4856, %v4787
        %v4865 = vadd.f32 %v4857, %v4789
        %v4866 = vadd.f32 %v4858, %v4791
        %v4867 = vadd.f32 %v4859, %v4793
        %v4868 = vadd.f32 %v4860, %v4795
        %v4869 = vadd.f32 %v4861, %v4797
        %v4870 = vadd.f32 %v4862, %v4799
        %v4871 = vadd.f32 %v4863, %v4801
        %v4872 = vadd.f32 %v4864, %v4803
        %v4873 = vadd.f32 %v4865, %v4805
        %v4874 = vmul.f32 %v4866, 0.5
        %v4875 = vmul.f32 %v4867, 0.5
        %v4876 = vmul.f32 %v4868, 0.5
        %v4877 = vmul.f32 %v4869, 0.5
        %v4878 = vmul.f32 %v4870, 0.5
        %v4879 = vmul.f32 %v4871, 0.5
        %v4880 = vmul.f32 %v4872, 0.5
        %v4881 = vmul.f32 %v4873, 0.5
        %v4882 = vpack.c.bf16 %v4875, %v4874
        %v4883 = vpack.c.bf16 %v4877, %v4876
        %v4884 = vpack.c.bf16 %v4879, %v4878
        %v4885 = vpack.c.bf16 %v4881, %v4880
        %v4886 = vadd.f32 %v4842, %v4759
        %v4887 = vadd.f32 %v4843, %v4761
        %v4888 = vadd.f32 %v4844, %v4763
        %v4889 = vadd.f32 %v4845, %v4765
        %v4890 = vadd.f32 %v4846, %v4767
        %v4891 = vadd.f32 %v4847, %v4769
        %v4892 = vadd.f32 %v4848, %v4771
        %v4893 = vadd.f32 %v4849, %v4773
        %v4894 = vsub.f32 %v4886, %v4775
        %v4895 = vsub.f32 %v4887, %v4777
        %v4896 = vsub.f32 %v4888, %v4779
        %v4897 = vsub.f32 %v4889, %v4781
        %v4898 = vsub.f32 %v4890, %v4783
        %v4899 = vsub.f32 %v4891, %v4785
        %v4900 = vsub.f32 %v4892, %v4787
        %v4901 = vsub.f32 %v4893, %v4789
        %v4902 = vadd.f32 %v4894, %v4791
        %v4903 = vadd.f32 %v4895, %v4793
        %v4904 = vadd.f32 %v4896, %v4795
        %v4905 = vadd.f32 %v4897, %v4797
        %v4906 = vadd.f32 %v4898, %v4799
        %v4907 = vadd.f32 %v4899, %v4801
        %v4908 = vadd.f32 %v4900, %v4803
        %v4909 = vadd.f32 %v4901, %v4805
        %v4910 = vmul.f32 %v4902, 0.5
        %v4911 = vmul.f32 %v4903, 0.5
        %v4912 = vmul.f32 %v4904, 0.5
        %v4913 = vmul.f32 %v4905, 0.5
        %v4914 = vmul.f32 %v4906, 0.5
        %v4915 = vmul.f32 %v4907, 0.5
        %v4916 = vmul.f32 %v4908, 0.5
        %v4917 = vmul.f32 %v4909, 0.5
        %v4918 = vpack.c.bf16 %v4911, %v4910
        %v4919 = vpack.c.bf16 %v4913, %v4912
        %v4920 = vpack.c.bf16 %v4915, %v4914
        %v4921 = vpack.c.bf16 %v4917, %v4916
        %v4922 = vsub.f32 %v4743, %v4759
        %v4923 = vsub.f32 %v4745, %v4761
        %v4924 = vsub.f32 %v4747, %v4763
        %v4925 = vsub.f32 %v4749, %v4765
        %v4926 = vsub.f32 %v4751, %v4767
        %v4927 = vsub.f32 %v4753, %v4769
        %v4928 = vsub.f32 %v4755, %v4771
        %v4929 = vsub.f32 %v4757, %v4773
        %v4930 = vsub.f32 %v4922, %v4775
        %v4931 = vsub.f32 %v4923, %v4777
        %v4932 = vsub.f32 %v4924, %v4779
        %v4933 = vsub.f32 %v4925, %v4781
        %v4934 = vsub.f32 %v4926, %v4783
        %v4935 = vsub.f32 %v4927, %v4785
        %v4936 = vsub.f32 %v4928, %v4787
        %v4937 = vsub.f32 %v4929, %v4789
        %v4938 = vadd.f32 %v4930, %v4791
        %v4939 = vadd.f32 %v4931, %v4793
        %v4940 = vadd.f32 %v4932, %v4795
        %v4941 = vadd.f32 %v4933, %v4797
        %v4942 = vadd.f32 %v4934, %v4799
        %v4943 = vadd.f32 %v4935, %v4801
        %v4944 = vadd.f32 %v4936, %v4803
        %v4945 = vadd.f32 %v4937, %v4805
        %v4946 = vmul.f32 %v4938, 0.5
        %v4947 = vmul.f32 %v4939, 0.5
        %v4948 = vmul.f32 %v4940, 0.5
        %v4949 = vmul.f32 %v4941, 0.5
        %v4950 = vmul.f32 %v4942, 0.5
        %v4951 = vmul.f32 %v4943, 0.5
        %v4952 = vmul.f32 %v4944, 0.5
        %v4953 = vmul.f32 %v4945, 0.5
        %v4954 = vpack.c.bf16 %v4947, %v4946
        %v4955 = vpack.c.bf16 %v4949, %v4948
        %v4956 = vpack.c.bf16 %v4951, %v4950
        %v4957 = vpack.c.bf16 %v4953, %v4952
        %4962 = vrot.lane.b32.xlu0 %v4882, 32
        %v4963 = vpop.permute.xlu0 %4962
        %4964 = vrot.lane.b32.xlu0 %v4883, 32
        %v4965 = vpop.permute.xlu0 %4964
        %4966 = vrot.lane.b32.xlu0 %v4884, 32
        %v4967 = vpop.permute.xlu0 %4966
        %4968 = vrot.lane.b32.xlu0 %v4885, 32
        %v4969 = vpop.permute.xlu0 %4968
        %4974 = vrot.lane.b32.xlu0 %v4918, 64
        %v4975 = vpop.permute.xlu0 %4974
        %4976 = vrot.lane.b32.xlu0 %v4919, 64
        %v4977 = vpop.permute.xlu0 %4976
        %4978 = vrot.lane.b32.xlu0 %v4920, 64
        %v4979 = vpop.permute.xlu0 %4978
        %4980 = vrot.lane.b32.xlu0 %v4921, 64
        %v4981 = vpop.permute.xlu0 %4980
        %4986 = vrot.lane.b32.xlu0 %v4954, 96
        %v4987 = vpop.permute.xlu0 %4986
        %4988 = vrot.lane.b32.xlu0 %v4955, 96
        %v4989 = vpop.permute.xlu0 %4988
        %4990 = vrot.lane.b32.xlu0 %v4956, 96
        %v4991 = vpop.permute.xlu0 %4990
        %4992 = vrot.lane.b32.xlu0 %v4957, 96
        %v4993 = vpop.permute.xlu0 %4992
        %v4996 = vsel %vm3828, %v4838, %v4963
        %v4999 = vsel %vm3828, %v4839, %v4965
        %v5002 = vsel %vm3828, %v4840, %v4967
        %v5005 = vsel %vm3828, %v4841, %v4969
        %v5007 = vsel %vm3877, %v4996, %v4975
        %v5009 = vsel %vm3877, %v4999, %v4977
        %v5011 = vsel %vm3877, %v5002, %v4979
        %v5013 = vsel %vm3877, %v5005, %v4981
        %v5015 = vsel %vm3910, %v5007, %v4987
        %v5018 = vsel %vm3910, %v5009, %v4989
        %v5021 = vsel %vm3910, %v5011, %v4991
        %v5024 = vsel %vm3910, %v5013, %v4993
        %v5026 = vld [vmem:[%s7] sm:$0xf]
        %v5027 = vld [vmem:[%s7 + $0x4] sm:$0xf]
        %v5028 = vld [vmem:[%s7 + $0x8] sm:$0xf]
        %v5029 = vld [vmem:[%s7 + $0xc] sm:$0xf]
        %v5030 = vld [vmem:[%s7 + $0x10] sm:$0xf]
        %v5031 = vld [vmem:[%s7 + $0x14] sm:$0xf]
        %v5032 = vld [vmem:[%s7 + $0x18] sm:$0xf]
        %v5033 = vld [vmem:[%s7 + $0x1c] sm:$0xf]
        %v5034 = vld [vmem:[%s7 + $0x20] sm:$0xf]
        %v5035 = vld [vmem:[%s7 + $0x24] sm:$0xf]
        %v5036 = vld [vmem:[%s7 + $0x28] sm:$0xf]
        %v5037 = vld [vmem:[%s7 + $0x2c] sm:$0xf]
        %v5038 = vld [vmem:[%s7 + $0x30] sm:$0xf]
        %v5039 = vld [vmem:[%s7 + $0x34] sm:$0xf]
        %v5040 = vld [vmem:[%s7 + $0x38] sm:$0xf]
        %v5041 = vld [vmem:[%s7 + $0x3c] sm:$0xf]
        %v5042 = vld [vmem:[%s8] sm:$0x1]
        %v5044 = vlaneseq
        %v5045 = vshrl.u32 %v5044, 7
        %v5046 = vsub.s32 0, %v5045
        %v5047 = vrot.slane %v5042, %v5046
        %v5065 = vunpack.c.l.b16 %v5026
        %v5066 = vunpack.c.l.b16 %v5027
        %v5067 = vunpack.c.l.b16 %v5028
        %v5068 = vunpack.c.l.b16 %v5029
        %v5069 = vunpack.c.l.b16 %v5030
        %v5070 = vunpack.c.l.b16 %v5031
        %v5071 = vunpack.c.l.b16 %v5032
        %v5072 = vunpack.c.l.b16 %v5033
        %v5073 = vunpack.c.l.b16 %v5034
        %v5074 = vunpack.c.l.b16 %v5035
        %v5075 = vunpack.c.l.b16 %v5036
        %v5076 = vunpack.c.l.b16 %v5037
        %v5077 = vunpack.c.l.b16 %v5038
        %v5078 = vunpack.c.l.b16 %v5039
        %v5079 = vunpack.c.l.b16 %v5040
        %v5080 = vunpack.c.l.b16 %v5041
        %v5081 = vpack.c.b16 %v5066, %v5065
        %v5082 = vpack.c.b16 %v5068, %v5067
        %v5083 = vpack.c.b16 %v5070, %v5069
        %v5084 = vpack.c.b16 %v5072, %v5071
        %v5085 = vpack.c.b16 %v5074, %v5073
        %v5086 = vpack.c.b16 %v5076, %v5075
        %v5087 = vpack.c.b16 %v5078, %v5077
        %v5088 = vpack.c.b16 %v5080, %v5079
        %5097 = vmatprep.subr.bf16.mxu0 0
        %5098 = vmatpush1.bf16.msra.mxu0 %v5088
        %5099 = vmatprep.subr.bf16.mxu0 0
        %5100 = vmatpush1.bf16.msra.mxu0 %v5087
        %5101 = vmatprep.subr.bf16.mxu0 0
        %5102 = vmatpush1.bf16.msra.mxu0 %v5086
        %5103 = vmatprep.subr.bf16.mxu0 0
        %5104 = vmatpush1.bf16.msra.mxu0 %v5085
        %5105 = vmatprep.subr.bf16.mxu0 0
        %5106 = vmatpush1.bf16.msra.mxu0 %v5084
        %5107 = vmatprep.subr.bf16.mxu0 0
        %5108 = vmatpush1.bf16.msra.mxu0 %v5083
        %5109 = vmatprep.subr.bf16.mxu0 0
        %5110 = vmatpush1.bf16.msra.mxu0 %v5082
        %5111 = vmatprep.subr.bf16.mxu0 0
        %5112 = vmatpush1.bf16.msra.mxu0 %v5081
        %5113 = vmatprep.subr.bf16.mxu0 0
        %5114 = vmatpush2.bf16.msra.mxu0 0
        %5115 = vmatprep.subr.bf16.mxu0 0
        %5116 = vmatpush2.bf16.msra.mxu0 0
        %5117 = vmatprep.subr.bf16.mxu0 0
        %5118 = vmatpush2.bf16.msra.mxu0 0
        %5119 = vmatprep.subr.bf16.mxu0 0
        %5120 = vmatpush2.bf16.msra.mxu0 0
        %5121 = vmatprep.subr.bf16.mxu0 0
        %5122 = vmatpush2.bf16.msra.mxu0 0
        %5123 = vmatprep.subr.bf16.mxu0 0
        %5124 = vmatpush2.bf16.msra.mxu0 0
        %5125 = vmatprep.subr.bf16.mxu0 0
        %5126 = vmatpush2.bf16.msra.mxu0 0
        %5127 = vmatprep.subr.bf16.mxu0 0
        %5128 = vmatpush2.bf16.msra.mxu0 0
        %5129 = vmatprep.mubr.bf16.mxu0 0
        %5130 = vmatmul.mubr.bf16.gmra.mxu0 %v5015
        %v5131 = vpop.f32.mrf.mxu0
        %v5132 = vadd.f32 %v5047, %v5131
        %v5133 = vpop.f32.mrf.mxu0
        %v5134 = vpop.f32.mrf.mxu0
        %v5135 = vadd.f32 %v5047, %v5134
        %v5136 = vpop.f32.mrf.mxu0
        %5137 = vmatprep.mubr.bf16.mxu0 0
        %5138 = vmatmul.mubr.bf16.gmra.mxu0 %v5018
        %v5139 = vpop.f32.mrf.mxu0
        %v5140 = vadd.f32 %v5047, %v5139
        %v5141 = vpop.f32.mrf.mxu0
        %v5142 = vpop.f32.mrf.mxu0
        %v5143 = vadd.f32 %v5047, %v5142
        %v5144 = vpop.f32.mrf.mxu0
        %5145 = vmatprep.mubr.bf16.mxu0 0
        %5146 = vmatmul.mubr.bf16.gmra.mxu0 %v5021
        %v5147 = vpop.f32.mrf.mxu0
        %v5148 = vadd.f32 %v5047, %v5147
        %v5149 = vpop.f32.mrf.mxu0
        %v5150 = vpop.f32.mrf.mxu0
        %v5151 = vadd.f32 %v5047, %v5150
        %v5152 = vpop.f32.mrf.mxu0
        %5153 = vmatprep.mubr.bf16.mxu0 0
        %5154 = vmatmul.mubr.bf16.gmra.mxu0 %v5024
        %v5155 = vpop.f32.mrf.mxu0
        %v5156 = vadd.f32 %v5047, %v5155
        %v5157 = vpop.f32.mrf.mxu0
        %v5158 = vpop.f32.mrf.mxu0
        %v5159 = vadd.f32 %v5047, %v5158
        %v5160 = vpop.f32.mrf.mxu0
        %5161 = vdwg.mxu0
        %v5162 = vmax.f32 %v5132, 0.0
        %v5163 = vmax.f32 %v5135, 0.0
        %v5164 = vmax.f32 %v5140, 0.0
        %v5165 = vmax.f32 %v5143, 0.0
        %v5166 = vmax.f32 %v5148, 0.0
        %v5167 = vmax.f32 %v5151, 0.0
        %v5168 = vmax.f32 %v5156, 0.0
        %v5169 = vmax.f32 %v5159, 0.0
        %v5170 = vsel %vm3828, %v5162, 0.0
        %v5171 = vsel %vm3828, %v5163, 0.0
        %v5172 = vadd.f32 %v5170, %v5171
        %v5173 = vsel %vm3828, %v5164, 0.0
        %v5174 = vadd.f32 %v5172, %v5173
        %v5175 = vsel %vm3828, %v5165, 0.0
        %v5176 = vadd.f32 %v5174, %v5175
        %v5177 = vsel %vm3828, %v5166, 0.0
        %v5178 = vadd.f32 %v5176, %v5177
        %v5179 = vsel %vm3828, %v5167, 0.0
        %v5180 = vadd.f32 %v5178, %v5179
        %v5181 = vsel %vm3828, %v5168, 0.0
        %v5182 = vadd.f32 %v5180, %v5181
        %v5183 = vsel %vm3828, %v5169, 0.0
        %v5184 = vadd.f32 %v5182, %v5183
        %v5185 = vrot.slane %v5184, 4
        %v5186 = vadd.f32 %v5184, %v5185
        %v5187 = vrot.slane %v5186, 2
        %v5188 = vadd.f32 %v5186, %v5187
        %v5189 = vrot.slane %v5188, 1
        %v5190 = vadd.f32 %v5188, %v5189
        %v5191 = vrcp.pop 64.0
        %v5192 = vmul.f32 %v5190, %v5191
        %v5193 = vpack.c.bf16 %v5192, %v5192
        %v5194 = vld [vmem:[%s9] sm:$0xf]
        %v5195 = vld [vmem:[%s9 + $0x4] sm:$0xf]
        %v5196 = vld [vmem:[%s9 + $0x8] sm:$0xf]
        %v5197 = vld [vmem:[%s9 + $0xc] sm:$0xf]
        %v5198 = vld [vmem:[%s10] sm:$0x1]
        %v5203 = vunpack.c.l.b16 %v5194
        %v5204 = vunpack.c.l.b16 %v5195
        %v5205 = vunpack.c.l.b16 %v5196
        %v5206 = vunpack.c.l.b16 %v5197
        %v5207 = vpack.c.b16 %v5204, %v5203
        %v5208 = vpack.c.b16 %v5206, %v5205
        %v5212 = vsel %vm3828, %v5193, 0
        %5214 = vmatprep.subr.bf16.mxu0 0
        %5215 = vmatpush1.bf16.msra.mxu0 0
        %5216 = vmatprep.subr.bf16.mxu0 0
        %5217 = vmatpush1.bf16.msra.mxu0 0
        %5218 = vmatprep.subr.bf16.mxu0 0
        %5219 = vmatpush1.bf16.msra.mxu0 0
        %5220 = vmatprep.subr.bf16.mxu0 0
        %5221 = vmatpush1.bf16.msra.mxu0 0
        %5222 = vmatprep.subr.bf16.mxu0 0
        %5223 = vmatpush1.bf16.msra.mxu0 0
        %5224 = vmatprep.subr.bf16.mxu0 0
        %5225 = vmatpush1.bf16.msra.mxu0 0
        %5226 = vmatprep.subr.bf16.mxu0 0
        %5227 = vmatpush1.bf16.msra.mxu0 %v5208
        %5228 = vmatprep.subr.bf16.mxu0 0
        %5229 = vmatpush1.bf16.msra.mxu0 %v5207
        %5230 = vmatprep.subr.bf16.mxu0 0
        %5231 = vmatpush2.bf16.msra.mxu0 0
        %5232 = vmatprep.subr.bf16.mxu0 0
        %5233 = vmatpush2.bf16.msra.mxu0 0
        %5234 = vmatprep.subr.bf16.mxu0 0
        %5235 = vmatpush2.bf16.msra.mxu0 0
        %5236 = vmatprep.subr.bf16.mxu0 0
        %5237 = vmatpush2.bf16.msra.mxu0 0
        %5238 = vmatprep.subr.bf16.mxu0 0
        %5239 = vmatpush2.bf16.msra.mxu0 0
        %5240 = vmatprep.subr.bf16.mxu0 0
        %5241 = vmatpush2.bf16.msra.mxu0 0
        %5242 = vmatprep.subr.bf16.mxu0 0
        %5243 = vmatpush2.bf16.msra.mxu0 0
        %5244 = vmatprep.subr.bf16.mxu0 0
        %5245 = vmatpush2.bf16.msra.mxu0 0
        %5246 = vmatprep.mubr.bf16.mxu0 0
        %5247 = vmatmul.mubr.bf16.gmra.mxu0 %v5212
        %v5248 = vpop.f32.mrf.mxu0
        %v5249 = vadd.f32 %v5198, %v5248
        %v5250 = vpop.f32.mrf.mxu0
        %v5251 = vpop.f32.mrf.mxu0
        %v5252 = vpop.f32.mrf.mxu0
        %5253 = vdwg.mxu0
        %v5254 = vmax.f32 %v5249, 0.0
        %v5255 = vpack.c.bf16 %v5254, %v5254
        %v5256 = vld [vmem:[%s11] sm:$0xf]
        %v5257 = vld [vmem:[%s12] sm:$0x1]
        %vm5258 = vcmask 64512
        %v5260 = vsel %vm5258, %v5255, 0
        %vm5262 = vcmask 1043456
        %v5264 = vsel %vm5262, %v5256, 0
        %5266 = vmatprep.subr.bf16.mxu0 0
        %5267 = vmatpush1.bf16.msra.mxu0 0
        %5268 = vmatprep.subr.bf16.mxu0 0
        %5269 = vmatpush1.bf16.msra.mxu0 0
        %5270 = vmatprep.subr.bf16.mxu0 0
        %5271 = vmatpush1.bf16.msra.mxu0 0
        %5272 = vmatprep.subr.bf16.mxu0 0
        %5273 = vmatpush1.bf16.msra.mxu0 0
        %5274 = vmatprep.subr.bf16.mxu0 0
        %5275 = vmatpush1.bf16.msra.mxu0 0
        %5276 = vmatprep.subr.bf16.mxu0 0
        %5277 = vmatpush1.bf16.msra.mxu0 0
        %5278 = vmatprep.subr.bf16.mxu0 0
        %5279 = vmatpush1.bf16.msra.mxu0 0
        %5280 = vmatprep.subr.bf16.mxu0 0
        %5281 = vmatpush1.bf16.msra.mxu0 %v5264
        %5282 = vmatprep.subr.bf16.mxu0 0
        %5283 = vmatpush2.bf16.msra.mxu0 0
        %5284 = vmatprep.subr.bf16.mxu0 0
        %5285 = vmatpush2.bf16.msra.mxu0 0
        %5286 = vmatprep.subr.bf16.mxu0 0
        %5287 = vmatpush2.bf16.msra.mxu0 0
        %5288 = vmatprep.subr.bf16.mxu0 0
        %5289 = vmatpush2.bf16.msra.mxu0 0
        %5290 = vmatprep.subr.bf16.mxu0 0
        %5291 = vmatpush2.bf16.msra.mxu0 0
        %5292 = vmatprep.subr.bf16.mxu0 0
        %5293 = vmatpush2.bf16.msra.mxu0 0
        %5294 = vmatprep.subr.bf16.mxu0 0
        %5295 = vmatpush2.bf16.msra.mxu0 0
        %5296 = vmatprep.subr.bf16.mxu0 0
        %5297 = vmatpush2.bf16.msra.mxu0 0
        %5298 = vmatprep.mubr.bf16.mxu0 0
        %5299 = vmatmul.mubr.bf16.gmra.mxu0 %v5260
        %v5300 = vpop.f32.mrf.mxu0
        %v5301 = vadd.f32 %v5257, %v5300
        %v5302 = vpop.f32.mrf.mxu0
        %v5303 = vpop.f32.mrf.mxu0
        %v5304 = vpop.f32.mrf.mxu0
        %5305 = vdwg.mxu0
        %v5306 = vxor.u32 %v5301, 2147483648
        %v5307 = vmul.f32 %v5306, 1.442695
        %v5308 = vpow.pop %v5307
        %v5309 = vadd.f32 %v5308, 1.0
        %v5310 = vrcp.pop %v5309
        %v5311 = vmul.f32 1.0, %v5310
        %v5312 = vlaneseq
        %v5313 = vshrl.u32 %v5312, 7
        %v5314 = vsub.s32 0, %v5313
        %v5315 = vrot.slane %v5311, %v5314
        %v5316 = vmul.f32 %v5162, %v5315
        %v5317 = vmul.f32 %v5163, %v5315
        %v5318 = vmul.f32 %v5164, %v5315
        %v5319 = vmul.f32 %v5165, %v5315
        %v5320 = vmul.f32 %v5166, %v5315
        %v5321 = vmul.f32 %v5167, %v5315
        %v5322 = vmul.f32 %v5168, %v5315
        %v5323 = vmul.f32 %v5169, %v5315
        %v5332 = vrot.slane %v5317, 7
        %vm5333 = vcmask 1041409
        %v5334 = vsel %vm5333, %v5332, %v5316
        %v5335 = vrot.slane %v5318, 6
        %vm5336 = vcmask 1042434
        %v5337 = vsel %vm5336, %v5335, %v5334
        %v5338 = vrot.slane %v5319, 5
        %vm5339 = vcmask 1043459
        %v5340 = vsel %vm5339, %v5338, %v5337
        %v5341 = vrot.slane %v5320, 4
        %vm5342 = vcmask 1044484
        %v5343 = vsel %vm5342, %v5341, %v5340
        %v5344 = vrot.slane %v5321, 3
        %vm5345 = vcmask 1045509
        %v5346 = vsel %vm5345, %v5344, %v5343
        %v5347 = vrot.slane %v5322, 2
        %vm5348 = vcmask 1046534
        %v5349 = vsel %vm5348, %v5347, %v5346
        %v5350 = vrot.slane %v5323, 1
        %vm5351 = vcmask 1047559
        %v5352 = vsel %vm5351, %v5350, %v5349
        %v5354 = vrot.slane %v5316, 1
        %v5355 = vsel %vm5333, %v5317, %v5354
        %v5356 = vrot.slane %v5318, 7
        %v5357 = vsel %vm5336, %v5356, %v5355
        %v5358 = vrot.slane %v5319, 6
        %v5359 = vsel %vm5339, %v5358, %v5357
        %v5360 = vrot.slane %v5320, 5
        %v5361 = vsel %vm5342, %v5360, %v5359
        %v5362 = vrot.slane %v5321, 4
        %v5363 = vsel %vm5345, %v5362, %v5361
        %v5364 = vrot.slane %v5322, 3
        %v5365 = vsel %vm5348, %v5364, %v5363
        %v5366 = vrot.slane %v5323, 2
        %v5367 = vsel %vm5351, %v5366, %v5365
        %5368 = vrot.lane.b32.xlu0 %v5367, 32
        %v5369 = vpop.permute.xlu0 %5368
        %v5371 = vrot.slane %v5316, 2
        %v5372 = vrot.slane %v5317, 1
        %v5373 = vsel %vm5333, %v5372, %v5371
        %v5374 = vsel %vm5336, %v5318, %v5373
        %v5375 = vrot.slane %v5319, 7
        %v5376 = vsel %vm5339, %v5375, %v5374
        %v5377 = vrot.slane %v5320, 6
        %v5378 = vsel %vm5342, %v5377, %v5376
        %v5379 = vrot.slane %v5321, 5
        %v5380 = vsel %vm5345, %v5379, %v5378
        %v5381 = vrot.slane %v5322, 4
        %v5382 = vsel %vm5348, %v5381, %v5380
        %v5383 = vrot.slane %v5323, 3
        %v5384 = vsel %vm5351, %v5383, %v5382
        %5385 = vrot.lane.b32.xlu0 %v5384, 64
        %v5386 = vpop.permute.xlu0 %5385
        %v5388 = vrot.slane %v5316, 3
        %v5389 = vrot.slane %v5317, 2
        %v5390 = vsel %vm5333, %v5389, %v5388
        %v5391 = vrot.slane %v5318, 1
        %v5392 = vsel %vm5336, %v5391, %v5390
        %v5393 = vsel %vm5339, %v5319, %v5392
        %v5394 = vrot.slane %v5320, 7
        %v5395 = vsel %vm5342, %v5394, %v5393
        %v5396 = vrot.slane %v5321, 6
        %v5397 = vsel %vm5345, %v5396, %v5395
        %v5398 = vrot.slane %v5322, 5
        %v5399 = vsel %vm5348, %v5398, %v5397
        %v5400 = vrot.slane %v5323, 4
        %v5401 = vsel %vm5351, %v5400, %v5399
        %5402 = vrot.lane.b32.xlu0 %v5401, 96
        %v5403 = vpop.permute.xlu0 %5402
        %v5405 = vrot.slane %v5316, 4
        %v5406 = vrot.slane %v5317, 3
        %v5407 = vsel %vm5333, %v5406, %v5405
        %v5408 = vrot.slane %v5318, 2
        %v5409 = vsel %vm5336, %v5408, %v5407
        %v5410 = vrot.slane %v5319, 1
        %v5411 = vsel %vm5339, %v5410, %v5409
        %v5412 = vsel %vm5342, %v5320, %v5411
        %v5413 = vrot.slane %v5321, 7
        %v5414 = vsel %vm5345, %v5413, %v5412
        %v5415 = vrot.slane %v5322, 6
        %v5416 = vsel %vm5348, %v5415, %v5414
        %v5417 = vrot.slane %v5323, 5
        %v5418 = vsel %vm5351, %v5417, %v5416
        %v5420 = vrot.slane %v5316, 5
        %v5421 = vrot.slane %v5317, 4
        %v5422 = vsel %vm5333, %v5421, %v5420
        %v5423 = vrot.slane %v5318, 3
        %v5424 = vsel %vm5336, %v5423, %v5422
        %v5425 = vrot.slane %v5319, 2
        %v5426 = vsel %vm5339, %v5425, %v5424
        %v5427 = vrot.slane %v5320, 1
        %v5428 = vsel %vm5342, %v5427, %v5426
        %v5429 = vsel %vm5345, %v5321, %v5428
        %v5430 = vrot.slane %v5322, 7
        %v5431 = vsel %vm5348, %v5430, %v5429
        %v5432 = vrot.slane %v5323, 6
        %v5433 = vsel %vm5351, %v5432, %v5431
        %5434 = vrot.lane.b32.xlu0 %v5433, 32
        %v5435 = vpop.permute.xlu0 %5434
        %v5437 = vrot.slane %v5316, 6
        %v5438 = vrot.slane %v5317, 5
        %v5439 = vsel %vm5333, %v5438, %v5437
        %v5440 = vrot.slane %v5318, 4
        %v5441 = vsel %vm5336, %v5440, %v5439
        %v5442 = vrot.slane %v5319, 3
        %v5443 = vsel %vm5339, %v5442, %v5441
        %v5444 = vrot.slane %v5320, 2
        %v5445 = vsel %vm5342, %v5444, %v5443
        %v5446 = vrot.slane %v5321, 1
        %v5447 = vsel %vm5345, %v5446, %v5445
        %v5448 = vsel %vm5348, %v5322, %v5447
        %v5449 = vrot.slane %v5323, 7
        %v5450 = vsel %vm5351, %v5449, %v5448
        %5451 = vrot.lane.b32.xlu0 %v5450, 64
        %v5452 = vpop.permute.xlu0 %5451
        %v5454 = vrot.slane %v5316, 7
        %v5455 = vrot.slane %v5317, 6
        %v5456 = vsel %vm5333, %v5455, %v5454
        %v5457 = vrot.slane %v5318, 5
        %v5458 = vsel %vm5336, %v5457, %v5456
        %v5459 = vrot.slane %v5319, 4
        %v5460 = vsel %vm5339, %v5459, %v5458
        %v5461 = vrot.slane %v5320, 3
        %v5462 = vsel %vm5342, %v5461, %v5460
        %v5463 = vrot.slane %v5321, 2
        %v5464 = vsel %vm5345, %v5463, %v5462
        %v5465 = vrot.slane %v5322, 1
        %v5466 = vsel %vm5348, %v5465, %v5464
        %v5467 = vsel %vm5351, %v5323, %v5466
        %5468 = vrot.lane.b32.xlu0 %v5467, 96
        %v5469 = vpop.permute.xlu0 %5468
        %v5471 = vsel %vm3828, %v5352, %v5369
        %v5472 = vsel %vm3877, %v5471, %v5386
        %v5473 = vsel %vm3910, %v5472, %v5403
        %v5474 = vsel %vm3828, %v5418, %v5435
        %v5475 = vsel %vm3877, %v5474, %v5452
        %v5476 = vsel %vm3910, %v5475, %v5469
        %5477 = vst [vmem:[%s433] sm:$0xff] %v5473
        %5478 = vst [vmem:[%s433 + $0x8] sm:$0xff] %v5476
        %s5479 = sand.u32 %s313, 1
        %s5480 = scalar_lea.sflag [#allocation5], %s5479
        %s5481 = sand.u32 %s313, 1
        %s5482 = smul.addr %s5481, 16
        %s5483 = scalar_lea.vmem [#allocation4], %s5482
        // Predicated region
        $region73: #{tpu_custom_call.1} parent=71 // pred_check
          %p5484 = pneg %p323
        $region74: #{tpu_custom_call.1} parent=71 // pred_check_branch
          %5486 = sbr.rel (%p5484) target = $region76
        $region75: #{tpu_custom_call.1} parent=71 // pred_region
          %s5488 = ssub.s32 256, 256
          %5489 = vsyncadd %s5480, %s5488
          %s5490 = smul.addr %s27, 2
          %s5491 = smul.addr %s5490, 128
          %s5492 = scalar_lea.hbm %s13, %s5491
          %s5494 = sshll.u32 %s5483, 4
          %s5495 = int_to_ptr.vmem [resolvable:$true] %s5494
          %5497 = dma.vmem_to_hbm [thread:$0]  %s5495, 256, %s5492, %s5480
        $region76: #{tpu_custom_call.1} parent=71 // pred_fallthru
          _
      $region72: #{tpu_custom_call.1} parent=5 // pred_fallthru
        _
      %p5498 = scmp.le.s32.totalorder 2, %s22
      // Predicated region
      $region77: #{tpu_custom_call.1} parent=5 // pred_check
        %p5499 = pneg %p5498
      $region78: #{tpu_custom_call.1} parent=5 // pred_check_branch
        %5501 = sbr.rel (%p5499) target = $region80
      $region79: #{tpu_custom_call.1} parent=5 // pred_region
        %s5502 = ssub.s32 %s22, 2
        // Predicated region
        $region81: #{tpu_custom_call.1} parent=79 // pred_check
          %p5503 = pneg %p329
        $region82: #{tpu_custom_call.1} parent=79 // pred_check_branch
          %5505 = sbr.rel (%p5503) target = $region84
        $region83: #{tpu_custom_call.1} parent=79 // pred_region
          %s5506 = sand.u32 %s314, 1
          %s5507 = scalar_lea.sflag [#allocation5], %s5506
          %s5508 = sand.u32 %s314, 1
          %s5509 = smul.addr %s5508, 16
          %s5510 = scalar_lea.vmem [#allocation4], %s5509
          %5511 = dma.done %s5507, 256
        $region84: #{tpu_custom_call.1} parent=79 // pred_fallthru
          _
      $region80: #{tpu_custom_call.1} parent=5 // pred_fallthru
        _
    $region6: #{tpu_custom_call.1} parent=1 // loop_footer
      %s26 = sadd.s32 1, %s22
    $region7: #{tpu_custom_call.1} parent=1 // loop_footer_branch
      %21 = sbr.rel target = $region3
    $region8: #{tpu_custom_call.1} parent=1 // loop_exit
      _
    %5512 = vsyncpa [#allocation5], 1
    %s5513 = scalar_lea.sflag [#allocation5], 1
    %5514 = vsyncpa %s5513, 1

</llo_original>
